<compile_context>
chip_gen: v6e
topology: v6e:2x2x1
jax: 0.10.0
libtpu: 0.0.40
codegen_flags: <defaults>
</compile_context>

<pallas_src>
import math

import jax
import jax.numpy as jnp
from jax import lax
from jax.experimental import pallas as pl
from jax.experimental.pallas import tpu as pltpu

# ---------------- small, module-consistent config ----------------
BATCH     = 2
CUTLEN    = 64
DIM       = 32            # cnn channel == d_model (cls_token vstack requires this)
KERNEL    = 5
STRIDE    = 2
PADD      = 2
D_MODEL   = DIM
N_HEADS   = 4
DH        = D_MODEL // N_HEADS
N_LAYERS  = 2
FFN_RATIO = 4
CLASSES   = 3
LN_EPS    = 1e-5
BN_EPS    = 1e-5
DENOM_EPS = 1e-6

L_CONV  = (CUTLEN + 2 * PADD - KERNEL) // STRIDE + 1          # Conv1d output length
L_POOL  = (L_CONV + 2 * 1 - 2) // 2 + 1                       # MaxPool1d(k=2,p=1,s=2)
SEQ     = L_POOL + 1                                          # + cls token
MAX_LEN = -(-(CUTLEN - KERNEL) // STRIDE) + 2                 # same formula as module


# ---------------- in-kernel helpers ----------------
def _mm(a, b):
    """MXU matmul: bf16 operands, f32 accumulation."""
    return jnp.dot(a.astype(jnp.bfloat16), b.astype(jnp.bfloat16),
                   preferred_element_type=jnp.float32)


def _ln(x, g, b):
    """LayerNorm over the last axis, f32 VPU math."""
    mean = jnp.mean(x, axis=-1, keepdims=True)
    var = jnp.mean((x - mean) * (x - mean), axis=-1, keepdims=True)
    return (x - mean) * lax.rsqrt(var + LN_EPS) * g + b


def _encoder_math(h, cw, sw, gmask,
                  wqkv, bqkv, wo, bo,
                  ln1_g, ln1_b, ln2_g, ln2_b,
                  w1, b1, w2, b2):
    """One cosFormer encoder layer on a single batch element.

    h: (SEQ, D) f32; cw/sw: (SEQ, 1) cos/sin position weights;
    gmask: (D, D) block-diagonal head mask (1 where both dims in same head).
    The mask lets us keep the head structure while doing only 2-D, lane-dense
    matmuls (no reshape/transpose into (H, L, DH)).
    """
    # --- attention block (pre-LN) ---
    hn = _ln(h, ln1_g, ln1_b)
    qkv = _mm(hn, wqkv) + bqkv                          # (SEQ, 3D): fused, lane-dense
    q = jnp.maximum(qkv[:, 0 * D_MODEL:1 * D_MODEL], 0.0)   # ReLU feature map
    k = jnp.maximum(qkv[:, 1 * D_MODEL:2 * D_MODEL], 0.0)
    v = qkv[:, 2 * D_MODEL:3 * D_MODEL]

    qc, qs = q * cw, q * sw                             # cos/sin re-weighting (f32)
    kc, ks = k * cw, k * sw

    dn = (((0,), (0,)), ((), ()))                       # contract over the sequence axis
    kv_c = lax.dot_general(kc.astype(jnp.bfloat16), v.astype(jnp.bfloat16), dn,
                           preferred_element_type=jnp.float32) * gmask      # (D, D)
    kv_s = lax.dot_general(ks.astype(jnp.bfloat16), v.astype(jnp.bfloat16), dn,
                           preferred_element_type=jnp.float32) * gmask
    num = _mm(qc, kv_c) + _mm(qs, kv_s)                 # (SEQ, D) per-head numerator

    ksum_c = jnp.sum(kc, axis=0, keepdims=True)         # (1, D)
    ksum_s = jnp.sum(ks, axis=0, keepdims=True)
    # per-head denominator, broadcast across each head's lanes via the mask matmul
    den = _mm(qc * ksum_c + qs * ksum_s, gmask)         # (SEQ, D)
    attn = num * pl.reciprocal(den + DENOM_EPS, approx=True)

    h = h + _mm(attn, wo) + bo                          # out-proj + residual

    # --- FFN block (pre-LN) ---
    hn = _ln(h, ln2_g, ln2_b)
    f = jnp.maximum(_mm(hn, w1) + b1, 0.0)
    return h + _mm(f, w2) + b2


# ---------------- Pallas kernels ----------------
def _stem_kernel(pa_ref, pb_ref, w_ref, scale_ref, shift_ref, cls_ref, o_ref):
    # Fused Conv1d (im2col matmul) + folded eval-BN + ReLU + MaxPool pairwise max
    # + cls-token prepend.  pa/pb are the two conv patches covered by each pool
    # window (boundary windows duplicate a patch, which is equivalent to -inf pad).
    w = w_ref[...].astype(jnp.bfloat16)                 # (KERNEL, DIM)
    scale = scale_ref[...]
    shift = shift_ref[...]
    ya = jnp.dot(pa_ref[0].astype(jnp.bfloat16), w, preferred_element_type=jnp.float32)
    yb = jnp.dot(pb_ref[0].astype(jnp.bfloat16), w, preferred_element_type=jnp.float32)
    ya = jnp.maximum(ya * scale + shift, 0.0)
    yb = jnp.maximum(yb * scale + shift, 0.0)
    o_ref[0, :1, :] = cls_ref[...]                      # cls token row
    o_ref[0, 1:, :] = jnp.maximum(ya, yb)               # pooled conv tokens


def _encoder_layer_kernel(h_ref, cw_ref, sw_ref, g_ref,
                          wqkv_ref, bqkv_ref, wo_ref, bo_ref,
                          ln1g_ref, ln1b_ref, ln2g_ref, ln2b_ref,
                          w1_ref, b1_ref, w2_ref, b2_ref,
                          o_ref):
    o_ref[0] = _encoder_math(
        h_ref[0], cw_ref[...], sw_ref[...], g_ref[...],
        wqkv_ref[...], bqkv_ref[...], wo_ref[...], bo_ref[...],
        ln1g_ref[...], ln1b_ref[...], ln2g_ref[...], ln2b_ref[...],
        w1_ref[...], b1_ref[...], w2_ref[...], b2_ref[...])


def _encoder_layer_clf_kernel(h_ref, cw_ref, sw_ref, g_ref,
                              wqkv_ref, bqkv_ref, wo_ref, bo_ref,
                              ln1g_ref, ln1b_ref, ln2g_ref, ln2b_ref,
                              w1_ref, b1_ref, w2_ref, b2_ref,
                              clfw_ref, clfb_ref, o_ref):
    # Last encoder layer with the classifier head folded in (no extra call).
    h_new = _encoder_math(
        h_ref[0], cw_ref[...], sw_ref[...], g_ref[...],
        wqkv_ref[...], bqkv_ref[...], wo_ref[...], bo_ref[...],
        ln1g_ref[...], ln1b_ref[...], ln2g_ref[...], ln2b_ref[...],
        w1_ref[...], b1_ref[...], w2_ref[...], b2_ref[...])
    cls_tok = h_new[:1, :]                              # (1, D) cls token
    logits = (jnp.dot(cls_tok.astype(jnp.bfloat16), clfw_ref[...].astype(jnp.bfloat16),
                      preferred_element_type=jnp.float32) + clfb_ref[...])
    o_ref[0] = logits


# ---------------- wrapper / model glue ----------------
def _full_spec(shape):
    return pl.BlockSpec(shape, lambda *_: (0,) * len(shape))


def model_forward(x, params):
    B = x.shape[0]
    f32 = jnp.float32

    cparams = pltpu.CompilerParams(
        dimension_semantics=("parallel",),              # v7x: split batch over 2 TCs
        vmem_limit_bytes=16 * 1024 * 1024)              # explicit, fits every chip gen

    # --- stem prep (pure index gather in XLA; all compute happens in the kernel) ---
    x_pad = jnp.pad(x, ((0, 0), (PADD, PADD)))
    conv_start = jnp.arange(L_CONV) * STRIDE            # conv window starts in x_pad
    # MaxPool(k=2,p=1,s=2): window l covers conv outputs {2l-1, 2l}; boundary windows
    # duplicate the in-range element (same result as -inf padding).
    pos_a = jnp.minimum(2 * jnp.arange(L_POOL), L_CONV - 1)
    pos_b = jnp.maximum(2 * jnp.arange(L_POOL) - 1, 0)
    taps = jnp.arange(KERNEL)
    pa = x_pad[:, conv_start[pos_a][:, None] + taps[None, :]]     # (B, L_POOL, KERNEL)
    pb = x_pad[:, conv_start[pos_b][:, None] + taps[None, :]]

    # fold eval-mode BatchNorm into scale/shift
    scale = (params["bn_gamma"] / jnp.sqrt(params["bn_var"] + BN_EPS)).reshape(1, DIM)
    shift = (params["conv_b"] * scale[0] + params["bn_beta"]
             - params["bn_mean"] * scale[0]).reshape(1, DIM)

    h = pl.pallas_call(
        _stem_kernel,
        out_shape=jax.ShapeDtypeStruct((B, SEQ, DIM), f32),
        grid=(B,),
        in_specs=[pl.BlockSpec((1, L_POOL, KERNEL), lambda b: (b, 0, 0)),
                  pl.BlockSpec((1, L_POOL, KERNEL), lambda b: (b, 0, 0)),
                  _full_spec((KERNEL, DIM)),
                  _full_spec((1, DIM)),
                  _full_spec((1, DIM)),
                  _full_spec((1, DIM))],
        out_specs=pl.BlockSpec((1, SEQ, DIM), lambda b: (b, 0, 0)),
        compiler_params=cparams,
    )(pa, pb, params["conv_w"], scale, shift, params["cls_token"])

    # cosFormer positional weights (constant-folded at trace time) and the
    # block-diagonal head mask that realizes per-head attention without reshapes.
    pos = jnp.arange(1, SEQ + 1, dtype=f32).reshape(SEQ, 1)
    cw = jnp.cos(math.pi * pos / (2.0 * MAX_LEN))
    sw = jnp.sin(math.pi * pos / (2.0 * MAX_LEN))
    head_id = jnp.arange(D_MODEL) // DH
    gmask = (head_id[:, None] == head_id[None, :]).astype(f32)   # (D, D)

    layer_in_specs = [
        pl.BlockSpec((1, SEQ, D_MODEL), lambda b: (b, 0, 0)),
        _full_spec((SEQ, 1)), _full_spec((SEQ, 1)), _full_spec((D_MODEL, D_MODEL)),
        _full_spec((D_MODEL, 3 * D_MODEL)), _full_spec((1, 3 * D_MODEL)),
        _full_spec((D_MODEL, D_MODEL)), _full_spec((1, D_MODEL)),
        _full_spec((1, D_MODEL)), _full_spec((1, D_MODEL)),
        _full_spec((1, D_MODEL)), _full_spec((1, D_MODEL)),
        _full_spec((D_MODEL, FFN_RATIO * D_MODEL)), _full_spec((1, FFN_RATIO * D_MODEL)),
        _full_spec((FFN_RATIO * D_MODEL, D_MODEL)), _full_spec((1, D_MODEL)),
    ]

    n_layers = len(params["layers"])
    logits = None
    for li, p in enumerate(params["layers"]):
        weights = (p["wqkv"], p["bqkv"], p["wo"], p["bo"],
                   p["ln1_g"], p["ln1_b"], p["ln2_g"], p["ln2_b"],
                   p["w1"], p["b1"], p["w2"], p["b2"])
        if li < n_layers - 1:
            h = pl.pallas_call(
                _encoder_layer_kernel,
                out_shape=jax.ShapeDtypeStruct((B, SEQ, D_MODEL), f32),
                grid=(B,),
                in_specs=layer_in_specs,
                out_specs=pl.BlockSpec((1, SEQ, D_MODEL), lambda b: (b, 0, 0)),
                compiler_params=cparams,
            )(h, cw, sw, gmask, *weights)
        else:
            logits = pl.pallas_call(
                _encoder_layer_clf_kernel,
                out_shape=jax.ShapeDtypeStruct((B, 1, CLASSES), f32),
                grid=(B,),
                in_specs=layer_in_specs + [_full_spec((D_MODEL, CLASSES)),
                                           _full_spec((1, CLASSES))],
                out_specs=pl.BlockSpec((1, 1, CLASSES), lambda b: (b, 0, 0)),
                compiler_params=cparams,
            )(h, cw, sw, gmask, *weights, params["clf_w"], params["clf_b"])
    return logits[:, 0, :]
    # TODO(synk): CrossEntropyLoss / accuracy / cluster vstack are training/test-time
    # side effects (not part of the forward compute graph); dropout is a no-op in eval.


def init_params(key):
    keys = iter(jax.random.split(key, 32))

    def nrm(shape, scale=0.05):
        return (scale * jax.random.normal(next(keys), shape)).astype(jnp.float32)

    params = {
        # NOTE: PyTorch Conv1d stores weights as (DIM, 1, KERNEL); ported weights
        # must be transposed into this (KERNEL, DIM) layout.
        "conv_w": nrm((KERNEL, DIM), 0.2),
        "conv_b": nrm((DIM,), 0.1),
        "bn_gamma": 1.0 + nrm((DIM,), 0.1),
        "bn_beta": nrm((DIM,), 0.1),
        "bn_mean": nrm((DIM,), 0.1),
        "bn_var": 0.5 + jax.random.uniform(next(keys), (DIM,), jnp.float32),
        "cls_token": jax.random.uniform(next(keys), (1, DIM), jnp.float32),
        "clf_w": nrm((D_MODEL, CLASSES), 0.1),
        "clf_b": jnp.zeros((1, CLASSES), jnp.float32),
        "layers": [],
    }
    for _ in range(N_LAYERS):
        params["layers"].append({
            "wqkv": nrm((D_MODEL, 3 * D_MODEL)),            # fused Wq|Wk|Wv
            "bqkv": jnp.zeros((1, 3 * D_MODEL), jnp.float32),
            "wo": nrm((D_MODEL, D_MODEL)),
            "bo": jnp.zeros((1, D_MODEL), jnp.float32),
            "ln1_g": jnp.ones((1, D_MODEL), jnp.float32),
            "ln1_b": jnp.zeros((1, D_MODEL), jnp.float32),
            "ln2_g": jnp.ones((1, D_MODEL), jnp.float32),
            "ln2_b": jnp.zeros((1, D_MODEL), jnp.float32),
            "w1": nrm((D_MODEL, FFN_RATIO * D_MODEL)),
            "b1": jnp.zeros((1, FFN_RATIO * D_MODEL), jnp.float32),
            "w2": nrm((FFN_RATIO * D_MODEL, D_MODEL)),
            "b2": jnp.zeros((1, D_MODEL), jnp.float32),
        })
    return params


if __name__ == "__main__":
    key = jax.random.PRNGKey(0)
    k_x, k_p = jax.random.split(key)
    x = jax.random.normal(k_x, (BATCH, CUTLEN), dtype=jnp.float32)
    params = init_params(k_p)

    logits = jax.jit(model_forward)(x, params)
    logits = jax.block_until_ready(logits)
    assert logits.shape == (BATCH, CLASSES)
    assert bool(jnp.all(jnp.isfinite(logits)))
    print("KERNEL_OK")
</pallas_src>

<mosaic_0001>
module attributes {stable_mosaic.version = 11 : i64} {
  func.func @_stem_kernel(%arg0: i32, %arg1: memref<1x17x5xf32, #tpu.memory_space<vmem>>, %arg2: memref<1x17x5xf32, #tpu.memory_space<vmem>>, %arg3: memref<5x32xf32, #tpu.memory_space<vmem>>, %arg4: memref<1x32xf32, #tpu.memory_space<vmem>>, %arg5: memref<1x32xf32, #tpu.memory_space<vmem>>, %arg6: memref<1x32xf32, #tpu.memory_space<vmem>>, %arg7: memref<1x18x32xf32, #tpu.memory_space<vmem>>) attributes {dimension_semantics = [#tpu.dimension_semantics<parallel>], iteration_bounds = array<i64: 2>, scalar_prefetch = 0 : i64, scratch_operands = 0 : i64, tpu.core_type = #tpu.core_type<tc>, window_params = [{transform_indices = @transform_0, window_bounds = array<i64: 1, 17, 5>}, {transform_indices = @transform_1, window_bounds = array<i64: 1, 17, 5>}, {pipeline_mode = #tpu.pipeline_mode<synchronous>, transform_indices = @transform_2, window_bounds = array<i64: 5, 32>}, {pipeline_mode = #tpu.pipeline_mode<synchronous>, transform_indices = @transform_3, window_bounds = array<i64: 1, 32>}, {pipeline_mode = #tpu.pipeline_mode<synchronous>, transform_indices = @transform_4, window_bounds = array<i64: 1, 32>}, {pipeline_mode = #tpu.pipeline_mode<synchronous>, transform_indices = @transform_5, window_bounds = array<i64: 1, 32>}, {transform_indices = @transform_6, window_bounds = array<i64: 1, 18, 32>}]} {
    %c0 = arith.constant 0 : index
    %c0_0 = arith.constant 0 : index
    %0 = vector.load %arg3[%c0, %c0_0] : memref<5x32xf32, #tpu.memory_space<vmem>>, vector<5x32xf32>
    %1 = arith.truncf %0 : vector<5x32xf32> to vector<5x32xbf16>
    %c0_1 = arith.constant 0 : index
    %c0_2 = arith.constant 0 : index
    %2 = vector.load %arg4[%c0_1, %c0_2] : memref<1x32xf32, #tpu.memory_space<vmem>>, vector<1x32xf32>
    %c0_3 = arith.constant 0 : index
    %c0_4 = arith.constant 0 : index
    %3 = vector.load %arg5[%c0_3, %c0_4] : memref<1x32xf32, #tpu.memory_space<vmem>>, vector<1x32xf32>
    %c0_5 = arith.constant 0 : index
    %c0_6 = arith.constant 0 : index
    %c0_7 = arith.constant 0 : index
    %4 = vector.load %arg1[%c0_5, %c0_6, %c0_7] : memref<1x17x5xf32, #tpu.memory_space<vmem>>, vector<1x17x5xf32>
    %5 = vector.shape_cast %4 : vector<1x17x5xf32> to vector<17x5xf32>
    %6 = arith.truncf %5 : vector<17x5xf32> to vector<17x5xbf16>
    %cst = arith.constant dense<0.000000e+00> : vector<17x32xf32>
    %7 = tpu.matmul %6, %1, %cst {dimension_numbers = #tpu.dot_dimension_numbers<[1], [0], [0], [1], [0, 0, 1, 1], [], []>} : vector<17x5xbf16>, vector<5x32xbf16>, vector<17x32xf32> -> vector<17x32xf32>
    %c0_8 = arith.constant 0 : index
    %c0_9 = arith.constant 0 : index
    %c0_10 = arith.constant 0 : index
    %8 = vector.load %arg2[%c0_8, %c0_9, %c0_10] : memref<1x17x5xf32, #tpu.memory_space<vmem>>, vector<1x17x5xf32>
    %9 = vector.shape_cast %8 : vector<1x17x5xf32> to vector<17x5xf32>
    %10 = arith.truncf %9 : vector<17x5xf32> to vector<17x5xbf16>
    %cst_11 = arith.constant dense<0.000000e+00> : vector<17x32xf32>
    %11 = tpu.matmul %10, %1, %cst_11 {dimension_numbers = #tpu.dot_dimension_numbers<[1], [0], [0], [1], [0, 0, 1, 1], [], []>} : vector<17x5xbf16>, vector<5x32xbf16>, vector<17x32xf32> -> vector<17x32xf32>
    %12 = vector.broadcast %2 : vector<1x32xf32> to vector<17x32xf32>
    %13 = arith.mulf %7, %12 : vector<17x32xf32>
    %14 = vector.broadcast %3 : vector<1x32xf32> to vector<17x32xf32>
    %15 = arith.addf %13, %14 : vector<17x32xf32>
    %cst_12 = arith.constant 0.000000e+00 : f32
    %16 = vector.broadcast %cst_12 : f32 to vector<17x32xf32>
    %17 = arith.maximumf %15, %16 : vector<17x32xf32>
    %18 = vector.broadcast %2 : vector<1x32xf32> to vector<17x32xf32>
    %19 = arith.mulf %11, %18 : vector<17x32xf32>
    %20 = vector.broadcast %3 : vector<1x32xf32> to vector<17x32xf32>
    %21 = arith.addf %19, %20 : vector<17x32xf32>
    %cst_13 = arith.constant 0.000000e+00 : f32
    %22 = vector.broadcast %cst_13 : f32 to vector<17x32xf32>
    %23 = arith.maximumf %21, %22 : vector<17x32xf32>
    %c0_14 = arith.constant 0 : index
    %c0_15 = arith.constant 0 : index
    %24 = vector.load %arg6[%c0_14, %c0_15] : memref<1x32xf32, #tpu.memory_space<vmem>>, vector<1x32xf32>
    %c0_16 = arith.constant 0 : index
    %c0_17 = arith.constant 0 : index
    %c0_18 = arith.constant 0 : index
    %25 = vector.load %arg7[%c0_16, %c0_17, %c0_18] : memref<1x18x32xf32, #tpu.memory_space<vmem>>, vector<1x1x32xf32>
    %26 = vector.shape_cast %25 : vector<1x1x32xf32> to vector<1x32xf32>
    %27 = vector.shape_cast %24 : vector<1x32xf32> to vector<1x1x32xf32>
    tpu.vector_store %arg7[%c0_16, %c0_17, %c0_18], %27 {strides = array<i32>} : memref<1x18x32xf32, #tpu.memory_space<vmem>>, vector<1x1x32xf32>,
    %28 = arith.maximumf %17, %23 : vector<17x32xf32>
    %c0_19 = arith.constant 0 : index
    %c1 = arith.constant 1 : index
    %c0_20 = arith.constant 0 : index
    %29 = vector.load %arg7[%c0_19, %c1, %c0_20] : memref<1x18x32xf32, #tpu.memory_space<vmem>>, vector<1x17x32xf32>
    %30 = vector.shape_cast %29 : vector<1x17x32xf32> to vector<17x32xf32>
    %31 = vector.shape_cast %28 : vector<17x32xf32> to vector<1x17x32xf32>
    tpu.vector_store %arg7[%c0_19, %c1, %c0_20], %31 {strides = array<i32>} : memref<1x18x32xf32, #tpu.memory_space<vmem>>, vector<1x17x32xf32>,
    return
  }
  func.func @transform_0(%arg0: i32) -> (i32, i32, i32) {
    %c0_i32 = arith.constant 0 : i32
    %c0_i32_0 = arith.constant 0 : i32
    %c0_i32_1 = arith.constant 0 : i32
    return %arg0, %c0_i32, %c0_i32_0 : i32, i32, i32
  }
  func.func @transform_1(%arg0: i32) -> (i32, i32, i32) {
    %c0_i32 = arith.constant 0 : i32
    %c0_i32_0 = arith.constant 0 : i32
    %c0_i32_1 = arith.constant 0 : i32
    return %arg0, %c0_i32, %c0_i32_0 : i32, i32, i32
  }
  func.func @transform_2(%arg0: i32) -> (i32, i32) {
    %c0_i32 = arith.constant 0 : i32
    %c0_i32_0 = arith.constant 0 : i32
    %c0_i32_1 = arith.constant 0 : i32
    return %c0_i32, %c0_i32_0 : i32, i32
  }
  func.func @transform_3(%arg0: i32) -> (i32, i32) {
    %c0_i32 = arith.constant 0 : i32
    %c0_i32_0 = arith.constant 0 : i32
    %c0_i32_1 = arith.constant 0 : i32
    return %c0_i32, %c0_i32_0 : i32, i32
  }
  func.func @transform_4(%arg0: i32) -> (i32, i32) {
    %c0_i32 = arith.constant 0 : i32
    %c0_i32_0 = arith.constant 0 : i32
    %c0_i32_1 = arith.constant 0 : i32
    return %c0_i32, %c0_i32_0 : i32, i32
  }
  func.func @transform_5(%arg0: i32) -> (i32, i32) {
    %c0_i32 = arith.constant 0 : i32
    %c0_i32_0 = arith.constant 0 : i32
    %c0_i32_1 = arith.constant 0 : i32
    return %c0_i32, %c0_i32_0 : i32, i32
  }
  func.func @transform_6(%arg0: i32) -> (i32, i32, i32) {
    %c0_i32 = arith.constant 0 : i32
    %c0_i32_0 = arith.constant 0 : i32
    %c0_i32_1 = arith.constant 0 : i32
    return %arg0, %c0_i32, %c0_i32_0 : i32, i32, i32
  }
}

module attributes {stable_mosaic.version = 11 : i64} {
  func.func @_encoder_layer_clf_kernel(%arg0: i32, %arg1: memref<1x18x32xf32, #tpu.memory_space<vmem>>, %arg2: memref<18x1xf32, #tpu.memory_space<vmem>>, %arg3: memref<18x1xf32, #tpu.memory_space<vmem>>, %arg4: memref<32x32xf32, #tpu.memory_space<vmem>>, %arg5: memref<32x96xf32, #tpu.memory_space<vmem>>, %arg6: memref<1x96xf32, #tpu.memory_space<vmem>>, %arg7: memref<32x32xf32, #tpu.memory_space<vmem>>, %arg8: memref<1x32xf32, #tpu.memory_space<vmem>>, %arg9: memref<1x32xf32, #tpu.memory_space<vmem>>, %arg10: memref<1x32xf32, #tpu.memory_space<vmem>>, %arg11: memref<1x32xf32, #tpu.memory_space<vmem>>, %arg12: memref<1x32xf32, #tpu.memory_space<vmem>>, %arg13: memref<32x128xf32, #tpu.memory_space<vmem>>, %arg14: memref<1x128xf32, #tpu.memory_space<vmem>>, %arg15: memref<128x32xf32, #tpu.memory_space<vmem>>, %arg16: memref<1x32xf32, #tpu.memory_space<vmem>>, %arg17: memref<32x3xf32, #tpu.memory_space<vmem>>, %arg18: memref<1x3xf32, #tpu.memory_space<vmem>>, %arg19: memref<1x1x3xf32, #tpu.memory_space<vmem>>) attributes {dimension_semantics = [#tpu.dimension_semantics<parallel>], iteration_bounds = array<i64: 2>, scalar_prefetch = 0 : i64, scratch_operands = 0 : i64, tpu.core_type = #tpu.core_type<tc>, window_params = [{transform_indices = @transform_0, window_bounds = array<i64: 1, 18, 32>}, {pipeline_mode = #tpu.pipeline_mode<synchronous>, transform_indices = @transform_1, window_bounds = array<i64: 18, 1>}, {pipeline_mode = #tpu.pipeline_mode<synchronous>, transform_indices = @transform_2, window_bounds = array<i64: 18, 1>}, {pipeline_mode = #tpu.pipeline_mode<synchronous>, transform_indices = @transform_3, window_bounds = array<i64: 32, 32>}, {pipeline_mode = #tpu.pipeline_mode<synchronous>, transform_indices = @transform_4, window_bounds = array<i64: 32, 96>}, {pipeline_mode = #tpu.pipeline_mode<synchronous>, transform_indices = @transform_5, window_bounds = array<i64: 1, 96>}, {pipeline_mode = #tpu.pipeline_mode<synchronous>, transform_indices = @transform_6, window_bounds = array<i64: 32, 32>}, {pipeline_mode = #tpu.pipeline_mode<synchronous>, transform_indices = @transform_7, window_bounds = array<i64: 1, 32>}, {pipeline_mode = #tpu.pipeline_mode<synchronous>, transform_indices = @transform_8, window_bounds = array<i64: 1, 32>}, {pipeline_mode = #tpu.pipeline_mode<synchronous>, transform_indices = @transform_9, window_bounds = array<i64: 1, 32>}, {pipeline_mode = #tpu.pipeline_mode<synchronous>, transform_indices = @transform_10, window_bounds = array<i64: 1, 32>}, {pipeline_mode = #tpu.pipeline_mode<synchronous>, transform_indices = @transform_11, window_bounds = array<i64: 1, 32>}, {pipeline_mode = #tpu.pipeline_mode<synchronous>, transform_indices = @transform_12, window_bounds = array<i64: 32, 128>}, {pipeline_mode = #tpu.pipeline_mode<synchronous>, transform_indices = @transform_13, window_bounds = array<i64: 1, 128>}, {pipeline_mode = #tpu.pipeline_mode<synchronous>, transform_indices = @transform_14, window_bounds = array<i64: 128, 32>}, {pipeline_mode = #tpu.pipeline_mode<synchronous>, transform_indices = @transform_15, window_bounds = array<i64: 1, 32>}, {pipeline_mode = #tpu.pipeline_mode<synchronous>, transform_indices = @transform_16, window_bounds = array<i64: 32, 3>}, {pipeline_mode = #tpu.pipeline_mode<synchronous>, transform_indices = @transform_17, window_bounds = array<i64: 1, 3>}, {transform_indices = @transform_18, window_bounds = array<i64: 1, 1, 3>}]} {
    %c0 = arith.constant 0 : index
    %c0_0 = arith.constant 0 : index
    %c0_1 = arith.constant 0 : index
    %0 = vector.load %arg1[%c0, %c0_0, %c0_1] : memref<1x18x32xf32, #tpu.memory_space<vmem>>, vector<1x18x32xf32>
    %1 = vector.shape_cast %0 : vector<1x18x32xf32> to vector<18x32xf32>
    %c0_2 = arith.constant 0 : index
    %c0_3 = arith.constant 0 : index
    %2 = vector.load %arg2[%c0_2, %c0_3] : memref<18x1xf32, #tpu.memory_space<vmem>>, vector<18x1xf32>
    %c0_4 = arith.constant 0 : index
    %c0_5 = arith.constant 0 : index
    %3 = vector.load %arg3[%c0_4, %c0_5] : memref<18x1xf32, #tpu.memory_space<vmem>>, vector<18x1xf32>
    %c0_6 = arith.constant 0 : index
    %c0_7 = arith.constant 0 : index
    %4 = vector.load %arg4[%c0_6, %c0_7] : memref<32x32xf32, #tpu.memory_space<vmem>>, vector<32x32xf32>
    %c0_8 = arith.constant 0 : index
    %c0_9 = arith.constant 0 : index
    %5 = vector.load %arg5[%c0_8, %c0_9] : memref<32x96xf32, #tpu.memory_space<vmem>>, vector<32x96xf32>
    %c0_10 = arith.constant 0 : index
    %c0_11 = arith.constant 0 : index
    %6 = vector.load %arg6[%c0_10, %c0_11] : memref<1x96xf32, #tpu.memory_space<vmem>>, vector<1x96xf32>
    %c0_12 = arith.constant 0 : index
    %c0_13 = arith.constant 0 : index
    %7 = vector.load %arg7[%c0_12, %c0_13] : memref<32x32xf32, #tpu.memory_space<vmem>>, vector<32x32xf32>
    %c0_14 = arith.constant 0 : index
    %c0_15 = arith.constant 0 : index
    %8 = vector.load %arg8[%c0_14, %c0_15] : memref<1x32xf32, #tpu.memory_space<vmem>>, vector<1x32xf32>
    %c0_16 = arith.constant 0 : index
    %c0_17 = arith.constant 0 : index
    %9 = vector.load %arg9[%c0_16, %c0_17] : memref<1x32xf32, #tpu.memory_space<vmem>>, vector<1x32xf32>
    %c0_18 = arith.constant 0 : index
    %c0_19 = arith.constant 0 : index
    %10 = vector.load %arg10[%c0_18, %c0_19] : memref<1x32xf32, #tpu.memory_space<vmem>>, vector<1x32xf32>
    %c0_20 = arith.constant 0 : index
    %c0_21 = arith.constant 0 : index
    %11 = vector.load %arg11[%c0_20, %c0_21] : memref<1x32xf32, #tpu.memory_space<vmem>>, vector<1x32xf32>
    %c0_22 = arith.constant 0 : index
    %c0_23 = arith.constant 0 : index
    %12 = vector.load %arg12[%c0_22, %c0_23] : memref<1x32xf32, #tpu.memory_space<vmem>>, vector<1x32xf32>
    %c0_24 = arith.constant 0 : index
    %c0_25 = arith.constant 0 : index
    %13 = vector.load %arg13[%c0_24, %c0_25] : memref<32x128xf32, #tpu.memory_space<vmem>>, vector<32x128xf32>
    %c0_26 = arith.constant 0 : index
    %c0_27 = arith.constant 0 : index
    %14 = vector.load %arg14[%c0_26, %c0_27] : memref<1x128xf32, #tpu.memory_space<vmem>>, vector<1x128xf32>
    %c0_28 = arith.constant 0 : index
    %c0_29 = arith.constant 0 : index
    %15 = vector.load %arg15[%c0_28, %c0_29] : memref<128x32xf32, #tpu.memory_space<vmem>>, vector<128x32xf32>
    %c0_30 = arith.constant 0 : index
    %c0_31 = arith.constant 0 : index
    %16 = vector.load %arg16[%c0_30, %c0_31] : memref<1x32xf32, #tpu.memory_space<vmem>>, vector<1x32xf32>
    %cst = arith.constant dense<0.000000e+00> : vector<18xf32>
    %17 = vector.multi_reduction <add>, %1, %cst [1] : vector<18x32xf32> to vector<18xf32>
    %18 = vector.shape_cast %17 : vector<18xf32> to vector<18x1xf32>
    %cst_32 = arith.constant 3.200000e+01 : f32
    %19 = vector.broadcast %cst_32 : f32 to vector<18x1xf32>
    %20 = arith.divf %18, %19 : vector<18x1xf32>
    %21 = vector.broadcast %20 : vector<18x1xf32> to vector<18x32xf32>
    %22 = arith.subf %1, %21 : vector<18x32xf32>
    %23 = vector.broadcast %20 : vector<18x1xf32> to vector<18x32xf32>
    %24 = arith.subf %1, %23 : vector<18x32xf32>
    %25 = arith.mulf %22, %24 : vector<18x32xf32>
    %cst_33 = arith.constant dense<0.000000e+00> : vector<18xf32>
    %26 = vector.multi_reduction <add>, %25, %cst_33 [1] : vector<18x32xf32> to vector<18xf32>
    %27 = vector.shape_cast %26 : vector<18xf32> to vector<18x1xf32>
    %cst_34 = arith.constant 3.200000e+01 : f32
    %28 = vector.broadcast %cst_34 : f32 to vector<18x1xf32>
    %29 = arith.divf %27, %28 : vector<18x1xf32>
    %30 = vector.broadcast %20 : vector<18x1xf32> to vector<18x32xf32>
    %31 = arith.subf %1, %30 : vector<18x32xf32>
    %cst_35 = arith.constant 9.99999974E-6 : f32
    %32 = vector.broadcast %cst_35 : f32 to vector<18x1xf32>
    %33 = arith.addf %29, %32 : vector<18x1xf32>
    %34 = math.rsqrt %33 : vector<18x1xf32>
    %35 = vector.broadcast %34 : vector<18x1xf32> to vector<18x32xf32>
    %36 = arith.mulf %31, %35 : vector<18x32xf32>
    %37 = vector.broadcast %9 : vector<1x32xf32> to vector<18x32xf32>
    %38 = arith.mulf %36, %37 : vector<18x32xf32>
    %39 = vector.broadcast %10 : vector<1x32xf32> to vector<18x32xf32>
    %40 = arith.addf %38, %39 : vector<18x32xf32>
    %41 = arith.truncf %40 : vector<18x32xf32> to vector<18x32xbf16>
    %42 = arith.truncf %5 : vector<32x96xf32> to vector<32x96xbf16>
    %cst_36 = arith.constant dense<0.000000e+00> : vector<18x96xf32>
    %43 = tpu.matmul %41, %42, %cst_36 {dimension_numbers = #tpu.dot_dimension_numbers<[1], [0], [0], [1], [0, 0, 1, 1], [], []>} : vector<18x32xbf16>, vector<32x96xbf16>, vector<18x96xf32> -> vector<18x96xf32>
    %44 = vector.broadcast %6 : vector<1x96xf32> to vector<18x96xf32>
    %45 = arith.addf %43, %44 : vector<18x96xf32>
    %46 = vector.extract_strided_slice %45 {offsets = [0, 0], sizes = [18, 32], strides = [1, 1]} : vector<18x96xf32> to vector<18x32xf32>
    %cst_37 = arith.constant 0.000000e+00 : f32
    %47 = vector.broadcast %cst_37 : f32 to vector<18x32xf32>
    %48 = arith.maximumf %46, %47 : vector<18x32xf32>
    %49 = vector.extract_strided_slice %45 {offsets = [0, 32], sizes = [18, 32], strides = [1, 1]} : vector<18x96xf32> to vector<18x32xf32>
    %cst_38 = arith.constant 0.000000e+00 : f32
    %50 = vector.broadcast %cst_38 : f32 to vector<18x32xf32>
    %51 = arith.maximumf %49, %50 : vector<18x32xf32>
    %52 = vector.extract_strided_slice %45 {offsets = [0, 64], sizes = [18, 32], strides = [1, 1]} : vector<18x96xf32> to vector<18x32xf32>
    %53 = vector.broadcast %2 : vector<18x1xf32> to vector<18x32xf32>
    %54 = arith.mulf %48, %53 : vector<18x32xf32>
    %55 = vector.broadcast %3 : vector<18x1xf32> to vector<18x32xf32>
    %56 = arith.mulf %48, %55 : vector<18x32xf32>
    %57 = vector.broadcast %2 : vector<18x1xf32> to vector<18x32xf32>
    %58 = arith.mulf %51, %57 : vector<18x32xf32>
    %59 = vector.broadcast %3 : vector<18x1xf32> to vector<18x32xf32>
    %60 = arith.mulf %51, %59 : vector<18x32xf32>
    %61 = arith.truncf %58 : vector<18x32xf32> to vector<18x32xbf16>
    %62 = arith.truncf %52 : vector<18x32xf32> to vector<18x32xbf16>
    %cst_39 = arith.constant dense<0.000000e+00> : vector<32x32xf32>
    %63 = tpu.matmul %61, %62, %cst_39 {dimension_numbers = #tpu.dot_dimension_numbers<[0], [0], [1], [1], [0, 1, 1, 1], [], []>} : vector<18x32xbf16>, vector<18x32xbf16>, vector<32x32xf32> -> vector<32x32xf32>
    %64 = arith.mulf %63, %4 : vector<32x32xf32>
    %65 = arith.truncf %60 : vector<18x32xf32> to vector<18x32xbf16>
    %66 = arith.truncf %52 : vector<18x32xf32> to vector<18x32xbf16>
    %cst_40 = arith.constant dense<0.000000e+00> : vector<32x32xf32>
    %67 = tpu.matmul %65, %66, %cst_40 {dimension_numbers = #tpu.dot_dimension_numbers<[0], [0], [1], [1], [0, 1, 1, 1], [], []>} : vector<18x32xbf16>, vector<18x32xbf16>, vector<32x32xf32> -> vector<32x32xf32>
    %68 = arith.mulf %67, %4 : vector<32x32xf32>
    %69 = arith.truncf %54 : vector<18x32xf32> to vector<18x32xbf16>
    %70 = arith.truncf %64 : vector<32x32xf32> to vector<32x32xbf16>
    %cst_41 = arith.constant dense<0.000000e+00> : vector<18x32xf32>
    %71 = tpu.matmul %69, %70, %cst_41 {dimension_numbers = #tpu.dot_dimension_numbers<[1], [0], [0], [1], [0, 0, 1, 1], [], []>} : vector<18x32xbf16>, vector<32x32xbf16>, vector<18x32xf32> -> vector<18x32xf32>
    %72 = arith.truncf %56 : vector<18x32xf32> to vector<18x32xbf16>
    %73 = arith.truncf %68 : vector<32x32xf32> to vector<32x32xbf16>
    %cst_42 = arith.constant dense<0.000000e+00> : vector<18x32xf32>
    %74 = tpu.matmul %72, %73, %cst_42 {dimension_numbers = #tpu.dot_dimension_numbers<[1], [0], [0], [1], [0, 0, 1, 1], [], []>} : vector<18x32xbf16>, vector<32x32xbf16>, vector<18x32xf32> -> vector<18x32xf32>
    %75 = arith.addf %71, %74 : vector<18x32xf32>
    %cst_43 = arith.constant dense<0.000000e+00> : vector<32xf32>
    %76 = vector.multi_reduction <add>, %58, %cst_43 [0] : vector<18x32xf32> to vector<32xf32>
    %77 = vector.shape_cast %76 : vector<32xf32> to vector<1x32xf32>
    %cst_44 = arith.constant dense<0.000000e+00> : vector<32xf32>
    %78 = vector.multi_reduction <add>, %60, %cst_44 [0] : vector<18x32xf32> to vector<32xf32>
    %79 = vector.shape_cast %78 : vector<32xf32> to vector<1x32xf32>
    %80 = vector.broadcast %77 : vector<1x32xf32> to vector<18x32xf32>
    %81 = arith.mulf %54, %80 : vector<18x32xf32>
    %82 = vector.broadcast %79 : vector<1x32xf32> to vector<18x32xf32>
    %83 = arith.mulf %56, %82 : vector<18x32xf32>
    %84 = arith.addf %81, %83 : vector<18x32xf32>
    %85 = arith.truncf %84 : vector<18x32xf32> to vector<18x32xbf16>
    %86 = arith.truncf %4 : vector<32x32xf32> to vector<32x32xbf16>
    %cst_45 = arith.constant dense<0.000000e+00> : vector<18x32xf32>
    %87 = tpu.matmul %85, %86, %cst_45 {dimension_numbers = #tpu.dot_dimension_numbers<[1], [0], [0], [1], [0, 0, 1, 1], [], []>} : vector<18x32xbf16>, vector<32x32xbf16>, vector<18x32xf32> -> vector<18x32xf32>
    %cst_46 = arith.constant 9.99999997E-7 : f32
    %88 = vector.broadcast %cst_46 : f32 to vector<18x32xf32>
    %89 = arith.addf %87, %88 : vector<18x32xf32>
    %90 = tpu.reciprocal %89 {approx = true} : vector<18x32xf32> -> vector<18x32xf32>
    %91 = arith.mulf %75, %90 : vector<18x32xf32>
    %92 = arith.truncf %91 : vector<18x32xf32> to vector<18x32xbf16>
    %93 = arith.truncf %7 : vector<32x32xf32> to vector<32x32xbf16>
    %cst_47 = arith.constant dense<0.000000e+00> : vector<18x32xf32>
    %94 = tpu.matmul %92, %93, %cst_47 {dimension_numbers = #tpu.dot_dimension_numbers<[1], [0], [0], [1], [0, 0, 1, 1], [], []>} : vector<18x32xbf16>, vector<32x32xbf16>, vector<18x32xf32> -> vector<18x32xf32>
    %95 = arith.addf %1, %94 : vector<18x32xf32>
    %96 = vector.broadcast %8 : vector<1x32xf32> to vector<18x32xf32>
    %97 = arith.addf %95, %96 : vector<18x32xf32>
    %cst_48 = arith.constant dense<0.000000e+00> : vector<18xf32>
    %98 = vector.multi_reduction <add>, %97, %cst_48 [1] : vector<18x32xf32> to vector<18xf32>
    %99 = vector.shape_cast %98 : vector<18xf32> to vector<18x1xf32>
    %cst_49 = arith.constant 3.200000e+01 : f32
    %100 = vector.broadcast %cst_49 : f32 to vector<18x1xf32>
    %101 = arith.divf %99, %100 : vector<18x1xf32>
    %102 = vector.broadcast %101 : vector<18x1xf32> to vector<18x32xf32>
    %103 = arith.subf %97, %102 : vector<18x32xf32>
    %104 = vector.broadcast %101 : vector<18x1xf32> to vector<18x32xf32>
    %105 = arith.subf %97, %104 : vector<18x32xf32>
    %106 = arith.mulf %103, %105 : vector<18x32xf32>
    %cst_50 = arith.constant dense<0.000000e+00> : vector<18xf32>
    %107 = vector.multi_reduction <add>, %106, %cst_50 [1] : vector<18x32xf32> to vector<18xf32>
    %108 = vector.shape_cast %107 : vector<18xf32> to vector<18x1xf32>
    %cst_51 = arith.constant 3.200000e+01 : f32
    %109 = vector.broadcast %cst_51 : f32 to vector<18x1xf32>
    %110 = arith.divf %108, %109 : vector<18x1xf32>
    %111 = vector.broadcast %101 : vector<18x1xf32> to vector<18x32xf32>
    %112 = arith.subf %97, %111 : vector<18x32xf32>
    %cst_52 = arith.constant 9.99999974E-6 : f32
    %113 = vector.broadcast %cst_52 : f32 to vector<18x1xf32>
    %114 = arith.addf %110, %113 : vector<18x1xf32>
    %115 = math.rsqrt %114 : vector<18x1xf32>
    %116 = vector.broadcast %115 : vector<18x1xf32> to vector<18x32xf32>
    %117 = arith.mulf %112, %116 : vector<18x32xf32>
    %118 = vector.broadcast %11 : vector<1x32xf32> to vector<18x32xf32>
    %119 = arith.mulf %117, %118 : vector<18x32xf32>
    %120 = vector.broadcast %12 : vector<1x32xf32> to vector<18x32xf32>
    %121 = arith.addf %119, %120 : vector<18x32xf32>
    %122 = arith.truncf %121 : vector<18x32xf32> to vector<18x32xbf16>
    %123 = arith.truncf %13 : vector<32x128xf32> to vector<32x128xbf16>
    %cst_53 = arith.constant dense<0.000000e+00> : vector<18x128xf32>
    %124 = tpu.matmul %122, %123, %cst_53 {dimension_numbers = #tpu.dot_dimension_numbers<[1], [0], [0], [1], [0, 0, 1, 1], [], []>} : vector<18x32xbf16>, vector<32x128xbf16>, vector<18x128xf32> -> vector<18x128xf32>
    %125 = vector.broadcast %14 : vector<1x128xf32> to vector<18x128xf32>
    %126 = arith.addf %124, %125 : vector<18x128xf32>
    %cst_54 = arith.constant 0.000000e+00 : f32
    %127 = vector.broadcast %cst_54 : f32 to vector<18x128xf32>
    %128 = arith.maximumf %126, %127 : vector<18x128xf32>
    %129 = arith.truncf %128 : vector<18x128xf32> to vector<18x128xbf16>
    %130 = arith.truncf %15 : vector<128x32xf32> to vector<128x32xbf16>
    %cst_55 = arith.constant dense<0.000000e+00> : vector<18x32xf32>
    %131 = tpu.matmul %129, %130, %cst_55 {dimension_numbers = #tpu.dot_dimension_numbers<[1], [0], [0], [1], [0, 0, 1, 1], [], []>} : vector<18x128xbf16>, vector<128x32xbf16>, vector<18x32xf32> -> vector<18x32xf32>
    %132 = arith.addf %97, %131 : vector<18x32xf32>
    %133 = vector.broadcast %16 : vector<1x32xf32> to vector<18x32xf32>
    %134 = arith.addf %132, %133 : vector<18x32xf32>
    %135 = vector.extract_strided_slice %134 {offsets = [0, 0], sizes = [1, 32], strides = [1, 1]} : vector<18x32xf32> to vector<1x32xf32>
    %136 = arith.truncf %135 : vector<1x32xf32> to vector<1x32xbf16>
    %c0_56 = arith.constant 0 : index
    %c0_57 = arith.constant 0 : index
    %137 = vector.load %arg17[%c0_56, %c0_57] : memref<32x3xf32, #tpu.memory_space<vmem>>, vector<32x3xf32>
    %138 = arith.truncf %137 : vector<32x3xf32> to vector<32x3xbf16>
    %cst_58 = arith.constant dense<0.000000e+00> : vector<1x3xf32>
    %139 = tpu.matmul %136, %138, %cst_58 {dimension_numbers = #tpu.dot_dimension_numbers<[1], [0], [0], [1], [0, 0, 1, 1], [], []>} : vector<1x32xbf16>, vector<32x3xbf16>, vector<1x3xf32> -> vector<1x3xf32>
    %c0_59 = arith.constant 0 : index
    %c0_60 = arith.constant 0 : index
    %140 = vector.load %arg18[%c0_59, %c0_60] : memref<1x3xf32, #tpu.memory_space<vmem>>, vector<1x3xf32>
    %141 = arith.addf %139, %140 : vector<1x3xf32>
    %c0_61 = arith.constant 0 : index
    %c0_62 = arith.constant 0 : index
    %c0_63 = arith.constant 0 : index
    %142 = vector.load %arg19[%c0_61, %c0_62, %c0_63] : memref<1x1x3xf32, #tpu.memory_space<vmem>>, vector<1x1x3xf32>
    %143 = vector.shape_cast %142 : vector<1x1x3xf32> to vector<1x3xf32>
    %144 = vector.shape_cast %141 : vector<1x3xf32> to vector<1x1x3xf32>
    tpu.vector_store %arg19[%c0_61, %c0_62, %c0_63], %144 {strides = array<i32>} : memref<1x1x3xf32, #tpu.memory_space<vmem>>, vector<1x1x3xf32>,
    return
  }
  func.func @transform_0(%arg0: i32) -> (i32, i32, i32) {
    %c0_i32 = arith.constant 0 : i32
    %c0_i32_0 = arith.constant 0 : i32
    %c0_i32_1 = arith.constant 0 : i32
    return %arg0, %c0_i32, %c0_i32_0 : i32, i32, i32
  }
  func.func @transform_1(%arg0: i32) -> (i32, i32) {
    %c0_i32 = arith.constant 0 : i32
    %c0_i32_0 = arith.constant 0 : i32
    %c0_i32_1 = arith.constant 0 : i32
    return %c0_i32, %c0_i32_0 : i32, i32
  }
  func.func @transform_2(%arg0: i32) -> (i32, i32) {
    %c0_i32 = arith.constant 0 : i32
    %c0_i32_0 = arith.constant 0 : i32
    %c0_i32_1 = arith.constant 0 : i32
    return %c0_i32, %c0_i32_0 : i32, i32
  }
  func.func @transform_3(%arg0: i32) -> (i32, i32) {
    %c0_i32 = arith.constant 0 : i32
    %c0_i32_0 = arith.constant 0 : i32
    %c0_i32_1 = arith.constant 0 : i32
    return %c0_i32, %c0_i32_0 : i32, i32
  }
  func.func @transform_4(%arg0: i32) -> (i32, i32) {
    %c0_i32 = arith.constant 0 : i32
    %c0_i32_0 = arith.constant 0 : i32
    %c0_i32_1 = arith.constant 0 : i32
    return %c0_i32, %c0_i32_0 : i32, i32
  }
  func.func @transform_5(%arg0: i32) -> (i32, i32) {
    %c0_i32 = arith.constant 0 : i32
    %c0_i32_0 = arith.constant 0 : i32
    %c0_i32_1 = arith.constant 0 : i32
    return %c0_i32, %c0_i32_0 : i32, i32
  }
  func.func @transform_6(%arg0: i32) -> (i32, i32) {
    %c0_i32 = arith.constant 0 : i32
    %c0_i32_0 = arith.constant 0 : i32
    %c0_i32_1 = arith.constant 0 : i32
    return %c0_i32, %c0_i32_0 : i32, i32
  }
  func.func @transform_7(%arg0: i32) -> (i32, i32) {
    %c0_i32 = arith.constant 0 : i32
    %c0_i32_0 = arith.constant 0 : i32
    %c0_i32_1 = arith.constant 0 : i32
    return %c0_i32, %c0_i32_0 : i32, i32
  }
  func.func @transform_8(%arg0: i32) -> (i32, i32) {
    %c0_i32 = arith.constant 0 : i32
    %c0_i32_0 = arith.constant 0 : i32
    %c0_i32_1 = arith.constant 0 : i32
    return %c0_i32, %c0_i32_0 : i32, i32
  }
  func.func @transform_9(%arg0: i32) -> (i32, i32) {
    %c0_i32 = arith.constant 0 : i32
    %c0_i32_0 = arith.constant 0 : i32
    %c0_i32_1 = arith.constant 0 : i32
    return %c0_i32, %c0_i32_0 : i32, i32
  }
  func.func @transform_10(%arg0: i32) -> (i32, i32) {
    %c0_i32 = arith.constant 0 : i32
    %c0_i32_0 = arith.constant 0 : i32
    %c0_i32_1 = arith.constant 0 : i32
    return %c0_i32, %c0_i32_0 : i32, i32
  }
  func.func @transform_11(%arg0: i32) -> (i32, i32) {
    %c0_i32 = arith.constant 0 : i32
    %c0_i32_0 = arith.constant 0 : i32
    %c0_i32_1 = arith.constant 0 : i32
    return %c0_i32, %c0_i32_0 : i32, i32
  }
  func.func @transform_12(%arg0: i32) -> (i32, i32) {
    %c0_i32 = arith.constant 0 : i32
    %c0_i32_0 = arith.constant 0 : i32
    %c0_i32_1 = arith.constant 0 : i32
    return %c0_i32, %c0_i32_0 : i32, i32
  }
  func.func @transform_13(%arg0: i32) -> (i32, i32) {
    %c0_i32 = arith.constant 0 : i32
    %c0_i32_0 = arith.constant 0 : i32
    %c0_i32_1 = arith.constant 0 : i32
    return %c0_i32, %c0_i32_0 : i32, i32
  }
  func.func @transform_14(%arg0: i32) -> (i32, i32) {
    %c0_i32 = arith.constant 0 : i32
    %c0_i32_0 = arith.constant 0 : i32
    %c0_i32_1 = arith.constant 0 : i32
    return %c0_i32, %c0_i32_0 : i32, i32
  }
  func.func @transform_15(%arg0: i32) -> (i32, i32) {
    %c0_i32 = arith.constant 0 : i32
    %c0_i32_0 = arith.constant 0 : i32
    %c0_i32_1 = arith.constant 0 : i32
    return %c0_i32, %c0_i32_0 : i32, i32
  }
  func.func @transform_16(%arg0: i32) -> (i32, i32) {
    %c0_i32 = arith.constant 0 : i32
    %c0_i32_0 = arith.constant 0 : i32
    %c0_i32_1 = arith.constant 0 : i32
    return %c0_i32, %c0_i32_0 : i32, i32
  }
  func.func @transform_17(%arg0: i32) -> (i32, i32) {
    %c0_i32 = arith.constant 0 : i32
    %c0_i32_0 = arith.constant 0 : i32
    %c0_i32_1 = arith.constant 0 : i32
    return %c0_i32, %c0_i32_0 : i32, i32
  }
  func.func @transform_18(%arg0: i32) -> (i32, i32, i32) {
    %c0_i32 = arith.constant 0 : i32
    %c0_i32_0 = arith.constant 0 : i32
    %c0_i32_1 = arith.constant 0 : i32
    return %arg0, %c0_i32, %c0_i32_0 : i32, i32, i32
  }
}

module attributes {stable_mosaic.version = 11 : i64} {
  func.func @_encoder_layer_kernel(%arg0: i32, %arg1: memref<1x18x32xf32, #tpu.memory_space<vmem>>, %arg2: memref<18x1xf32, #tpu.memory_space<vmem>>, %arg3: memref<18x1xf32, #tpu.memory_space<vmem>>, %arg4: memref<32x32xf32, #tpu.memory_space<vmem>>, %arg5: memref<32x96xf32, #tpu.memory_space<vmem>>, %arg6: memref<1x96xf32, #tpu.memory_space<vmem>>, %arg7: memref<32x32xf32, #tpu.memory_space<vmem>>, %arg8: memref<1x32xf32, #tpu.memory_space<vmem>>, %arg9: memref<1x32xf32, #tpu.memory_space<vmem>>, %arg10: memref<1x32xf32, #tpu.memory_space<vmem>>, %arg11: memref<1x32xf32, #tpu.memory_space<vmem>>, %arg12: memref<1x32xf32, #tpu.memory_space<vmem>>, %arg13: memref<32x128xf32, #tpu.memory_space<vmem>>, %arg14: memref<1x128xf32, #tpu.memory_space<vmem>>, %arg15: memref<128x32xf32, #tpu.memory_space<vmem>>, %arg16: memref<1x32xf32, #tpu.memory_space<vmem>>, %arg17: memref<1x18x32xf32, #tpu.memory_space<vmem>>) attributes {dimension_semantics = [#tpu.dimension_semantics<parallel>], iteration_bounds = array<i64: 2>, scalar_prefetch = 0 : i64, scratch_operands = 0 : i64, tpu.core_type = #tpu.core_type<tc>, window_params = [{transform_indices = @transform_0, window_bounds = array<i64: 1, 18, 32>}, {pipeline_mode = #tpu.pipeline_mode<synchronous>, transform_indices = @transform_1, window_bounds = array<i64: 18, 1>}, {pipeline_mode = #tpu.pipeline_mode<synchronous>, transform_indices = @transform_2, window_bounds = array<i64: 18, 1>}, {pipeline_mode = #tpu.pipeline_mode<synchronous>, transform_indices = @transform_3, window_bounds = array<i64: 32, 32>}, {pipeline_mode = #tpu.pipeline_mode<synchronous>, transform_indices = @transform_4, window_bounds = array<i64: 32, 96>}, {pipeline_mode = #tpu.pipeline_mode<synchronous>, transform_indices = @transform_5, window_bounds = array<i64: 1, 96>}, {pipeline_mode = #tpu.pipeline_mode<synchronous>, transform_indices = @transform_6, window_bounds = array<i64: 32, 32>}, {pipeline_mode = #tpu.pipeline_mode<synchronous>, transform_indices = @transform_7, window_bounds = array<i64: 1, 32>}, {pipeline_mode = #tpu.pipeline_mode<synchronous>, transform_indices = @transform_8, window_bounds = array<i64: 1, 32>}, {pipeline_mode = #tpu.pipeline_mode<synchronous>, transform_indices = @transform_9, window_bounds = array<i64: 1, 32>}, {pipeline_mode = #tpu.pipeline_mode<synchronous>, transform_indices = @transform_10, window_bounds = array<i64: 1, 32>}, {pipeline_mode = #tpu.pipeline_mode<synchronous>, transform_indices = @transform_11, window_bounds = array<i64: 1, 32>}, {pipeline_mode = #tpu.pipeline_mode<synchronous>, transform_indices = @transform_12, window_bounds = array<i64: 32, 128>}, {pipeline_mode = #tpu.pipeline_mode<synchronous>, transform_indices = @transform_13, window_bounds = array<i64: 1, 128>}, {pipeline_mode = #tpu.pipeline_mode<synchronous>, transform_indices = @transform_14, window_bounds = array<i64: 128, 32>}, {pipeline_mode = #tpu.pipeline_mode<synchronous>, transform_indices = @transform_15, window_bounds = array<i64: 1, 32>}, {transform_indices = @transform_16, window_bounds = array<i64: 1, 18, 32>}]} {
    %c0 = arith.constant 0 : index
    %c0_0 = arith.constant 0 : index
    %c0_1 = arith.constant 0 : index
    %0 = vector.load %arg1[%c0, %c0_0, %c0_1] : memref<1x18x32xf32, #tpu.memory_space<vmem>>, vector<1x18x32xf32>
    %1 = vector.shape_cast %0 : vector<1x18x32xf32> to vector<18x32xf32>
    %c0_2 = arith.constant 0 : index
    %c0_3 = arith.constant 0 : index
    %2 = vector.load %arg2[%c0_2, %c0_3] : memref<18x1xf32, #tpu.memory_space<vmem>>, vector<18x1xf32>
    %c0_4 = arith.constant 0 : index
    %c0_5 = arith.constant 0 : index
    %3 = vector.load %arg3[%c0_4, %c0_5] : memref<18x1xf32, #tpu.memory_space<vmem>>, vector<18x1xf32>
    %c0_6 = arith.constant 0 : index
    %c0_7 = arith.constant 0 : index
    %4 = vector.load %arg4[%c0_6, %c0_7] : memref<32x32xf32, #tpu.memory_space<vmem>>, vector<32x32xf32>
    %c0_8 = arith.constant 0 : index
    %c0_9 = arith.constant 0 : index
    %5 = vector.load %arg5[%c0_8, %c0_9] : memref<32x96xf32, #tpu.memory_space<vmem>>, vector<32x96xf32>
    %c0_10 = arith.constant 0 : index
    %c0_11 = arith.constant 0 : index
    %6 = vector.load %arg6[%c0_10, %c0_11] : memref<1x96xf32, #tpu.memory_space<vmem>>, vector<1x96xf32>
    %c0_12 = arith.constant 0 : index
    %c0_13 = arith.constant 0 : index
    %7 = vector.load %arg7[%c0_12, %c0_13] : memref<32x32xf32, #tpu.memory_space<vmem>>, vector<32x32xf32>
    %c0_14 = arith.constant 0 : index
    %c0_15 = arith.constant 0 : index
    %8 = vector.load %arg8[%c0_14, %c0_15] : memref<1x32xf32, #tpu.memory_space<vmem>>, vector<1x32xf32>
    %c0_16 = arith.constant 0 : index
    %c0_17 = arith.constant 0 : index
    %9 = vector.load %arg9[%c0_16, %c0_17] : memref<1x32xf32, #tpu.memory_space<vmem>>, vector<1x32xf32>
    %c0_18 = arith.constant 0 : index
    %c0_19 = arith.constant 0 : index
    %10 = vector.load %arg10[%c0_18, %c0_19] : memref<1x32xf32, #tpu.memory_space<vmem>>, vector<1x32xf32>
    %c0_20 = arith.constant 0 : index
    %c0_21 = arith.constant 0 : index
    %11 = vector.load %arg11[%c0_20, %c0_21] : memref<1x32xf32, #tpu.memory_space<vmem>>, vector<1x32xf32>
    %c0_22 = arith.constant 0 : index
    %c0_23 = arith.constant 0 : index
    %12 = vector.load %arg12[%c0_22, %c0_23] : memref<1x32xf32, #tpu.memory_space<vmem>>, vector<1x32xf32>
    %c0_24 = arith.constant 0 : index
    %c0_25 = arith.constant 0 : index
    %13 = vector.load %arg13[%c0_24, %c0_25] : memref<32x128xf32, #tpu.memory_space<vmem>>, vector<32x128xf32>
    %c0_26 = arith.constant 0 : index
    %c0_27 = arith.constant 0 : index
    %14 = vector.load %arg14[%c0_26, %c0_27] : memref<1x128xf32, #tpu.memory_space<vmem>>, vector<1x128xf32>
    %c0_28 = arith.constant 0 : index
    %c0_29 = arith.constant 0 : index
    %15 = vector.load %arg15[%c0_28, %c0_29] : memref<128x32xf32, #tpu.memory_space<vmem>>, vector<128x32xf32>
    %c0_30 = arith.constant 0 : index
    %c0_31 = arith.constant 0 : index
    %16 = vector.load %arg16[%c0_30, %c0_31] : memref<1x32xf32, #tpu.memory_space<vmem>>, vector<1x32xf32>
    %cst = arith.constant dense<0.000000e+00> : vector<18xf32>
    %17 = vector.multi_reduction <add>, %1, %cst [1] : vector<18x32xf32> to vector<18xf32>
    %18 = vector.shape_cast %17 : vector<18xf32> to vector<18x1xf32>
    %cst_32 = arith.constant 3.200000e+01 : f32
    %19 = vector.broadcast %cst_32 : f32 to vector<18x1xf32>
    %20 = arith.divf %18, %19 : vector<18x1xf32>
    %21 = vector.broadcast %20 : vector<18x1xf32> to vector<18x32xf32>
    %22 = arith.subf %1, %21 : vector<18x32xf32>
    %23 = vector.broadcast %20 : vector<18x1xf32> to vector<18x32xf32>
    %24 = arith.subf %1, %23 : vector<18x32xf32>
    %25 = arith.mulf %22, %24 : vector<18x32xf32>
    %cst_33 = arith.constant dense<0.000000e+00> : vector<18xf32>
    %26 = vector.multi_reduction <add>, %25, %cst_33 [1] : vector<18x32xf32> to vector<18xf32>
    %27 = vector.shape_cast %26 : vector<18xf32> to vector<18x1xf32>
    %cst_34 = arith.constant 3.200000e+01 : f32
    %28 = vector.broadcast %cst_34 : f32 to vector<18x1xf32>
    %29 = arith.divf %27, %28 : vector<18x1xf32>
    %30 = vector.broadcast %20 : vector<18x1xf32> to vector<18x32xf32>
    %31 = arith.subf %1, %30 : vector<18x32xf32>
    %cst_35 = arith.constant 9.99999974E-6 : f32
    %32 = vector.broadcast %cst_35 : f32 to vector<18x1xf32>
    %33 = arith.addf %29, %32 : vector<18x1xf32>
    %34 = math.rsqrt %33 : vector<18x1xf32>
    %35 = vector.broadcast %34 : vector<18x1xf32> to vector<18x32xf32>
    %36 = arith.mulf %31, %35 : vector<18x32xf32>
    %37 = vector.broadcast %9 : vector<1x32xf32> to vector<18x32xf32>
    %38 = arith.mulf %36, %37 : vector<18x32xf32>
    %39 = vector.broadcast %10 : vector<1x32xf32> to vector<18x32xf32>
    %40 = arith.addf %38, %39 : vector<18x32xf32>
    %41 = arith.truncf %40 : vector<18x32xf32> to vector<18x32xbf16>
    %42 = arith.truncf %5 : vector<32x96xf32> to vector<32x96xbf16>
    %cst_36 = arith.constant dense<0.000000e+00> : vector<18x96xf32>
    %43 = tpu.matmul %41, %42, %cst_36 {dimension_numbers = #tpu.dot_dimension_numbers<[1], [0], [0], [1], [0, 0, 1, 1], [], []>} : vector<18x32xbf16>, vector<32x96xbf16>, vector<18x96xf32> -> vector<18x96xf32>
    %44 = vector.broadcast %6 : vector<1x96xf32> to vector<18x96xf32>
    %45 = arith.addf %43, %44 : vector<18x96xf32>
    %46 = vector.extract_strided_slice %45 {offsets = [0, 0], sizes = [18, 32], strides = [1, 1]} : vector<18x96xf32> to vector<18x32xf32>
    %cst_37 = arith.constant 0.000000e+00 : f32
    %47 = vector.broadcast %cst_37 : f32 to vector<18x32xf32>
    %48 = arith.maximumf %46, %47 : vector<18x32xf32>
    %49 = vector.extract_strided_slice %45 {offsets = [0, 32], sizes = [18, 32], strides = [1, 1]} : vector<18x96xf32> to vector<18x32xf32>
    %cst_38 = arith.constant 0.000000e+00 : f32
    %50 = vector.broadcast %cst_38 : f32 to vector<18x32xf32>
    %51 = arith.maximumf %49, %50 : vector<18x32xf32>
    %52 = vector.extract_strided_slice %45 {offsets = [0, 64], sizes = [18, 32], strides = [1, 1]} : vector<18x96xf32> to vector<18x32xf32>
    %53 = vector.broadcast %2 : vector<18x1xf32> to vector<18x32xf32>
    %54 = arith.mulf %48, %53 : vector<18x32xf32>
    %55 = vector.broadcast %3 : vector<18x1xf32> to vector<18x32xf32>
    %56 = arith.mulf %48, %55 : vector<18x32xf32>
    %57 = vector.broadcast %2 : vector<18x1xf32> to vector<18x32xf32>
    %58 = arith.mulf %51, %57 : vector<18x32xf32>
    %59 = vector.broadcast %3 : vector<18x1xf32> to vector<18x32xf32>
    %60 = arith.mulf %51, %59 : vector<18x32xf32>
    %61 = arith.truncf %58 : vector<18x32xf32> to vector<18x32xbf16>
    %62 = arith.truncf %52 : vector<18x32xf32> to vector<18x32xbf16>
    %cst_39 = arith.constant dense<0.000000e+00> : vector<32x32xf32>
    %63 = tpu.matmul %61, %62, %cst_39 {dimension_numbers = #tpu.dot_dimension_numbers<[0], [0], [1], [1], [0, 1, 1, 1], [], []>} : vector<18x32xbf16>, vector<18x32xbf16>, vector<32x32xf32> -> vector<32x32xf32>
    %64 = arith.mulf %63, %4 : vector<32x32xf32>
    %65 = arith.truncf %60 : vector<18x32xf32> to vector<18x32xbf16>
    %66 = arith.truncf %52 : vector<18x32xf32> to vector<18x32xbf16>
    %cst_40 = arith.constant dense<0.000000e+00> : vector<32x32xf32>
    %67 = tpu.matmul %65, %66, %cst_40 {dimension_numbers = #tpu.dot_dimension_numbers<[0], [0], [1], [1], [0, 1, 1, 1], [], []>} : vector<18x32xbf16>, vector<18x32xbf16>, vector<32x32xf32> -> vector<32x32xf32>
    %68 = arith.mulf %67, %4 : vector<32x32xf32>
    %69 = arith.truncf %54 : vector<18x32xf32> to vector<18x32xbf16>
    %70 = arith.truncf %64 : vector<32x32xf32> to vector<32x32xbf16>
    %cst_41 = arith.constant dense<0.000000e+00> : vector<18x32xf32>
    %71 = tpu.matmul %69, %70, %cst_41 {dimension_numbers = #tpu.dot_dimension_numbers<[1], [0], [0], [1], [0, 0, 1, 1], [], []>} : vector<18x32xbf16>, vector<32x32xbf16>, vector<18x32xf32> -> vector<18x32xf32>
    %72 = arith.truncf %56 : vector<18x32xf32> to vector<18x32xbf16>
    %73 = arith.truncf %68 : vector<32x32xf32> to vector<32x32xbf16>
    %cst_42 = arith.constant dense<0.000000e+00> : vector<18x32xf32>
    %74 = tpu.matmul %72, %73, %cst_42 {dimension_numbers = #tpu.dot_dimension_numbers<[1], [0], [0], [1], [0, 0, 1, 1], [], []>} : vector<18x32xbf16>, vector<32x32xbf16>, vector<18x32xf32> -> vector<18x32xf32>
    %75 = arith.addf %71, %74 : vector<18x32xf32>
    %cst_43 = arith.constant dense<0.000000e+00> : vector<32xf32>
    %76 = vector.multi_reduction <add>, %58, %cst_43 [0] : vector<18x32xf32> to vector<32xf32>
    %77 = vector.shape_cast %76 : vector<32xf32> to vector<1x32xf32>
    %cst_44 = arith.constant dense<0.000000e+00> : vector<32xf32>
    %78 = vector.multi_reduction <add>, %60, %cst_44 [0] : vector<18x32xf32> to vector<32xf32>
    %79 = vector.shape_cast %78 : vector<32xf32> to vector<1x32xf32>
    %80 = vector.broadcast %77 : vector<1x32xf32> to vector<18x32xf32>
    %81 = arith.mulf %54, %80 : vector<18x32xf32>
    %82 = vector.broadcast %79 : vector<1x32xf32> to vector<18x32xf32>
    %83 = arith.mulf %56, %82 : vector<18x32xf32>
    %84 = arith.addf %81, %83 : vector<18x32xf32>
    %85 = arith.truncf %84 : vector<18x32xf32> to vector<18x32xbf16>
    %86 = arith.truncf %4 : vector<32x32xf32> to vector<32x32xbf16>
    %cst_45 = arith.constant dense<0.000000e+00> : vector<18x32xf32>
    %87 = tpu.matmul %85, %86, %cst_45 {dimension_numbers = #tpu.dot_dimension_numbers<[1], [0], [0], [1], [0, 0, 1, 1], [], []>} : vector<18x32xbf16>, vector<32x32xbf16>, vector<18x32xf32> -> vector<18x32xf32>
    %cst_46 = arith.constant 9.99999997E-7 : f32
    %88 = vector.broadcast %cst_46 : f32 to vector<18x32xf32>
    %89 = arith.addf %87, %88 : vector<18x32xf32>
    %90 = tpu.reciprocal %89 {approx = true} : vector<18x32xf32> -> vector<18x32xf32>
    %91 = arith.mulf %75, %90 : vector<18x32xf32>
    %92 = arith.truncf %91 : vector<18x32xf32> to vector<18x32xbf16>
    %93 = arith.truncf %7 : vector<32x32xf32> to vector<32x32xbf16>
    %cst_47 = arith.constant dense<0.000000e+00> : vector<18x32xf32>
    %94 = tpu.matmul %92, %93, %cst_47 {dimension_numbers = #tpu.dot_dimension_numbers<[1], [0], [0], [1], [0, 0, 1, 1], [], []>} : vector<18x32xbf16>, vector<32x32xbf16>, vector<18x32xf32> -> vector<18x32xf32>
    %95 = arith.addf %1, %94 : vector<18x32xf32>
    %96 = vector.broadcast %8 : vector<1x32xf32> to vector<18x32xf32>
    %97 = arith.addf %95, %96 : vector<18x32xf32>
    %cst_48 = arith.constant dense<0.000000e+00> : vector<18xf32>
    %98 = vector.multi_reduction <add>, %97, %cst_48 [1] : vector<18x32xf32> to vector<18xf32>
    %99 = vector.shape_cast %98 : vector<18xf32> to vector<18x1xf32>
    %cst_49 = arith.constant 3.200000e+01 : f32
    %100 = vector.broadcast %cst_49 : f32 to vector<18x1xf32>
    %101 = arith.divf %99, %100 : vector<18x1xf32>
    %102 = vector.broadcast %101 : vector<18x1xf32> to vector<18x32xf32>
    %103 = arith.subf %97, %102 : vector<18x32xf32>
    %104 = vector.broadcast %101 : vector<18x1xf32> to vector<18x32xf32>
    %105 = arith.subf %97, %104 : vector<18x32xf32>
    %106 = arith.mulf %103, %105 : vector<18x32xf32>
    %cst_50 = arith.constant dense<0.000000e+00> : vector<18xf32>
    %107 = vector.multi_reduction <add>, %106, %cst_50 [1] : vector<18x32xf32> to vector<18xf32>
    %108 = vector.shape_cast %107 : vector<18xf32> to vector<18x1xf32>
    %cst_51 = arith.constant 3.200000e+01 : f32
    %109 = vector.broadcast %cst_51 : f32 to vector<18x1xf32>
    %110 = arith.divf %108, %109 : vector<18x1xf32>
    %111 = vector.broadcast %101 : vector<18x1xf32> to vector<18x32xf32>
    %112 = arith.subf %97, %111 : vector<18x32xf32>
    %cst_52 = arith.constant 9.99999974E-6 : f32
    %113 = vector.broadcast %cst_52 : f32 to vector<18x1xf32>
    %114 = arith.addf %110, %113 : vector<18x1xf32>
    %115 = math.rsqrt %114 : vector<18x1xf32>
    %116 = vector.broadcast %115 : vector<18x1xf32> to vector<18x32xf32>
    %117 = arith.mulf %112, %116 : vector<18x32xf32>
    %118 = vector.broadcast %11 : vector<1x32xf32> to vector<18x32xf32>
    %119 = arith.mulf %117, %118 : vector<18x32xf32>
    %120 = vector.broadcast %12 : vector<1x32xf32> to vector<18x32xf32>
    %121 = arith.addf %119, %120 : vector<18x32xf32>
    %122 = arith.truncf %121 : vector<18x32xf32> to vector<18x32xbf16>
    %123 = arith.truncf %13 : vector<32x128xf32> to vector<32x128xbf16>
    %cst_53 = arith.constant dense<0.000000e+00> : vector<18x128xf32>
    %124 = tpu.matmul %122, %123, %cst_53 {dimension_numbers = #tpu.dot_dimension_numbers<[1], [0], [0], [1], [0, 0, 1, 1], [], []>} : vector<18x32xbf16>, vector<32x128xbf16>, vector<18x128xf32> -> vector<18x128xf32>
    %125 = vector.broadcast %14 : vector<1x128xf32> to vector<18x128xf32>
    %126 = arith.addf %124, %125 : vector<18x128xf32>
    %cst_54 = arith.constant 0.000000e+00 : f32
    %127 = vector.broadcast %cst_54 : f32 to vector<18x128xf32>
    %128 = arith.maximumf %126, %127 : vector<18x128xf32>
    %129 = arith.truncf %128 : vector<18x128xf32> to vector<18x128xbf16>
    %130 = arith.truncf %15 : vector<128x32xf32> to vector<128x32xbf16>
    %cst_55 = arith.constant dense<0.000000e+00> : vector<18x32xf32>
    %131 = tpu.matmul %129, %130, %cst_55 {dimension_numbers = #tpu.dot_dimension_numbers<[1], [0], [0], [1], [0, 0, 1, 1], [], []>} : vector<18x128xbf16>, vector<128x32xbf16>, vector<18x32xf32> -> vector<18x32xf32>
    %132 = arith.addf %97, %131 : vector<18x32xf32>
    %133 = vector.broadcast %16 : vector<1x32xf32> to vector<18x32xf32>
    %134 = arith.addf %132, %133 : vector<18x32xf32>
    %c0_56 = arith.constant 0 : index
    %c0_57 = arith.constant 0 : index
    %c0_58 = arith.constant 0 : index
    %135 = vector.load %arg17[%c0_56, %c0_57, %c0_58] : memref<1x18x32xf32, #tpu.memory_space<vmem>>, vector<1x18x32xf32>
    %136 = vector.shape_cast %135 : vector<1x18x32xf32> to vector<18x32xf32>
    %137 = vector.shape_cast %134 : vector<18x32xf32> to vector<1x18x32xf32>
    tpu.vector_store %arg17[%c0_56, %c0_57, %c0_58], %137 {strides = array<i32>} : memref<1x18x32xf32, #tpu.memory_space<vmem>>, vector<1x18x32xf32>,
    return
  }
  func.func @transform_0(%arg0: i32) -> (i32, i32, i32) {
    %c0_i32 = arith.constant 0 : i32
    %c0_i32_0 = arith.constant 0 : i32
    %c0_i32_1 = arith.constant 0 : i32
    return %arg0, %c0_i32, %c0_i32_0 : i32, i32, i32
  }
  func.func @transform_1(%arg0: i32) -> (i32, i32) {
    %c0_i32 = arith.constant 0 : i32
    %c0_i32_0 = arith.constant 0 : i32
    %c0_i32_1 = arith.constant 0 : i32
    return %c0_i32, %c0_i32_0 : i32, i32
  }
  func.func @transform_2(%arg0: i32) -> (i32, i32) {
    %c0_i32 = arith.constant 0 : i32
    %c0_i32_0 = arith.constant 0 : i32
    %c0_i32_1 = arith.constant 0 : i32
    return %c0_i32, %c0_i32_0 : i32, i32
  }
  func.func @transform_3(%arg0: i32) -> (i32, i32) {
    %c0_i32 = arith.constant 0 : i32
    %c0_i32_0 = arith.constant 0 : i32
    %c0_i32_1 = arith.constant 0 : i32
    return %c0_i32, %c0_i32_0 : i32, i32
  }
  func.func @transform_4(%arg0: i32) -> (i32, i32) {
    %c0_i32 = arith.constant 0 : i32
    %c0_i32_0 = arith.constant 0 : i32
    %c0_i32_1 = arith.constant 0 : i32
    return %c0_i32, %c0_i32_0 : i32, i32
  }
  func.func @transform_5(%arg0: i32) -> (i32, i32) {
    %c0_i32 = arith.constant 0 : i32
    %c0_i32_0 = arith.constant 0 : i32
    %c0_i32_1 = arith.constant 0 : i32
    return %c0_i32, %c0_i32_0 : i32, i32
  }
  func.func @transform_6(%arg0: i32) -> (i32, i32) {
    %c0_i32 = arith.constant 0 : i32
    %c0_i32_0 = arith.constant 0 : i32
    %c0_i32_1 = arith.constant 0 : i32
    return %c0_i32, %c0_i32_0 : i32, i32
  }
  func.func @transform_7(%arg0: i32) -> (i32, i32) {
    %c0_i32 = arith.constant 0 : i32
    %c0_i32_0 = arith.constant 0 : i32
    %c0_i32_1 = arith.constant 0 : i32
    return %c0_i32, %c0_i32_0 : i32, i32
  }
  func.func @transform_8(%arg0: i32) -> (i32, i32) {
    %c0_i32 = arith.constant 0 : i32
    %c0_i32_0 = arith.constant 0 : i32
    %c0_i32_1 = arith.constant 0 : i32
    return %c0_i32, %c0_i32_0 : i32, i32
  }
  func.func @transform_9(%arg0: i32) -> (i32, i32) {
    %c0_i32 = arith.constant 0 : i32
    %c0_i32_0 = arith.constant 0 : i32
    %c0_i32_1 = arith.constant 0 : i32
    return %c0_i32, %c0_i32_0 : i32, i32
  }
  func.func @transform_10(%arg0: i32) -> (i32, i32) {
    %c0_i32 = arith.constant 0 : i32
    %c0_i32_0 = arith.constant 0 : i32
    %c0_i32_1 = arith.constant 0 : i32
    return %c0_i32, %c0_i32_0 : i32, i32
  }
  func.func @transform_11(%arg0: i32) -> (i32, i32) {
    %c0_i32 = arith.constant 0 : i32
    %c0_i32_0 = arith.constant 0 : i32
    %c0_i32_1 = arith.constant 0 : i32
    return %c0_i32, %c0_i32_0 : i32, i32
  }
  func.func @transform_12(%arg0: i32) -> (i32, i32) {
    %c0_i32 = arith.constant 0 : i32
    %c0_i32_0 = arith.constant 0 : i32
    %c0_i32_1 = arith.constant 0 : i32
    return %c0_i32, %c0_i32_0 : i32, i32
  }
  func.func @transform_13(%arg0: i32) -> (i32, i32) {
    %c0_i32 = arith.constant 0 : i32
    %c0_i32_0 = arith.constant 0 : i32
    %c0_i32_1 = arith.constant 0 : i32
    return %c0_i32, %c0_i32_0 : i32, i32
  }
  func.func @transform_14(%arg0: i32) -> (i32, i32) {
    %c0_i32 = arith.constant 0 : i32
    %c0_i32_0 = arith.constant 0 : i32
    %c0_i32_1 = arith.constant 0 : i32
    return %c0_i32, %c0_i32_0 : i32, i32
  }
  func.func @transform_15(%arg0: i32) -> (i32, i32) {
    %c0_i32 = arith.constant 0 : i32
    %c0_i32_0 = arith.constant 0 : i32
    %c0_i32_1 = arith.constant 0 : i32
    return %c0_i32, %c0_i32_0 : i32, i32
  }
  func.func @transform_16(%arg0: i32) -> (i32, i32, i32) {
    %c0_i32 = arith.constant 0 : i32
    %c0_i32_0 = arith.constant 0 : i32
    %c0_i32_1 = arith.constant 0 : i32
    return %arg0, %c0_i32, %c0_i32_0 : i32, i32, i32
  }
}

</mosaic_0001>

<llo_original>
// kernel: model_forward.3
$region0: #{model_forward.3}
  #allocation0 [shape = 'u32[]', space=smem, size = 0x4, offset = 0x4, fixed_abs, tag = 'smem constant byte address 0x4 - core index']
  #allocation1 [shape = 'u32[144,128]{1,0:T(1,128)}', space=vmem, size = 0x12000, scoped, tag = 'internal scratch']
  %s0 = inlined_call_operand.vmem [shape: f32[2,17,5], index: 0, kind: input, shape index: {}]
  %s1 = inlined_call_operand.vmem [shape: f32[2,17,5], index: 1, kind: input, shape index: {}]
  %s2 = inlined_call_operand.vmem [shape: f32[5,32], index: 2, kind: input, shape index: {}]
  %s3 = inlined_call_operand.vmem [shape: f32[1,32], index: 3, kind: input, shape index: {}]
  %s4 = inlined_call_operand.vmem [shape: f32[1,32], index: 4, kind: input, shape index: {}]
  %s5 = inlined_call_operand.vmem [shape: f32[1,32], index: 5, kind: input, shape index: {}]
  %s6 = inlined_call_operand.vmem [shape: f32[2,18,32], index: 6, kind: output, shape index: {}]
  %s7 = sld [smem:[#allocation0]]
  $region57: #{model_forward.3} parent=0
    _
  %s9 = ssub.s32 1, %s7
  %s10 = scalar_select 0, %s9, %s7
  loop: start=0, step=1, limit=4
  $region2: #{model_forward.3} parent=0 // loop_pre_header
    _
  $region3: #{model_forward.3} parent=0 // loop_header
    %s12 = sphi 0, %s16
    %p13 = scmp.ge.s32.totalorder %s12, 4
    %s22 = sphi 0, %s24
    %s25 = sphi 0, %s22
    %s26 = sphi 0, %s25
    %s42 = sphi 0, %s26
    %s48 = sphi 0, %s50
    %s51 = sphi 0, %s48
    %s52 = sphi 0, %s51
    %s68 = sphi 0, %s52
    %s72 = sphi 0, %s72
    %s74 = sphi 0, %s72
    %s75 = sphi 0, %s74
    %s89 = sphi 0, %s75
    %s93 = sphi 0, %s93
    %s95 = sphi 0, %s93
    %s96 = sphi 0, %s95
    %s110 = sphi 0, %s96
    %s114 = sphi 0, %s114
    %s116 = sphi 0, %s114
    %s117 = sphi 0, %s116
    %s131 = sphi 0, %s117
    %s135 = sphi 0, %s135
    %s137 = sphi 0, %s135
    %s138 = sphi 0, %s137
    %s152 = sphi 0, %s138
    %s158 = sphi 0, %s160
    %s161 = sphi 0, %s158
    %s162 = sphi 0, %s161
    %s178 = sphi 0, %s162
  $region4: #{model_forward.3} parent=0 // loop_header_branch
    %15 = sbr.rel (%p13) target = $region8
  $region5: #{model_forward.3} parent=0 // loop_body
    %s17 = ssub.s32 %s12, 1
    %s18 = ssub.s32 %s12, 2
    %s19 = sadd.s32 %s12, 1
    %s20 = ssub.s32 %s12, %s19
    %p21 = scmp.eq.s32.totalorder %s20, 0
    %s23 = sadd.s32 %s22, 1
    %s24 = scalar_select %p21, %s22, %s23
    %p27 = pneg %p21
    %p28 = scmp.eq.s32.totalorder %s12, 1
    %p29 = por %p27, %p28
    %p30 = scmp.ne.s32.totalorder %s22, %s25
    %p31 = scmp.eq.s32.totalorder %s12, 0
    %p32 = por %p30, %p31
    %p33 = scmp.ne.s32.totalorder %s22, %s25
    %p34 = scmp.eq.s32.totalorder %s17, 1
    %p35 = por %p33, %p34
    %p36 = scmp.ne.s32.totalorder %s25, %s26
    %p37 = scmp.eq.s32.totalorder %s17, 0
    %p38 = por %p36, %p37
    %p39 = scmp.ne.s32.totalorder %s25, %s26
    %p40 = scmp.eq.s32.totalorder %s18, 1
    %p41 = por %p39, %p40
    %p43 = scmp.ne.s32.totalorder %s26, %s42
    %p44 = scmp.eq.s32.totalorder %s18, 0
    %p45 = por %p43, %p44
    %s46 = ssub.s32 %s12, %s19
    %p47 = scmp.eq.s32.totalorder %s46, 0
    %s49 = sadd.s32 %s48, 1
    %s50 = scalar_select %p47, %s48, %s49
    %p53 = pneg %p47
    %p54 = scmp.eq.s32.totalorder %s12, 1
    %p55 = por %p53, %p54
    %p56 = scmp.ne.s32.totalorder %s48, %s51
    %p57 = scmp.eq.s32.totalorder %s12, 0
    %p58 = por %p56, %p57
    %p59 = scmp.ne.s32.totalorder %s48, %s51
    %p60 = scmp.eq.s32.totalorder %s17, 1
    %p61 = por %p59, %p60
    %p62 = scmp.ne.s32.totalorder %s51, %s52
    %p63 = scmp.eq.s32.totalorder %s17, 0
    %p64 = por %p62, %p63
    %p65 = scmp.ne.s32.totalorder %s51, %s52
    %p66 = scmp.eq.s32.totalorder %s18, 1
    %p67 = por %p65, %p66
    %p69 = scmp.ne.s32.totalorder %s52, %s68
    %p70 = scmp.eq.s32.totalorder %s18, 0
    %p71 = por %p69, %p70
    %s73 = sadd.s32 %s72, 1
    %p76 = scmp.eq.s32.totalorder %s12, 1
    %p77 = scmp.ne.s32.totalorder %s72, %s74
    %p78 = scmp.eq.s32.totalorder %s12, 0
    %p79 = por %p77, %p78
    %p80 = scmp.ne.s32.totalorder %s72, %s74
    %p81 = scmp.eq.s32.totalorder %s17, 1
    %p82 = por %p80, %p81
    %p83 = scmp.ne.s32.totalorder %s74, %s75
    %p84 = scmp.eq.s32.totalorder %s17, 0
    %p85 = por %p83, %p84
    %p86 = scmp.ne.s32.totalorder %s74, %s75
    %p87 = scmp.eq.s32.totalorder %s18, 1
    %p88 = por %p86, %p87
    %p90 = scmp.ne.s32.totalorder %s75, %s89
    %p91 = scmp.eq.s32.totalorder %s18, 0
    %p92 = por %p90, %p91
    %s94 = sadd.s32 %s93, 1
    %p97 = scmp.eq.s32.totalorder %s12, 1
    %p98 = scmp.ne.s32.totalorder %s93, %s95
    %p99 = scmp.eq.s32.totalorder %s12, 0
    %p100 = por %p98, %p99
    %p101 = scmp.ne.s32.totalorder %s93, %s95
    %p102 = scmp.eq.s32.totalorder %s17, 1
    %p103 = por %p101, %p102
    %p104 = scmp.ne.s32.totalorder %s95, %s96
    %p105 = scmp.eq.s32.totalorder %s17, 0
    %p106 = por %p104, %p105
    %p107 = scmp.ne.s32.totalorder %s95, %s96
    %p108 = scmp.eq.s32.totalorder %s18, 1
    %p109 = por %p107, %p108
    %p111 = scmp.ne.s32.totalorder %s96, %s110
    %p112 = scmp.eq.s32.totalorder %s18, 0
    %p113 = por %p111, %p112
    %s115 = sadd.s32 %s114, 1
    %p118 = scmp.eq.s32.totalorder %s12, 1
    %p119 = scmp.ne.s32.totalorder %s114, %s116
    %p120 = scmp.eq.s32.totalorder %s12, 0
    %p121 = por %p119, %p120
    %p122 = scmp.ne.s32.totalorder %s114, %s116
    %p123 = scmp.eq.s32.totalorder %s17, 1
    %p124 = por %p122, %p123
    %p125 = scmp.ne.s32.totalorder %s116, %s117
    %p126 = scmp.eq.s32.totalorder %s17, 0
    %p127 = por %p125, %p126
    %p128 = scmp.ne.s32.totalorder %s116, %s117
    %p129 = scmp.eq.s32.totalorder %s18, 1
    %p130 = por %p128, %p129
    %p132 = scmp.ne.s32.totalorder %s117, %s131
    %p133 = scmp.eq.s32.totalorder %s18, 0
    %p134 = por %p132, %p133
    %s136 = sadd.s32 %s135, 1
    %p139 = scmp.eq.s32.totalorder %s12, 1
    %p140 = scmp.ne.s32.totalorder %s135, %s137
    %p141 = scmp.eq.s32.totalorder %s12, 0
    %p142 = por %p140, %p141
    %p143 = scmp.ne.s32.totalorder %s135, %s137
    %p144 = scmp.eq.s32.totalorder %s17, 1
    %p145 = por %p143, %p144
    %p146 = scmp.ne.s32.totalorder %s137, %s138
    %p147 = scmp.eq.s32.totalorder %s17, 0
    %p148 = por %p146, %p147
    %p149 = scmp.ne.s32.totalorder %s137, %s138
    %p150 = scmp.eq.s32.totalorder %s18, 1
    %p151 = por %p149, %p150
    %p153 = scmp.ne.s32.totalorder %s138, %s152
    %p154 = scmp.eq.s32.totalorder %s18, 0
    %p155 = por %p153, %p154
    %s156 = ssub.s32 %s12, %s19
    %p157 = scmp.eq.s32.totalorder %s156, 0
    %s159 = sadd.s32 %s158, 1
    %s160 = scalar_select %p157, %s158, %s159
    %p163 = pneg %p157
    %p164 = scmp.eq.s32.totalorder %s12, 1
    %p165 = por %p163, %p164
    %p166 = scmp.ne.s32.totalorder %s158, %s161
    %p167 = scmp.eq.s32.totalorder %s12, 0
    %p168 = por %p166, %p167
    %p169 = scmp.ne.s32.totalorder %s158, %s161
    %p170 = scmp.eq.s32.totalorder %s17, 1
    %p171 = por %p169, %p170
    %p172 = scmp.ne.s32.totalorder %s161, %s162
    %p173 = scmp.eq.s32.totalorder %s17, 0
    %p174 = por %p172, %p173
    %p175 = scmp.ne.s32.totalorder %s161, %s162
    %p176 = scmp.eq.s32.totalorder %s18, 1
    %p177 = por %p175, %p176
    %p179 = scmp.ne.s32.totalorder %s162, %s178
    %p180 = scmp.eq.s32.totalorder %s18, 0
    %p181 = por %p179, %p180
    %p182 = scmp.le.s32.totalorder 1, %s12
    %p183 = scmp.lt.s32.totalorder %s12, 3
    %p184 = pnand %p182, %p183
    %p185 = pneg %p184
    // Predicated region
    $region9: #{model_forward.3} parent=5 // pred_check
      _
    $region10: #{model_forward.3} parent=5 // pred_check_branch
      %187 = sbr.rel (%p184) target = $region12
    $region11: #{model_forward.3} parent=5 // pred_region
      %s188 = ssub.s32 %s12, 1
      // Predicated region
      $region13: #{model_forward.3} parent=11 // pred_check
        %p189 = pneg %p85
      $region14: #{model_forward.3} parent=11 // pred_check_branch
        %191 = sbr.rel (%p189) target = $region16
      $region15: #{model_forward.3} parent=11 // pred_region
        _
      $region16: #{model_forward.3} parent=11 // pred_fallthru
        _
      // Predicated region
      $region17: #{model_forward.3} parent=11 // pred_check
        %p192 = pneg %p106
      $region18: #{model_forward.3} parent=11 // pred_check_branch
        %194 = sbr.rel (%p192) target = $region20
      $region19: #{model_forward.3} parent=11 // pred_region
        _
      $region20: #{model_forward.3} parent=11 // pred_fallthru
        _
      // Predicated region
      $region21: #{model_forward.3} parent=11 // pred_check
        %p195 = pneg %p127
      $region22: #{model_forward.3} parent=11 // pred_check_branch
        %197 = sbr.rel (%p195) target = $region24
      $region23: #{model_forward.3} parent=11 // pred_region
        _
      $region24: #{model_forward.3} parent=11 // pred_fallthru
        _
      // Predicated region
      $region25: #{model_forward.3} parent=11 // pred_check
        %p198 = pneg %p148
      $region26: #{model_forward.3} parent=11 // pred_check_branch
        %200 = sbr.rel (%p198) target = $region28
      $region27: #{model_forward.3} parent=11 // pred_region
        _
      $region28: #{model_forward.3} parent=11 // pred_fallthru
        _
    $region12: #{model_forward.3} parent=5 // pred_fallthru
      _
    %p201 = scmp.lt.s32.totalorder %s12, 2
    // Predicated region
    $region29: #{model_forward.3} parent=5 // pred_check
      %p202 = pneg %p201
    $region30: #{model_forward.3} parent=5 // pred_check_branch
      %204 = sbr.rel (%p202) target = $region32
    $region31: #{model_forward.3} parent=5 // pred_region
      // Predicated region
      $region33: #{model_forward.3} parent=31 // pred_check
        %p205 = pneg %p32
      $region34: #{model_forward.3} parent=31 // pred_check_branch
        %207 = sbr.rel (%p205) target = $region36
      $region35: #{model_forward.3} parent=31 // pred_region
        %p208 = scmp.lt.s32.totalorder %s12, 1
        %s209 = scalar_select %p208, %s12, 1
        %s210 = smul.addr %s209, 3
        %s211 = smul.addr %s210, 8
        %s212 = scalar_lea.vmem %s0, %s211
      $region36: #{model_forward.3} parent=31 // pred_fallthru
        _
      // Predicated region
      $region37: #{model_forward.3} parent=31 // pred_check
        %p213 = pneg %p58
      $region38: #{model_forward.3} parent=31 // pred_check_branch
        %215 = sbr.rel (%p213) target = $region40
      $region39: #{model_forward.3} parent=31 // pred_region
        %p216 = scmp.lt.s32.totalorder %s12, 1
        %s217 = scalar_select %p216, %s12, 1
        %s218 = smul.addr %s217, 3
        %s219 = smul.addr %s218, 8
        %s220 = scalar_lea.vmem %s1, %s219
      $region40: #{model_forward.3} parent=31 // pred_fallthru
        _
    $region32: #{model_forward.3} parent=5 // pred_fallthru
      _
    %p221 = scmp.le.s32.totalorder 1, %s12
    %p222 = scmp.lt.s32.totalorder %s12, 3
    %p223 = pnand %p221, %p222
    %p224 = pneg %p223
    // Predicated region
    $region41: #{model_forward.3} parent=5 // pred_check
      _
    $region42: #{model_forward.3} parent=5 // pred_check_branch
      %226 = sbr.rel (%p223) target = $region44
    $region43: #{model_forward.3} parent=5 // pred_region
      %s227 = ssub.s32 %s12, 1
      %p228 = scmp.lt.s32.totalorder %s17, 1
      %s229 = scalar_select %p228, %s17, 1
      %s230 = smul.addr %s229, 3
      %s231 = smul.addr %s230, 8
      %s232 = scalar_lea.vmem %s0, %s231
      %p233 = pneg %p38
      %p234 = pneg %p35
      %p235 = scmp.lt.s32.totalorder %s17, 1
      %s236 = scalar_select %p235, %s17, 1
      %s237 = smul.addr %s236, 3
      %s238 = smul.addr %s237, 8
      %s239 = scalar_lea.vmem %s1, %s238
      %p240 = pneg %p64
      %p241 = pneg %p61
      %p242 = pneg %p85
      %p243 = pneg %p82
      %p244 = pneg %p106
      %p245 = pneg %p103
      %p246 = pneg %p127
      %p247 = pneg %p124
      %p248 = pneg %p148
      %p249 = pneg %p145
      %p250 = pneg %p174
      %p251 = pneg %p171
      %p252 = scmp.lt.s32.totalorder %s17, 1
      %s253 = scalar_select %p252, %s17, 1
      %s254 = smul.addr %s253, 3
      %s255 = smul.addr %s254, 8
      %s256 = scalar_lea.vmem %s6, %s255
      %p257 = scmp.lt.s32.totalorder %s17, 1
      %s258 = scalar_select %p257, %s17, 1
      %s259 = smul.addr %s258, 3
      %s260 = smul.addr %s259, 8
      %s261 = scalar_lea.vmem %s0, %s260
      %p262 = scmp.lt.s32.totalorder %s17, 1
      %s263 = scalar_select %p262, %s17, 1
      %s264 = smul.addr %s263, 3
      %s265 = smul.addr %s264, 8
      %s266 = scalar_lea.vmem %s1, %s265
      %p267 = scmp.lt.s32.totalorder %s17, 1
      %s268 = scalar_select %p267, %s17, 1
      %s269 = smul.addr %s268, 3
      %s270 = smul.addr %s269, 8
      %s271 = scalar_lea.vmem %s6, %s270
      %v273 = vld [vmem:[%s2] sm:$0x1f]
      %v274 = vpack.c.bf16 %v273, %v273
      %v275 = vld [vmem:[%s3] sm:$0x1]
      %v276 = vld [vmem:[%s4] sm:$0x1]
      %v277 = vld [vmem:[%s261] sm:$0xff]
      %v278 = vld [vmem:[%s261 + $0x8] sm:$0xff]
      %v279 = vld [vmem:[%s261 + $0x10] sm:$0x1]
      %v280 = vpack.c.bf16 %v278, %v277
      %v281 = vpack.c.bf16 %v279, %v279
      %vm282 = vcmask 39936
      %v284 = vsel %vm282, %v280, 0
      %v287 = vsel %vm282, %v281, 0
      %vm289 = vcmask 1041408
      %vm290 = vcmask 1042432
      %v291 = vsel %vm289, 4294967295, 65535
      %v292 = vsel %vm290, %v291, 0
      %v294 = vand.u32 %v274, %v292
      %296 = vmatprep.subr.bf16.mxu0 0
      %297 = vmatpush1.bf16.msra.mxu0 0
      %298 = vmatprep.subr.bf16.mxu0 0
      %299 = vmatpush1.bf16.msra.mxu0 0
      %300 = vmatprep.subr.bf16.mxu0 0
      %301 = vmatpush1.bf16.msra.mxu0 0
      %302 = vmatprep.subr.bf16.mxu0 0
      %303 = vmatpush1.bf16.msra.mxu0 0
      %304 = vmatprep.subr.bf16.mxu0 0
      %305 = vmatpush1.bf16.msra.mxu0 0
      %306 = vmatprep.subr.bf16.mxu0 0
      %307 = vmatpush1.bf16.msra.mxu0 0
      %308 = vmatprep.subr.bf16.mxu0 0
      %309 = vmatpush1.bf16.msra.mxu0 0
      %310 = vmatprep.subr.bf16.mxu0 0
      %311 = vmatpush1.bf16.msra.mxu0 %v294
      %312 = vmatprep.subr.bf16.mxu0 0
      %313 = vmatpush2.bf16.msra.mxu0 0
      %314 = vmatprep.subr.bf16.mxu0 0
      %315 = vmatpush2.bf16.msra.mxu0 0
      %316 = vmatprep.subr.bf16.mxu0 0
      %317 = vmatpush2.bf16.msra.mxu0 0
      %318 = vmatprep.subr.bf16.mxu0 0
      %319 = vmatpush2.bf16.msra.mxu0 0
      %320 = vmatprep.subr.bf16.mxu0 0
      %321 = vmatpush2.bf16.msra.mxu0 0
      %322 = vmatprep.subr.bf16.mxu0 0
      %323 = vmatpush2.bf16.msra.mxu0 0
      %324 = vmatprep.subr.bf16.mxu0 0
      %325 = vmatpush2.bf16.msra.mxu0 0
      %326 = vmatprep.subr.bf16.mxu0 0
      %327 = vmatpush2.bf16.msra.mxu0 0
      %328 = vmatprep.mubr.bf16.mxu0 0
      %329 = vmatmul.mubr.bf16.gmra.mxu0 %v284
      %v330 = vpop.f32.mrf.mxu0
      %v331 = vadd.f32 0.0, %v330
      %v332 = vpop.f32.mrf.mxu0
      %v333 = vpop.f32.mrf.mxu0
      %v334 = vadd.f32 0.0, %v333
      %v335 = vpop.f32.mrf.mxu0
      %336 = vmatprep.mubr.bf16.mxu0 0
      %337 = vmatmul.mubr.bf16.gmra.mxu0 %v287
      %v338 = vpop.f32.mrf.mxu0
      %v339 = vadd.f32 0.0, %v338
      %v340 = vpop.f32.mrf.mxu0
      %v341 = vpop.f32.mrf.mxu0
      %v342 = vpop.f32.mrf.mxu0
      %343 = vdwg.mxu0
      %v344 = vld [vmem:[%s266] sm:$0xff]
      %v345 = vld [vmem:[%s266 + $0x8] sm:$0xff]
      %v346 = vld [vmem:[%s266 + $0x10] sm:$0x1]
      %v347 = vpack.c.bf16 %v345, %v344
      %v348 = vpack.c.bf16 %v346, %v346
      %v350 = vsel %vm282, %v347, 0
      %v353 = vsel %vm282, %v348, 0
      %355 = vmatprep.subr.bf16.mxu0 0
      %356 = vmatpush1.bf16.msra.mxu0 0
      %357 = vmatprep.subr.bf16.mxu0 0
      %358 = vmatpush1.bf16.msra.mxu0 0
      %359 = vmatprep.subr.bf16.mxu0 0
      %360 = vmatpush1.bf16.msra.mxu0 0
      %361 = vmatprep.subr.bf16.mxu0 0
      %362 = vmatpush1.bf16.msra.mxu0 0
      %363 = vmatprep.subr.bf16.mxu0 0
      %364 = vmatpush1.bf16.msra.mxu0 0
      %365 = vmatprep.subr.bf16.mxu0 0
      %366 = vmatpush1.bf16.msra.mxu0 0
      %367 = vmatprep.subr.bf16.mxu0 0
      %368 = vmatpush1.bf16.msra.mxu0 0
      %369 = vmatprep.subr.bf16.mxu0 0
      %370 = vmatpush1.bf16.msra.mxu0 %v294
      %371 = vmatprep.subr.bf16.mxu0 0
      %372 = vmatpush2.bf16.msra.mxu0 0
      %373 = vmatprep.subr.bf16.mxu0 0
      %374 = vmatpush2.bf16.msra.mxu0 0
      %375 = vmatprep.subr.bf16.mxu0 0
      %376 = vmatpush2.bf16.msra.mxu0 0
      %377 = vmatprep.subr.bf16.mxu0 0
      %378 = vmatpush2.bf16.msra.mxu0 0
      %379 = vmatprep.subr.bf16.mxu0 0
      %380 = vmatpush2.bf16.msra.mxu0 0
      %381 = vmatprep.subr.bf16.mxu0 0
      %382 = vmatpush2.bf16.msra.mxu0 0
      %383 = vmatprep.subr.bf16.mxu0 0
      %384 = vmatpush2.bf16.msra.mxu0 0
      %385 = vmatprep.subr.bf16.mxu0 0
      %386 = vmatpush2.bf16.msra.mxu0 0
      %387 = vmatprep.mubr.bf16.mxu0 0
      %388 = vmatmul.mubr.bf16.gmra.mxu0 %v350
      %v389 = vpop.f32.mrf.mxu0
      %v390 = vadd.f32 0.0, %v389
      %v391 = vpop.f32.mrf.mxu0
      %v392 = vpop.f32.mrf.mxu0
      %v393 = vadd.f32 0.0, %v392
      %v394 = vpop.f32.mrf.mxu0
      %395 = vmatprep.mubr.bf16.mxu0 0
      %396 = vmatmul.mubr.bf16.gmra.mxu0 %v353
      %v397 = vpop.f32.mrf.mxu0
      %v398 = vadd.f32 0.0, %v397
      %v399 = vpop.f32.mrf.mxu0
      %v400 = vpop.f32.mrf.mxu0
      %v401 = vpop.f32.mrf.mxu0
      %402 = vdwg.mxu0
      %v404 = vlaneseq
      %v405 = vshrl.u32 %v404, 7
      %v406 = vsub.s32 0, %v405
      %v407 = vrot.slane %v275, %v406
      %v409 = vmul.f32 %v331, %v407
      %v410 = vmul.f32 %v334, %v407
      %v411 = vmul.f32 %v339, %v407
      %v413 = vlaneseq
      %v414 = vshrl.u32 %v413, 7
      %v415 = vsub.s32 0, %v414
      %v416 = vrot.slane %v276, %v415
      %v418 = vadd.f32 %v409, %v416
      %v419 = vadd.f32 %v410, %v416
      %v420 = vadd.f32 %v411, %v416
      %v421 = vmax.f32 %v418, 0.0
      %v422 = vmax.f32 %v419, 0.0
      %v423 = vmax.f32 %v420, 0.0
      %v424 = vmul.f32 %v390, %v407
      %v425 = vmul.f32 %v393, %v407
      %v426 = vmul.f32 %v398, %v407
      %v427 = vadd.f32 %v424, %v416
      %v428 = vadd.f32 %v425, %v416
      %v429 = vadd.f32 %v426, %v416
      %v430 = vmax.f32 %v427, 0.0
      %v431 = vmax.f32 %v428, 0.0
      %v432 = vmax.f32 %v429, 0.0
      %v433 = vld [vmem:[%s5] sm:$0x1]
      %vm434 = vcmask 253952
      %435 = vst.msk [vmem:[%s271] sm:$0x1] %vm434, %v433
      %v436 = vmax.f32 %v421, %v430
      %v437 = vmax.f32 %v422, %v431
      %v438 = vmax.f32 %v423, %v432
      %vm439 = vcmask 261120
      %440 = vst.msk [vmem:[%s271 + $0x1] sm:$0xff] %vm439, %v436
      %441 = vst.msk [vmem:[%s271 + $0x9] sm:$0xff] %vm439, %v437
      %442 = vst.msk [vmem:[%s271 + $0x11] sm:$0x1] %vm434, %v438
      %p443 = scmp.lt.s32.totalorder %s17, 1
      %s444 = scalar_select %p443, %s17, 1
      %s445 = smul.addr %s444, 3
      %s446 = smul.addr %s445, 8
      %s447 = scalar_lea.vmem %s6, %s446
      // Predicated region
      $region45: #{model_forward.3} parent=43 // pred_check
        %p448 = pneg %p171
      $region46: #{model_forward.3} parent=43 // pred_check_branch
        %450 = sbr.rel (%p448) target = $region48
      $region47: #{model_forward.3} parent=43 // pred_region
        _
      $region48: #{model_forward.3} parent=43 // pred_fallthru
        _
    $region44: #{model_forward.3} parent=5 // pred_fallthru
      _
    %p451 = scmp.le.s32.totalorder 2, %s12
    // Predicated region
    $region49: #{model_forward.3} parent=5 // pred_check
      %p452 = pneg %p451
    $region50: #{model_forward.3} parent=5 // pred_check_branch
      %454 = sbr.rel (%p452) target = $region52
    $region51: #{model_forward.3} parent=5 // pred_region
      %s455 = ssub.s32 %s12, 2
      // Predicated region
      $region53: #{model_forward.3} parent=51 // pred_check
        %p456 = pneg %p177
      $region54: #{model_forward.3} parent=51 // pred_check_branch
        %458 = sbr.rel (%p456) target = $region56
      $region55: #{model_forward.3} parent=51 // pred_region
        %p459 = scmp.lt.s32.totalorder %s18, 1
        %s460 = scalar_select %p459, %s18, 1
        %s461 = smul.addr %s460, 3
        %s462 = smul.addr %s461, 8
        %s463 = scalar_lea.vmem %s6, %s462
      $region56: #{model_forward.3} parent=51 // pred_fallthru
        _
    $region52: #{model_forward.3} parent=5 // pred_fallthru
      _
  $region6: #{model_forward.3} parent=0 // loop_footer
    %s16 = sadd.s32 1, %s12
  $region7: #{model_forward.3} parent=0 // loop_footer_branch
    %11 = sbr.rel target = $region3
  $region8: #{model_forward.3} parent=0 // loop_exit
    _

// kernel: model_forward.4
$region0: #{model_forward.4}
  #allocation0 [shape = 'u32[]', space=smem, size = 0x4, offset = 0x4, fixed_abs, tag = 'smem constant byte address 0x4 - core index']
  #allocation1 [shape = 'u32[144,128]{1,0:T(1,128)}', space=vmem, size = 0x12000, scoped, tag = 'internal scratch']
  %s0 = inlined_call_operand.vmem [shape: f32[2,18,32], index: 0, kind: input, shape index: {}]
  %s1 = inlined_call_operand.vmem [shape: f32[18,1], index: 1, kind: input, shape index: {}]
  %s2 = inlined_call_operand.vmem [shape: f32[18,1], index: 2, kind: input, shape index: {}]
  %s3 = inlined_call_operand.vmem [shape: f32[32,32], index: 3, kind: input, shape index: {}]
  %s4 = inlined_call_operand.vmem [shape: f32[32,96], index: 4, kind: input, shape index: {}]
  %s5 = inlined_call_operand.vmem [shape: f32[1,96], index: 5, kind: input, shape index: {}]
  %s6 = inlined_call_operand.vmem [shape: f32[32,32], index: 6, kind: input, shape index: {}]
  %s7 = inlined_call_operand.vmem [shape: f32[1,32], index: 7, kind: input, shape index: {}]
  %s8 = inlined_call_operand.vmem [shape: f32[1,32], index: 8, kind: input, shape index: {}]
  %s9 = inlined_call_operand.vmem [shape: f32[1,32], index: 9, kind: input, shape index: {}]
  %s10 = inlined_call_operand.vmem [shape: f32[1,32], index: 10, kind: input, shape index: {}]
  %s11 = inlined_call_operand.vmem [shape: f32[1,32], index: 11, kind: input, shape index: {}]
  %s12 = inlined_call_operand.vmem [shape: f32[32,128], index: 12, kind: input, shape index: {}]
  %s13 = inlined_call_operand.vmem [shape: f32[1,128], index: 13, kind: input, shape index: {}]
  %s14 = inlined_call_operand.vmem [shape: f32[128,32], index: 14, kind: input, shape index: {}]
  %s15 = inlined_call_operand.vmem [shape: f32[1,32], index: 15, kind: input, shape index: {}]
  %s16 = inlined_call_operand.vmem [shape: f32[2,18,32], index: 16, kind: output, shape index: {}]
  %s17 = sld [smem:[#allocation0]]
  $region97: #{model_forward.4} parent=0
    _
  %s19 = ssub.s32 1, %s17
  %s20 = scalar_select 0, %s19, %s17
  loop: start=0, step=1, limit=4
  $region2: #{model_forward.4} parent=0 // loop_pre_header
    _
  $region3: #{model_forward.4} parent=0 // loop_header
    %s22 = sphi 0, %s26
    %p23 = scmp.ge.s32.totalorder %s22, 4
    %s32 = sphi 0, %s34
    %s35 = sphi 0, %s32
    %s36 = sphi 0, %s35
    %s52 = sphi 0, %s36
    %s56 = sphi 0, %s56
    %s58 = sphi 0, %s56
    %s59 = sphi 0, %s58
    %s73 = sphi 0, %s59
    %s77 = sphi 0, %s77
    %s79 = sphi 0, %s77
    %s80 = sphi 0, %s79
    %s94 = sphi 0, %s80
    %s98 = sphi 0, %s98
    %s100 = sphi 0, %s98
    %s101 = sphi 0, %s100
    %s115 = sphi 0, %s101
    %s119 = sphi 0, %s119
    %s121 = sphi 0, %s119
    %s122 = sphi 0, %s121
    %s136 = sphi 0, %s122
    %s140 = sphi 0, %s140
    %s142 = sphi 0, %s140
    %s143 = sphi 0, %s142
    %s157 = sphi 0, %s143
    %s161 = sphi 0, %s161
    %s163 = sphi 0, %s161
    %s164 = sphi 0, %s163
    %s178 = sphi 0, %s164
    %s182 = sphi 0, %s182
    %s184 = sphi 0, %s182
    %s185 = sphi 0, %s184
    %s199 = sphi 0, %s185
    %s203 = sphi 0, %s203
    %s205 = sphi 0, %s203
    %s206 = sphi 0, %s205
    %s220 = sphi 0, %s206
    %s224 = sphi 0, %s224
    %s226 = sphi 0, %s224
    %s227 = sphi 0, %s226
    %s241 = sphi 0, %s227
    %s245 = sphi 0, %s245
    %s247 = sphi 0, %s245
    %s248 = sphi 0, %s247
    %s262 = sphi 0, %s248
    %s266 = sphi 0, %s266
    %s268 = sphi 0, %s266
    %s269 = sphi 0, %s268
    %s283 = sphi 0, %s269
    %s287 = sphi 0, %s287
    %s289 = sphi 0, %s287
    %s290 = sphi 0, %s289
    %s304 = sphi 0, %s290
    %s308 = sphi 0, %s308
    %s310 = sphi 0, %s308
    %s311 = sphi 0, %s310
    %s325 = sphi 0, %s311
    %s329 = sphi 0, %s329
    %s331 = sphi 0, %s329
    %s332 = sphi 0, %s331
    %s346 = sphi 0, %s332
    %s350 = sphi 0, %s350
    %s352 = sphi 0, %s350
    %s353 = sphi 0, %s352
    %s367 = sphi 0, %s353
    %s373 = sphi 0, %s375
    %s376 = sphi 0, %s373
    %s377 = sphi 0, %s376
    %s393 = sphi 0, %s377
  $region4: #{model_forward.4} parent=0 // loop_header_branch
    %25 = sbr.rel (%p23) target = $region8
  $region5: #{model_forward.4} parent=0 // loop_body
    %s27 = ssub.s32 %s22, 1
    %s28 = ssub.s32 %s22, 2
    %s29 = sadd.s32 %s22, 1
    %s30 = ssub.s32 %s22, %s29
    %p31 = scmp.eq.s32.totalorder %s30, 0
    %s33 = sadd.s32 %s32, 1
    %s34 = scalar_select %p31, %s32, %s33
    %p37 = pneg %p31
    %p38 = scmp.eq.s32.totalorder %s22, 1
    %p39 = por %p37, %p38
    %p40 = scmp.ne.s32.totalorder %s32, %s35
    %p41 = scmp.eq.s32.totalorder %s22, 0
    %p42 = por %p40, %p41
    %p43 = scmp.ne.s32.totalorder %s32, %s35
    %p44 = scmp.eq.s32.totalorder %s27, 1
    %p45 = por %p43, %p44
    %p46 = scmp.ne.s32.totalorder %s35, %s36
    %p47 = scmp.eq.s32.totalorder %s27, 0
    %p48 = por %p46, %p47
    %p49 = scmp.ne.s32.totalorder %s35, %s36
    %p50 = scmp.eq.s32.totalorder %s28, 1
    %p51 = por %p49, %p50
    %p53 = scmp.ne.s32.totalorder %s36, %s52
    %p54 = scmp.eq.s32.totalorder %s28, 0
    %p55 = por %p53, %p54
    %s57 = sadd.s32 %s56, 1
    %p60 = scmp.eq.s32.totalorder %s22, 1
    %p61 = scmp.ne.s32.totalorder %s56, %s58
    %p62 = scmp.eq.s32.totalorder %s22, 0
    %p63 = por %p61, %p62
    %p64 = scmp.ne.s32.totalorder %s56, %s58
    %p65 = scmp.eq.s32.totalorder %s27, 1
    %p66 = por %p64, %p65
    %p67 = scmp.ne.s32.totalorder %s58, %s59
    %p68 = scmp.eq.s32.totalorder %s27, 0
    %p69 = por %p67, %p68
    %p70 = scmp.ne.s32.totalorder %s58, %s59
    %p71 = scmp.eq.s32.totalorder %s28, 1
    %p72 = por %p70, %p71
    %p74 = scmp.ne.s32.totalorder %s59, %s73
    %p75 = scmp.eq.s32.totalorder %s28, 0
    %p76 = por %p74, %p75
    %s78 = sadd.s32 %s77, 1
    %p81 = scmp.eq.s32.totalorder %s22, 1
    %p82 = scmp.ne.s32.totalorder %s77, %s79
    %p83 = scmp.eq.s32.totalorder %s22, 0
    %p84 = por %p82, %p83
    %p85 = scmp.ne.s32.totalorder %s77, %s79
    %p86 = scmp.eq.s32.totalorder %s27, 1
    %p87 = por %p85, %p86
    %p88 = scmp.ne.s32.totalorder %s79, %s80
    %p89 = scmp.eq.s32.totalorder %s27, 0
    %p90 = por %p88, %p89
    %p91 = scmp.ne.s32.totalorder %s79, %s80
    %p92 = scmp.eq.s32.totalorder %s28, 1
    %p93 = por %p91, %p92
    %p95 = scmp.ne.s32.totalorder %s80, %s94
    %p96 = scmp.eq.s32.totalorder %s28, 0
    %p97 = por %p95, %p96
    %s99 = sadd.s32 %s98, 1
    %p102 = scmp.eq.s32.totalorder %s22, 1
    %p103 = scmp.ne.s32.totalorder %s98, %s100
    %p104 = scmp.eq.s32.totalorder %s22, 0
    %p105 = por %p103, %p104
    %p106 = scmp.ne.s32.totalorder %s98, %s100
    %p107 = scmp.eq.s32.totalorder %s27, 1
    %p108 = por %p106, %p107
    %p109 = scmp.ne.s32.totalorder %s100, %s101
    %p110 = scmp.eq.s32.totalorder %s27, 0
    %p111 = por %p109, %p110
    %p112 = scmp.ne.s32.totalorder %s100, %s101
    %p113 = scmp.eq.s32.totalorder %s28, 1
    %p114 = por %p112, %p113
    %p116 = scmp.ne.s32.totalorder %s101, %s115
    %p117 = scmp.eq.s32.totalorder %s28, 0
    %p118 = por %p116, %p117
    %s120 = sadd.s32 %s119, 1
    %p123 = scmp.eq.s32.totalorder %s22, 1
    %p124 = scmp.ne.s32.totalorder %s119, %s121
    %p125 = scmp.eq.s32.totalorder %s22, 0
    %p126 = por %p124, %p125
    %p127 = scmp.ne.s32.totalorder %s119, %s121
    %p128 = scmp.eq.s32.totalorder %s27, 1
    %p129 = por %p127, %p128
    %p130 = scmp.ne.s32.totalorder %s121, %s122
    %p131 = scmp.eq.s32.totalorder %s27, 0
    %p132 = por %p130, %p131
    %p133 = scmp.ne.s32.totalorder %s121, %s122
    %p134 = scmp.eq.s32.totalorder %s28, 1
    %p135 = por %p133, %p134
    %p137 = scmp.ne.s32.totalorder %s122, %s136
    %p138 = scmp.eq.s32.totalorder %s28, 0
    %p139 = por %p137, %p138
    %s141 = sadd.s32 %s140, 1
    %p144 = scmp.eq.s32.totalorder %s22, 1
    %p145 = scmp.ne.s32.totalorder %s140, %s142
    %p146 = scmp.eq.s32.totalorder %s22, 0
    %p147 = por %p145, %p146
    %p148 = scmp.ne.s32.totalorder %s140, %s142
    %p149 = scmp.eq.s32.totalorder %s27, 1
    %p150 = por %p148, %p149
    %p151 = scmp.ne.s32.totalorder %s142, %s143
    %p152 = scmp.eq.s32.totalorder %s27, 0
    %p153 = por %p151, %p152
    %p154 = scmp.ne.s32.totalorder %s142, %s143
    %p155 = scmp.eq.s32.totalorder %s28, 1
    %p156 = por %p154, %p155
    %p158 = scmp.ne.s32.totalorder %s143, %s157
    %p159 = scmp.eq.s32.totalorder %s28, 0
    %p160 = por %p158, %p159
    %s162 = sadd.s32 %s161, 1
    %p165 = scmp.eq.s32.totalorder %s22, 1
    %p166 = scmp.ne.s32.totalorder %s161, %s163
    %p167 = scmp.eq.s32.totalorder %s22, 0
    %p168 = por %p166, %p167
    %p169 = scmp.ne.s32.totalorder %s161, %s163
    %p170 = scmp.eq.s32.totalorder %s27, 1
    %p171 = por %p169, %p170
    %p172 = scmp.ne.s32.totalorder %s163, %s164
    %p173 = scmp.eq.s32.totalorder %s27, 0
    %p174 = por %p172, %p173
    %p175 = scmp.ne.s32.totalorder %s163, %s164
    %p176 = scmp.eq.s32.totalorder %s28, 1
    %p177 = por %p175, %p176
    %p179 = scmp.ne.s32.totalorder %s164, %s178
    %p180 = scmp.eq.s32.totalorder %s28, 0
    %p181 = por %p179, %p180
    %s183 = sadd.s32 %s182, 1
    %p186 = scmp.eq.s32.totalorder %s22, 1
    %p187 = scmp.ne.s32.totalorder %s182, %s184
    %p188 = scmp.eq.s32.totalorder %s22, 0
    %p189 = por %p187, %p188
    %p190 = scmp.ne.s32.totalorder %s182, %s184
    %p191 = scmp.eq.s32.totalorder %s27, 1
    %p192 = por %p190, %p191
    %p193 = scmp.ne.s32.totalorder %s184, %s185
    %p194 = scmp.eq.s32.totalorder %s27, 0
    %p195 = por %p193, %p194
    %p196 = scmp.ne.s32.totalorder %s184, %s185
    %p197 = scmp.eq.s32.totalorder %s28, 1
    %p198 = por %p196, %p197
    %p200 = scmp.ne.s32.totalorder %s185, %s199
    %p201 = scmp.eq.s32.totalorder %s28, 0
    %p202 = por %p200, %p201
    %s204 = sadd.s32 %s203, 1
    %p207 = scmp.eq.s32.totalorder %s22, 1
    %p208 = scmp.ne.s32.totalorder %s203, %s205
    %p209 = scmp.eq.s32.totalorder %s22, 0
    %p210 = por %p208, %p209
    %p211 = scmp.ne.s32.totalorder %s203, %s205
    %p212 = scmp.eq.s32.totalorder %s27, 1
    %p213 = por %p211, %p212
    %p214 = scmp.ne.s32.totalorder %s205, %s206
    %p215 = scmp.eq.s32.totalorder %s27, 0
    %p216 = por %p214, %p215
    %p217 = scmp.ne.s32.totalorder %s205, %s206
    %p218 = scmp.eq.s32.totalorder %s28, 1
    %p219 = por %p217, %p218
    %p221 = scmp.ne.s32.totalorder %s206, %s220
    %p222 = scmp.eq.s32.totalorder %s28, 0
    %p223 = por %p221, %p222
    %s225 = sadd.s32 %s224, 1
    %p228 = scmp.eq.s32.totalorder %s22, 1
    %p229 = scmp.ne.s32.totalorder %s224, %s226
    %p230 = scmp.eq.s32.totalorder %s22, 0
    %p231 = por %p229, %p230
    %p232 = scmp.ne.s32.totalorder %s224, %s226
    %p233 = scmp.eq.s32.totalorder %s27, 1
    %p234 = por %p232, %p233
    %p235 = scmp.ne.s32.totalorder %s226, %s227
    %p236 = scmp.eq.s32.totalorder %s27, 0
    %p237 = por %p235, %p236
    %p238 = scmp.ne.s32.totalorder %s226, %s227
    %p239 = scmp.eq.s32.totalorder %s28, 1
    %p240 = por %p238, %p239
    %p242 = scmp.ne.s32.totalorder %s227, %s241
    %p243 = scmp.eq.s32.totalorder %s28, 0
    %p244 = por %p242, %p243
    %s246 = sadd.s32 %s245, 1
    %p249 = scmp.eq.s32.totalorder %s22, 1
    %p250 = scmp.ne.s32.totalorder %s245, %s247
    %p251 = scmp.eq.s32.totalorder %s22, 0
    %p252 = por %p250, %p251
    %p253 = scmp.ne.s32.totalorder %s245, %s247
    %p254 = scmp.eq.s32.totalorder %s27, 1
    %p255 = por %p253, %p254
    %p256 = scmp.ne.s32.totalorder %s247, %s248
    %p257 = scmp.eq.s32.totalorder %s27, 0
    %p258 = por %p256, %p257
    %p259 = scmp.ne.s32.totalorder %s247, %s248
    %p260 = scmp.eq.s32.totalorder %s28, 1
    %p261 = por %p259, %p260
    %p263 = scmp.ne.s32.totalorder %s248, %s262
    %p264 = scmp.eq.s32.totalorder %s28, 0
    %p265 = por %p263, %p264
    %s267 = sadd.s32 %s266, 1
    %p270 = scmp.eq.s32.totalorder %s22, 1
    %p271 = scmp.ne.s32.totalorder %s266, %s268
    %p272 = scmp.eq.s32.totalorder %s22, 0
    %p273 = por %p271, %p272
    %p274 = scmp.ne.s32.totalorder %s266, %s268
    %p275 = scmp.eq.s32.totalorder %s27, 1
    %p276 = por %p274, %p275
    %p277 = scmp.ne.s32.totalorder %s268, %s269
    %p278 = scmp.eq.s32.totalorder %s27, 0
    %p279 = por %p277, %p278
    %p280 = scmp.ne.s32.totalorder %s268, %s269
    %p281 = scmp.eq.s32.totalorder %s28, 1
    %p282 = por %p280, %p281
    %p284 = scmp.ne.s32.totalorder %s269, %s283
    %p285 = scmp.eq.s32.totalorder %s28, 0
    %p286 = por %p284, %p285
    %s288 = sadd.s32 %s287, 1
    %p291 = scmp.eq.s32.totalorder %s22, 1
    %p292 = scmp.ne.s32.totalorder %s287, %s289
    %p293 = scmp.eq.s32.totalorder %s22, 0
    %p294 = por %p292, %p293
    %p295 = scmp.ne.s32.totalorder %s287, %s289
    %p296 = scmp.eq.s32.totalorder %s27, 1
    %p297 = por %p295, %p296
    %p298 = scmp.ne.s32.totalorder %s289, %s290
    %p299 = scmp.eq.s32.totalorder %s27, 0
    %p300 = por %p298, %p299
    %p301 = scmp.ne.s32.totalorder %s289, %s290
    %p302 = scmp.eq.s32.totalorder %s28, 1
    %p303 = por %p301, %p302
    %p305 = scmp.ne.s32.totalorder %s290, %s304
    %p306 = scmp.eq.s32.totalorder %s28, 0
    %p307 = por %p305, %p306
    %s309 = sadd.s32 %s308, 1
    %p312 = scmp.eq.s32.totalorder %s22, 1
    %p313 = scmp.ne.s32.totalorder %s308, %s310
    %p314 = scmp.eq.s32.totalorder %s22, 0
    %p315 = por %p313, %p314
    %p316 = scmp.ne.s32.totalorder %s308, %s310
    %p317 = scmp.eq.s32.totalorder %s27, 1
    %p318 = por %p316, %p317
    %p319 = scmp.ne.s32.totalorder %s310, %s311
    %p320 = scmp.eq.s32.totalorder %s27, 0
    %p321 = por %p319, %p320
    %p322 = scmp.ne.s32.totalorder %s310, %s311
    %p323 = scmp.eq.s32.totalorder %s28, 1
    %p324 = por %p322, %p323
    %p326 = scmp.ne.s32.totalorder %s311, %s325
    %p327 = scmp.eq.s32.totalorder %s28, 0
    %p328 = por %p326, %p327
    %s330 = sadd.s32 %s329, 1
    %p333 = scmp.eq.s32.totalorder %s22, 1
    %p334 = scmp.ne.s32.totalorder %s329, %s331
    %p335 = scmp.eq.s32.totalorder %s22, 0
    %p336 = por %p334, %p335
    %p337 = scmp.ne.s32.totalorder %s329, %s331
    %p338 = scmp.eq.s32.totalorder %s27, 1
    %p339 = por %p337, %p338
    %p340 = scmp.ne.s32.totalorder %s331, %s332
    %p341 = scmp.eq.s32.totalorder %s27, 0
    %p342 = por %p340, %p341
    %p343 = scmp.ne.s32.totalorder %s331, %s332
    %p344 = scmp.eq.s32.totalorder %s28, 1
    %p345 = por %p343, %p344
    %p347 = scmp.ne.s32.totalorder %s332, %s346
    %p348 = scmp.eq.s32.totalorder %s28, 0
    %p349 = por %p347, %p348
    %s351 = sadd.s32 %s350, 1
    %p354 = scmp.eq.s32.totalorder %s22, 1
    %p355 = scmp.ne.s32.totalorder %s350, %s352
    %p356 = scmp.eq.s32.totalorder %s22, 0
    %p357 = por %p355, %p356
    %p358 = scmp.ne.s32.totalorder %s350, %s352
    %p359 = scmp.eq.s32.totalorder %s27, 1
    %p360 = por %p358, %p359
    %p361 = scmp.ne.s32.totalorder %s352, %s353
    %p362 = scmp.eq.s32.totalorder %s27, 0
    %p363 = por %p361, %p362
    %p364 = scmp.ne.s32.totalorder %s352, %s353
    %p365 = scmp.eq.s32.totalorder %s28, 1
    %p366 = por %p364, %p365
    %p368 = scmp.ne.s32.totalorder %s353, %s367
    %p369 = scmp.eq.s32.totalorder %s28, 0
    %p370 = por %p368, %p369
    %s371 = ssub.s32 %s22, %s29
    %p372 = scmp.eq.s32.totalorder %s371, 0
    %s374 = sadd.s32 %s373, 1
    %s375 = scalar_select %p372, %s373, %s374
    %p378 = pneg %p372
    %p379 = scmp.eq.s32.totalorder %s22, 1
    %p380 = por %p378, %p379
    %p381 = scmp.ne.s32.totalorder %s373, %s376
    %p382 = scmp.eq.s32.totalorder %s22, 0
    %p383 = por %p381, %p382
    %p384 = scmp.ne.s32.totalorder %s373, %s376
    %p385 = scmp.eq.s32.totalorder %s27, 1
    %p386 = por %p384, %p385
    %p387 = scmp.ne.s32.totalorder %s376, %s377
    %p388 = scmp.eq.s32.totalorder %s27, 0
    %p389 = por %p387, %p388
    %p390 = scmp.ne.s32.totalorder %s376, %s377
    %p391 = scmp.eq.s32.totalorder %s28, 1
    %p392 = por %p390, %p391
    %p394 = scmp.ne.s32.totalorder %s377, %s393
    %p395 = scmp.eq.s32.totalorder %s28, 0
    %p396 = por %p394, %p395
    %p397 = scmp.le.s32.totalorder 1, %s22
    %p398 = scmp.lt.s32.totalorder %s22, 3
    %p399 = pnand %p397, %p398
    %p400 = pneg %p399
    // Predicated region
    $region9: #{model_forward.4} parent=5 // pred_check
      _
    $region10: #{model_forward.4} parent=5 // pred_check_branch
      %402 = sbr.rel (%p399) target = $region12
    $region11: #{model_forward.4} parent=5 // pred_region
      %s403 = ssub.s32 %s22, 1
      // Predicated region
      $region13: #{model_forward.4} parent=11 // pred_check
        %p404 = pneg %p69
      $region14: #{model_forward.4} parent=11 // pred_check_branch
        %406 = sbr.rel (%p404) target = $region16
      $region15: #{model_forward.4} parent=11 // pred_region
        _
      $region16: #{model_forward.4} parent=11 // pred_fallthru
        _
      // Predicated region
      $region17: #{model_forward.4} parent=11 // pred_check
        %p407 = pneg %p90
      $region18: #{model_forward.4} parent=11 // pred_check_branch
        %409 = sbr.rel (%p407) target = $region20
      $region19: #{model_forward.4} parent=11 // pred_region
        _
      $region20: #{model_forward.4} parent=11 // pred_fallthru
        _
      // Predicated region
      $region21: #{model_forward.4} parent=11 // pred_check
        %p410 = pneg %p111
      $region22: #{model_forward.4} parent=11 // pred_check_branch
        %412 = sbr.rel (%p410) target = $region24
      $region23: #{model_forward.4} parent=11 // pred_region
        _
      $region24: #{model_forward.4} parent=11 // pred_fallthru
        _
      // Predicated region
      $region25: #{model_forward.4} parent=11 // pred_check
        %p413 = pneg %p132
      $region26: #{model_forward.4} parent=11 // pred_check_branch
        %415 = sbr.rel (%p413) target = $region28
      $region27: #{model_forward.4} parent=11 // pred_region
        _
      $region28: #{model_forward.4} parent=11 // pred_fallthru
        _
      // Predicated region
      $region29: #{model_forward.4} parent=11 // pred_check
        %p416 = pneg %p153
      $region30: #{model_forward.4} parent=11 // pred_check_branch
        %418 = sbr.rel (%p416) target = $region32
      $region31: #{model_forward.4} parent=11 // pred_region
        _
      $region32: #{model_forward.4} parent=11 // pred_fallthru
        _
      // Predicated region
      $region33: #{model_forward.4} parent=11 // pred_check
        %p419 = pneg %p174
      $region34: #{model_forward.4} parent=11 // pred_check_branch
        %421 = sbr.rel (%p419) target = $region36
      $region35: #{model_forward.4} parent=11 // pred_region
        _
      $region36: #{model_forward.4} parent=11 // pred_fallthru
        _
      // Predicated region
      $region37: #{model_forward.4} parent=11 // pred_check
        %p422 = pneg %p195
      $region38: #{model_forward.4} parent=11 // pred_check_branch
        %424 = sbr.rel (%p422) target = $region40
      $region39: #{model_forward.4} parent=11 // pred_region
        _
      $region40: #{model_forward.4} parent=11 // pred_fallthru
        _
      // Predicated region
      $region41: #{model_forward.4} parent=11 // pred_check
        %p425 = pneg %p216
      $region42: #{model_forward.4} parent=11 // pred_check_branch
        %427 = sbr.rel (%p425) target = $region44
      $region43: #{model_forward.4} parent=11 // pred_region
        _
      $region44: #{model_forward.4} parent=11 // pred_fallthru
        _
      // Predicated region
      $region45: #{model_forward.4} parent=11 // pred_check
        %p428 = pneg %p237
      $region46: #{model_forward.4} parent=11 // pred_check_branch
        %430 = sbr.rel (%p428) target = $region48
      $region47: #{model_forward.4} parent=11 // pred_region
        _
      $region48: #{model_forward.4} parent=11 // pred_fallthru
        _
      // Predicated region
      $region49: #{model_forward.4} parent=11 // pred_check
        %p431 = pneg %p258
      $region50: #{model_forward.4} parent=11 // pred_check_branch
        %433 = sbr.rel (%p431) target = $region52
      $region51: #{model_forward.4} parent=11 // pred_region
        _
      $region52: #{model_forward.4} parent=11 // pred_fallthru
        _
      // Predicated region
      $region53: #{model_forward.4} parent=11 // pred_check
        %p434 = pneg %p279
      $region54: #{model_forward.4} parent=11 // pred_check_branch
        %436 = sbr.rel (%p434) target = $region56
      $region55: #{model_forward.4} parent=11 // pred_region
        _
      $region56: #{model_forward.4} parent=11 // pred_fallthru
        _
      // Predicated region
      $region57: #{model_forward.4} parent=11 // pred_check
        %p437 = pneg %p300
      $region58: #{model_forward.4} parent=11 // pred_check_branch
        %439 = sbr.rel (%p437) target = $region60
      $region59: #{model_forward.4} parent=11 // pred_region
        _
      $region60: #{model_forward.4} parent=11 // pred_fallthru
        _
      // Predicated region
      $region61: #{model_forward.4} parent=11 // pred_check
        %p440 = pneg %p321
      $region62: #{model_forward.4} parent=11 // pred_check_branch
        %442 = sbr.rel (%p440) target = $region64
      $region63: #{model_forward.4} parent=11 // pred_region
        _
      $region64: #{model_forward.4} parent=11 // pred_fallthru
        _
      // Predicated region
      $region65: #{model_forward.4} parent=11 // pred_check
        %p443 = pneg %p342
      $region66: #{model_forward.4} parent=11 // pred_check_branch
        %445 = sbr.rel (%p443) target = $region68
      $region67: #{model_forward.4} parent=11 // pred_region
        _
      $region68: #{model_forward.4} parent=11 // pred_fallthru
        _
      // Predicated region
      $region69: #{model_forward.4} parent=11 // pred_check
        %p446 = pneg %p363
      $region70: #{model_forward.4} parent=11 // pred_check_branch
        %448 = sbr.rel (%p446) target = $region72
      $region71: #{model_forward.4} parent=11 // pred_region
        _
      $region72: #{model_forward.4} parent=11 // pred_fallthru
        _
    $region12: #{model_forward.4} parent=5 // pred_fallthru
      _
    %p449 = scmp.lt.s32.totalorder %s22, 2
    // Predicated region
    $region73: #{model_forward.4} parent=5 // pred_check
      %p450 = pneg %p449
    $region74: #{model_forward.4} parent=5 // pred_check_branch
      %452 = sbr.rel (%p450) target = $region76
    $region75: #{model_forward.4} parent=5 // pred_region
      // Predicated region
      $region77: #{model_forward.4} parent=75 // pred_check
        %p453 = pneg %p42
      $region78: #{model_forward.4} parent=75 // pred_check_branch
        %455 = sbr.rel (%p453) target = $region80
      $region79: #{model_forward.4} parent=75 // pred_region
        %p456 = scmp.lt.s32.totalorder %s22, 1
        %s457 = scalar_select %p456, %s22, 1
        %s458 = smul.addr %s457, 3
        %s459 = smul.addr %s458, 8
        %s460 = scalar_lea.vmem %s0, %s459
      $region80: #{model_forward.4} parent=75 // pred_fallthru
        _
    $region76: #{model_forward.4} parent=5 // pred_fallthru
      _
    %p461 = scmp.le.s32.totalorder 1, %s22
    %p462 = scmp.lt.s32.totalorder %s22, 3
    %p463 = pnand %p461, %p462
    %p464 = pneg %p463
    // Predicated region
    $region81: #{model_forward.4} parent=5 // pred_check
      _
    $region82: #{model_forward.4} parent=5 // pred_check_branch
      %466 = sbr.rel (%p463) target = $region84
    $region83: #{model_forward.4} parent=5 // pred_region
      %s467 = ssub.s32 %s22, 1
      %p468 = scmp.lt.s32.totalorder %s27, 1
      %s469 = scalar_select %p468, %s27, 1
      %s470 = smul.addr %s469, 3
      %s471 = smul.addr %s470, 8
      %s472 = scalar_lea.vmem %s0, %s471
      %p473 = pneg %p48
      %p474 = pneg %p45
      %p475 = pneg %p69
      %p476 = pneg %p66
      %p477 = pneg %p90
      %p478 = pneg %p87
      %p479 = pneg %p111
      %p480 = pneg %p108
      %p481 = pneg %p132
      %p482 = pneg %p129
      %p483 = pneg %p153
      %p484 = pneg %p150
      %p485 = pneg %p174
      %p486 = pneg %p171
      %p487 = pneg %p195
      %p488 = pneg %p192
      %p489 = pneg %p216
      %p490 = pneg %p213
      %p491 = pneg %p237
      %p492 = pneg %p234
      %p493 = pneg %p258
      %p494 = pneg %p255
      %p495 = pneg %p279
      %p496 = pneg %p276
      %p497 = pneg %p300
      %p498 = pneg %p297
      %p499 = pneg %p321
      %p500 = pneg %p318
      %p501 = pneg %p342
      %p502 = pneg %p339
      %p503 = pneg %p363
      %p504 = pneg %p360
      %p505 = pneg %p389
      %p506 = pneg %p386
      %p507 = scmp.lt.s32.totalorder %s27, 1
      %s508 = scalar_select %p507, %s27, 1
      %s509 = smul.addr %s508, 3
      %s510 = smul.addr %s509, 8
      %s511 = scalar_lea.vmem %s16, %s510
      %p512 = scmp.lt.s32.totalorder %s27, 1
      %s513 = scalar_select %p512, %s27, 1
      %s514 = smul.addr %s513, 3
      %s515 = smul.addr %s514, 8
      %s516 = scalar_lea.vmem %s0, %s515
      %p517 = scmp.lt.s32.totalorder %s27, 1
      %s518 = scalar_select %p517, %s27, 1
      %s519 = smul.addr %s518, 3
      %s520 = smul.addr %s519, 8
      %s521 = scalar_lea.vmem %s16, %s520
      %v523 = vld [vmem:[%s516] sm:$0xff]
      %v524 = vld [vmem:[%s516 + $0x8] sm:$0xff]
      %v525 = vld [vmem:[%s516 + $0x10] sm:$0x3]
      %v526 = vld [vmem:[%s1] sm:$0xff]
      %v527 = vld [vmem:[%s1 + $0x8] sm:$0xff]
      %v528 = vld [vmem:[%s1 + $0x10] sm:$0x3]
      %v529 = vld [vmem:[%s2] sm:$0xff]
      %v530 = vld [vmem:[%s2 + $0x8] sm:$0xff]
      %v531 = vld [vmem:[%s2 + $0x10] sm:$0x3]
      %v532 = vld [vmem:[%s3] sm:$0xff]
      %v533 = vld [vmem:[%s3 + $0x8] sm:$0xff]
      %v534 = vld [vmem:[%s3 + $0x10] sm:$0xff]
      %v535 = vld [vmem:[%s3 + $0x18] sm:$0xff]
      %v536 = vld [vmem:[%s4] sm:$0xff]
      %v537 = vld [vmem:[%s4 + $0x8] sm:$0xff]
      %v538 = vld [vmem:[%s4 + $0x10] sm:$0xff]
      %v539 = vld [vmem:[%s4 + $0x18] sm:$0xff]
      %v540 = vld [vmem:[%s5] sm:$0x1]
      %v541 = vld [vmem:[%s6] sm:$0xff]
      %v542 = vld [vmem:[%s6 + $0x8] sm:$0xff]
      %v543 = vld [vmem:[%s6 + $0x10] sm:$0xff]
      %v544 = vld [vmem:[%s6 + $0x18] sm:$0xff]
      %v545 = vld [vmem:[%s7] sm:$0x1]
      %v546 = vld [vmem:[%s8] sm:$0x1]
      %v547 = vld [vmem:[%s9] sm:$0x1]
      %v548 = vld [vmem:[%s10] sm:$0x1]
      %v549 = vld [vmem:[%s11] sm:$0x1]
      %v550 = vld [vmem:[%s12] sm:$0xff]
      %v551 = vld [vmem:[%s12 + $0x8] sm:$0xff]
      %v552 = vld [vmem:[%s12 + $0x10] sm:$0xff]
      %v553 = vld [vmem:[%s12 + $0x18] sm:$0xff]
      %v554 = vld [vmem:[%s13] sm:$0x1]
      %v555 = vld [vmem:[%s14] sm:$0xff]
      %v556 = vld [vmem:[%s14 + $0x8] sm:$0xff]
      %v557 = vld [vmem:[%s14 + $0x10] sm:$0xff]
      %v558 = vld [vmem:[%s14 + $0x18] sm:$0xff]
      %v559 = vld [vmem:[%s14 + $0x20] sm:$0xff]
      %v560 = vld [vmem:[%s14 + $0x28] sm:$0xff]
      %v561 = vld [vmem:[%s14 + $0x30] sm:$0xff]
      %v562 = vld [vmem:[%s14 + $0x38] sm:$0xff]
      %v563 = vld [vmem:[%s14 + $0x40] sm:$0xff]
      %v564 = vld [vmem:[%s14 + $0x48] sm:$0xff]
      %v565 = vld [vmem:[%s14 + $0x50] sm:$0xff]
      %v566 = vld [vmem:[%s14 + $0x58] sm:$0xff]
      %v567 = vld [vmem:[%s14 + $0x60] sm:$0xff]
      %v568 = vld [vmem:[%s14 + $0x68] sm:$0xff]
      %v569 = vld [vmem:[%s14 + $0x70] sm:$0xff]
      %v570 = vld [vmem:[%s14 + $0x78] sm:$0xff]
      %v571 = vld [vmem:[%s15] sm:$0x1]
      %vm572 = vcmask 261120
      %v573 = vsel %vm572, %v523, 0.0
      %574 = vadd.xlane.f32.xlu0 %v573
      %v575 = vpop.xlane.xlu0 %574
      %v576 = vsel %vm572, %v524, 0.0
      %577 = vadd.xlane.f32.xlu0 %v576
      %v578 = vpop.xlane.xlu0 %577
      %vm579 = vcmask 254976
      %v580 = vsel %vm579, %v525, 0.0
      %581 = vadd.xlane.f32.xlu0 %v580
      %v582 = vpop.xlane.xlu0 %581
      %v583 = vrcp.pop 32.0
      %v584 = vmul.f32 %v575, %v583
      %v585 = vmul.f32 %v578, %v583
      %v586 = vmul.f32 %v582, %v583
      %v587 = vsub.f32 %v523, %v584
      %v588 = vsub.f32 %v524, %v585
      %v589 = vsub.f32 %v525, %v586
      %v590 = vmul.f32 %v587, %v587
      %v591 = vmul.f32 %v588, %v588
      %v592 = vmul.f32 %v589, %v589
      %v593 = vsel %vm572, %v590, 0.0
      %594 = vadd.xlane.f32.xlu0 %v593
      %v595 = vpop.xlane.xlu0 %594
      %v596 = vsel %vm572, %v591, 0.0
      %597 = vadd.xlane.f32.xlu0 %v596
      %v598 = vpop.xlane.xlu0 %597
      %v599 = vsel %vm579, %v592, 0.0
      %600 = vadd.xlane.f32.xlu0 %v599
      %v601 = vpop.xlane.xlu0 %600
      %v602 = vmul.f32 %v595, %v583
      %v603 = vmul.f32 %v598, %v583
      %v604 = vmul.f32 %v601, %v583
      %v605 = vadd.f32 %v602, 1e-05
      %v606 = vadd.f32 %v603, 1e-05
      %v607 = vadd.f32 %v604, 1e-05
      %v608 = vrsqrt.pop %v605
      %v609 = vrsqrt.pop %v606
      %v610 = vrsqrt.pop %v607
      %v611 = vmul.f32 %v587, %v608
      %v612 = vmul.f32 %v588, %v609
      %v613 = vmul.f32 %v589, %v610
      %v615 = vlaneseq
      %v616 = vshrl.u32 %v615, 7
      %v617 = vsub.s32 0, %v616
      %v618 = vrot.slane %v546, %v617
      %v620 = vmul.f32 %v611, %v618
      %v621 = vmul.f32 %v612, %v618
      %v622 = vmul.f32 %v613, %v618
      %v624 = vlaneseq
      %v625 = vshrl.u32 %v624, 7
      %v626 = vsub.s32 0, %v625
      %v627 = vrot.slane %v547, %v626
      %v629 = vadd.f32 %v620, %v627
      %v630 = vadd.f32 %v621, %v627
      %v631 = vadd.f32 %v622, %v627
      %v632 = vpack.c.bf16 %v630, %v629
      %v633 = vpack.c.bf16 %v631, %v631
      %v634 = vpack.c.bf16 %v537, %v536
      %v635 = vpack.c.bf16 %v539, %v538
      %v637 = vlaneseq
      %v638 = vshrl.u32 %v637, 7
      %v639 = vsub.s32 0, %v638
      %v640 = vrot.slane %v540, %v639
      %v643 = vsel %vm572, %v632, 0
      %v646 = vsel %vm572, %v633, 0
      %648 = vmatprep.subr.bf16.mxu0 0
      %649 = vmatpush1.bf16.msra.mxu0 0
      %650 = vmatprep.subr.bf16.mxu0 0
      %651 = vmatpush1.bf16.msra.mxu0 0
      %652 = vmatprep.subr.bf16.mxu0 0
      %653 = vmatpush1.bf16.msra.mxu0 0
      %654 = vmatprep.subr.bf16.mxu0 0
      %655 = vmatpush1.bf16.msra.mxu0 0
      %656 = vmatprep.subr.bf16.mxu0 0
      %657 = vmatpush1.bf16.msra.mxu0 0
      %658 = vmatprep.subr.bf16.mxu0 0
      %659 = vmatpush1.bf16.msra.mxu0 0
      %660 = vmatprep.subr.bf16.mxu0 0
      %661 = vmatpush1.bf16.msra.mxu0 %v635
      %662 = vmatprep.subr.bf16.mxu0 0
      %663 = vmatpush1.bf16.msra.mxu0 %v634
      %664 = vmatprep.subr.bf16.mxu0 0
      %665 = vmatpush2.bf16.msra.mxu0 0
      %666 = vmatprep.subr.bf16.mxu0 0
      %667 = vmatpush2.bf16.msra.mxu0 0
      %668 = vmatprep.subr.bf16.mxu0 0
      %669 = vmatpush2.bf16.msra.mxu0 0
      %670 = vmatprep.subr.bf16.mxu0 0
      %671 = vmatpush2.bf16.msra.mxu0 0
      %672 = vmatprep.subr.bf16.mxu0 0
      %673 = vmatpush2.bf16.msra.mxu0 0
      %674 = vmatprep.subr.bf16.mxu0 0
      %675 = vmatpush2.bf16.msra.mxu0 0
      %676 = vmatprep.subr.bf16.mxu0 0
      %677 = vmatpush2.bf16.msra.mxu0 0
      %678 = vmatprep.subr.bf16.mxu0 0
      %679 = vmatpush2.bf16.msra.mxu0 0
      %680 = vmatprep.mubr.bf16.mxu0 0
      %681 = vmatmul.mubr.bf16.gmra.mxu0 %v643
      %v682 = vpop.f32.mrf.mxu0
      %v683 = vadd.f32 %v640, %v682
      %v684 = vpop.f32.mrf.mxu0
      %v685 = vpop.f32.mrf.mxu0
      %v686 = vadd.f32 %v640, %v685
      %v687 = vpop.f32.mrf.mxu0
      %688 = vmatprep.mubr.bf16.mxu0 0
      %689 = vmatmul.mubr.bf16.gmra.mxu0 %v646
      %v690 = vpop.f32.mrf.mxu0
      %v691 = vadd.f32 %v640, %v690
      %v692 = vpop.f32.mrf.mxu0
      %v693 = vpop.f32.mrf.mxu0
      %v694 = vpop.f32.mrf.mxu0
      %695 = vdwg.mxu0
      %v696 = vmax.f32 %v683, 0.0
      %v697 = vmax.f32 %v686, 0.0
      %v698 = vmax.f32 %v691, 0.0
      %700 = vset.pattern.permute.xlu0 0
      %701 = vperm.xlu0 %700, %v526
      %v702 = vpop.permute.xlu0 %701
      %705 = vset.pattern.permute.xlu0 0
      %706 = vperm.xlu0 %705, %v527
      %v707 = vpop.permute.xlu0 %706
      %710 = vset.pattern.permute.xlu0 0
      %711 = vperm.xlu0 %710, %v528
      %v712 = vpop.permute.xlu0 %711
      %v714 = vmul.f32 %v696, %v702
      %v715 = vmul.f32 %v697, %v707
      %v716 = vmul.f32 %v698, %v712
      %718 = vset.pattern.permute.xlu0 0
      %719 = vperm.xlu0 %718, %v529
      %v720 = vpop.permute.xlu0 %719
      %723 = vset.pattern.permute.xlu0 0
      %724 = vperm.xlu0 %723, %v530
      %v725 = vpop.permute.xlu0 %724
      %728 = vset.pattern.permute.xlu0 0
      %729 = vperm.xlu0 %728, %v531
      %v730 = vpop.permute.xlu0 %729
      %v732 = vmul.f32 %v696, %v720
      %v733 = vmul.f32 %v697, %v725
      %v734 = vmul.f32 %v698, %v730
      %v735 = vpack.c.bf16 %v715, %v714
      %v736 = vpack.c.bf16 %v716, %v716
      %v737 = vpack.c.bf16 %v686, %v683
      %v738 = vpack.c.bf16 %v691, %v691
      %741 = vrot.lane.b32.xlu0 %v735, 96
      %v742 = vpop.permute.xlu0 %741
      %743 = vrot.lane.b32.xlu0 %v736, 96
      %v744 = vpop.permute.xlu0 %743
      %747 = vxpose.xlu0.c.b16.start [1/8] %v742, 128
      %748 = vxpose.xlu0.c.b16.cont [2/8] %v744, 128
      %749 = vxpose.xlu0.c.b16.cont [3/8] 0, 128
      %750 = vxpose.xlu0.c.b16.cont [4/8] 0, 128
      %751 = vxpose.xlu0.c.b16.cont [5/8] 0, 128
      %752 = vxpose.xlu0.c.b16.cont [6/8] 0, 128
      %753 = vxpose.xlu0.c.b16.cont [7/8] 0, 128
      %754 = vxpose.xlu0.c.b16.end [8/8] 0, 128
      %v755 = vpop.trf.xlu0
      %v756 = vpop.trf.xlu0
      %v757 = vpop.trf.xlu0
      %v758 = vpop.trf.xlu0
      %v759 = vpop.trf.xlu0
      %v760 = vpop.trf.xlu0
      %v761 = vpop.trf.xlu0
      %v762 = vpop.trf.xlu0
      %765 = vrot.lane.b32.xlu0 %v737, 64
      %v766 = vpop.permute.xlu0 %765
      %767 = vrot.lane.b32.xlu0 %v738, 64
      %v768 = vpop.permute.xlu0 %767
      %vm770 = vcmask 146432
      %v772 = vsel %vm770, %v755, 0
      %v775 = vsel %vm770, %v756, 0
      %vm777 = vcmask 1040384
      %v779 = vsel %vm777, %v768, 0
      %781 = vmatprep.subr.bf16.mxu0 0
      %782 = vmatpush1.bf16.msra.mxu0 0
      %783 = vmatprep.subr.bf16.mxu0 0
      %784 = vmatpush1.bf16.msra.mxu0 0
      %785 = vmatprep.subr.bf16.mxu0 0
      %786 = vmatpush1.bf16.msra.mxu0 0
      %787 = vmatprep.subr.bf16.mxu0 0
      %788 = vmatpush1.bf16.msra.mxu0 0
      %789 = vmatprep.subr.bf16.mxu0 0
      %790 = vmatpush1.bf16.msra.mxu0 0
      %791 = vmatprep.subr.bf16.mxu0 0
      %792 = vmatpush1.bf16.msra.mxu0 0
      %793 = vmatprep.subr.bf16.mxu0 0
      %794 = vmatpush1.bf16.msra.mxu0 %v779
      %795 = vmatprep.subr.bf16.mxu0 0
      %796 = vmatpush1.bf16.msra.mxu0 %v766
      %797 = vmatprep.subr.bf16.mxu0 0
      %798 = vmatpush2.bf16.msra.mxu0 0
      %799 = vmatprep.subr.bf16.mxu0 0
      %800 = vmatpush2.bf16.msra.mxu0 0
      %801 = vmatprep.subr.bf16.mxu0 0
      %802 = vmatpush2.bf16.msra.mxu0 0
      %803 = vmatprep.subr.bf16.mxu0 0
      %804 = vmatpush2.bf16.msra.mxu0 0
      %805 = vmatprep.subr.bf16.mxu0 0
      %806 = vmatpush2.bf16.msra.mxu0 0
      %807 = vmatprep.subr.bf16.mxu0 0
      %808 = vmatpush2.bf16.msra.mxu0 0
      %809 = vmatprep.subr.bf16.mxu0 0
      %810 = vmatpush2.bf16.msra.mxu0 0
      %811 = vmatprep.subr.bf16.mxu0 0
      %812 = vmatpush2.bf16.msra.mxu0 0
      %813 = vmatprep.mubr.bf16.mxu0 0
      %814 = vmatmul.mubr.bf16.gmra.mxu0 %v772
      %v815 = vpop.f32.mrf.mxu0
      %v816 = vadd.f32 0.0, %v815
      %v817 = vpop.f32.mrf.mxu0
      %v818 = vpop.f32.mrf.mxu0
      %v819 = vadd.f32 0.0, %v818
      %v820 = vpop.f32.mrf.mxu0
      %821 = vmatprep.mubr.bf16.mxu0 0
      %822 = vmatmul.mubr.bf16.gmra.mxu0 %v775
      %v823 = vpop.f32.mrf.mxu0
      %v824 = vadd.f32 0.0, %v823
      %v825 = vpop.f32.mrf.mxu0
      %v826 = vpop.f32.mrf.mxu0
      %v827 = vadd.f32 0.0, %v826
      %v828 = vpop.f32.mrf.mxu0
      %829 = vdwg.mxu0
      %v830 = vmul.f32 %v816, %v532
      %v831 = vmul.f32 %v819, %v533
      %v832 = vmul.f32 %v824, %v534
      %v833 = vmul.f32 %v827, %v535
      %v834 = vpack.c.bf16 %v733, %v732
      %v835 = vpack.c.bf16 %v734, %v734
      %838 = vrot.lane.b32.xlu0 %v834, 96
      %v839 = vpop.permute.xlu0 %838
      %840 = vrot.lane.b32.xlu0 %v835, 96
      %v841 = vpop.permute.xlu0 %840
      %844 = vxpose.xlu0.c.b16.start [1/8] %v839, 128
      %845 = vxpose.xlu0.c.b16.cont [2/8] %v841, 128
      %846 = vxpose.xlu0.c.b16.cont [3/8] 0, 128
      %847 = vxpose.xlu0.c.b16.cont [4/8] 0, 128
      %848 = vxpose.xlu0.c.b16.cont [5/8] 0, 128
      %849 = vxpose.xlu0.c.b16.cont [6/8] 0, 128
      %850 = vxpose.xlu0.c.b16.cont [7/8] 0, 128
      %851 = vxpose.xlu0.c.b16.end [8/8] 0, 128
      %v852 = vpop.trf.xlu0
      %v853 = vpop.trf.xlu0
      %v854 = vpop.trf.xlu0
      %v855 = vpop.trf.xlu0
      %v856 = vpop.trf.xlu0
      %v857 = vpop.trf.xlu0
      %v858 = vpop.trf.xlu0
      %v859 = vpop.trf.xlu0
      %v861 = vsel %vm770, %v852, 0
      %v864 = vsel %vm770, %v853, 0
      %866 = vmatprep.subr.bf16.mxu0 0
      %867 = vmatpush1.bf16.msra.mxu0 0
      %868 = vmatprep.subr.bf16.mxu0 0
      %869 = vmatpush1.bf16.msra.mxu0 0
      %870 = vmatprep.subr.bf16.mxu0 0
      %871 = vmatpush1.bf16.msra.mxu0 0
      %872 = vmatprep.subr.bf16.mxu0 0
      %873 = vmatpush1.bf16.msra.mxu0 0
      %874 = vmatprep.subr.bf16.mxu0 0
      %875 = vmatpush1.bf16.msra.mxu0 0
      %876 = vmatprep.subr.bf16.mxu0 0
      %877 = vmatpush1.bf16.msra.mxu0 0
      %878 = vmatprep.subr.bf16.mxu0 0
      %879 = vmatpush1.bf16.msra.mxu0 %v779
      %880 = vmatprep.subr.bf16.mxu0 0
      %881 = vmatpush1.bf16.msra.mxu0 %v766
      %882 = vmatprep.subr.bf16.mxu0 0
      %883 = vmatpush2.bf16.msra.mxu0 0
      %884 = vmatprep.subr.bf16.mxu0 0
      %885 = vmatpush2.bf16.msra.mxu0 0
      %886 = vmatprep.subr.bf16.mxu0 0
      %887 = vmatpush2.bf16.msra.mxu0 0
      %888 = vmatprep.subr.bf16.mxu0 0
      %889 = vmatpush2.bf16.msra.mxu0 0
      %890 = vmatprep.subr.bf16.mxu0 0
      %891 = vmatpush2.bf16.msra.mxu0 0
      %892 = vmatprep.subr.bf16.mxu0 0
      %893 = vmatpush2.bf16.msra.mxu0 0
      %894 = vmatprep.subr.bf16.mxu0 0
      %895 = vmatpush2.bf16.msra.mxu0 0
      %896 = vmatprep.subr.bf16.mxu0 0
      %897 = vmatpush2.bf16.msra.mxu0 0
      %898 = vmatprep.mubr.bf16.mxu0 0
      %899 = vmatmul.mubr.bf16.gmra.mxu0 %v861
      %v900 = vpop.f32.mrf.mxu0
      %v901 = vadd.f32 0.0, %v900
      %v902 = vpop.f32.mrf.mxu0
      %v903 = vpop.f32.mrf.mxu0
      %v904 = vadd.f32 0.0, %v903
      %v905 = vpop.f32.mrf.mxu0
      %906 = vmatprep.mubr.bf16.mxu0 0
      %907 = vmatmul.mubr.bf16.gmra.mxu0 %v864
      %v908 = vpop.f32.mrf.mxu0
      %v909 = vadd.f32 0.0, %v908
      %v910 = vpop.f32.mrf.mxu0
      %v911 = vpop.f32.mrf.mxu0
      %v912 = vadd.f32 0.0, %v911
      %v913 = vpop.f32.mrf.mxu0
      %914 = vdwg.mxu0
      %v915 = vmul.f32 %v901, %v532
      %v916 = vmul.f32 %v904, %v533
      %v917 = vmul.f32 %v909, %v534
      %v918 = vmul.f32 %v912, %v535
      %v919 = vpack.c.bf16 %v831, %v830
      %v920 = vpack.c.bf16 %v833, %v832
      %v921 = vpack.c.bf16 %v916, %v915
      %v922 = vpack.c.bf16 %v918, %v917
      %v924 = vsel %vm572, %v834, 0
      %v927 = vsel %vm572, %v835, 0
      %929 = vmatprep.subr.bf16.mxu0 0
      %930 = vmatpush1.bf16.msra.mxu0 0
      %931 = vmatprep.subr.bf16.mxu0 0
      %932 = vmatpush1.bf16.msra.mxu0 0
      %933 = vmatprep.subr.bf16.mxu0 0
      %934 = vmatpush1.bf16.msra.mxu0 0
      %935 = vmatprep.subr.bf16.mxu0 0
      %936 = vmatpush1.bf16.msra.mxu0 0
      %937 = vmatprep.subr.bf16.mxu0 0
      %938 = vmatpush1.bf16.msra.mxu0 0
      %939 = vmatprep.subr.bf16.mxu0 0
      %940 = vmatpush1.bf16.msra.mxu0 0
      %941 = vmatprep.subr.bf16.mxu0 0
      %942 = vmatpush1.bf16.msra.mxu0 %v922
      %943 = vmatprep.subr.bf16.mxu0 0
      %944 = vmatpush1.bf16.msra.mxu0 %v921
      %945 = vmatprep.subr.bf16.mxu0 0
      %946 = vmatpush2.bf16.msra.mxu0 0
      %947 = vmatprep.subr.bf16.mxu0 0
      %948 = vmatpush2.bf16.msra.mxu0 0
      %949 = vmatprep.subr.bf16.mxu0 0
      %950 = vmatpush2.bf16.msra.mxu0 0
      %951 = vmatprep.subr.bf16.mxu0 0
      %952 = vmatpush2.bf16.msra.mxu0 0
      %953 = vmatprep.subr.bf16.mxu0 0
      %954 = vmatpush2.bf16.msra.mxu0 0
      %955 = vmatprep.subr.bf16.mxu0 0
      %956 = vmatpush2.bf16.msra.mxu0 0
      %957 = vmatprep.subr.bf16.mxu0 0
      %958 = vmatpush2.bf16.msra.mxu0 0
      %959 = vmatprep.subr.bf16.mxu0 0
      %960 = vmatpush2.bf16.msra.mxu0 0
      %961 = vmatprep.mubr.bf16.mxu0 0
      %962 = vmatmul.mubr.bf16.gmra.mxu0 %v924
      %v963 = vpop.f32.mrf.mxu0
      %v964 = vadd.f32 0.0, %v963
      %v965 = vpop.f32.mrf.mxu0
      %v966 = vpop.f32.mrf.mxu0
      %v967 = vadd.f32 0.0, %v966
      %v968 = vpop.f32.mrf.mxu0
      %969 = vmatprep.mubr.bf16.mxu0 0
      %970 = vmatmul.mubr.bf16.gmra.mxu0 %v927
      %v971 = vpop.f32.mrf.mxu0
      %v972 = vadd.f32 0.0, %v971
      %v973 = vpop.f32.mrf.mxu0
      %v974 = vpop.f32.mrf.mxu0
      %v975 = vpop.f32.mrf.mxu0
      %976 = vdwg.mxu0
      %v978 = vsel %vm572, %v735, 0
      %v981 = vsel %vm572, %v736, 0
      %983 = vmatprep.subr.bf16.mxu0 0
      %984 = vmatpush1.bf16.msra.mxu0 0
      %985 = vmatprep.subr.bf16.mxu0 0
      %986 = vmatpush1.bf16.msra.mxu0 0
      %987 = vmatprep.subr.bf16.mxu0 0
      %988 = vmatpush1.bf16.msra.mxu0 0
      %989 = vmatprep.subr.bf16.mxu0 0
      %990 = vmatpush1.bf16.msra.mxu0 0
      %991 = vmatprep.subr.bf16.mxu0 0
      %992 = vmatpush1.bf16.msra.mxu0 0
      %993 = vmatprep.subr.bf16.mxu0 0
      %994 = vmatpush1.bf16.msra.mxu0 0
      %995 = vmatprep.subr.bf16.mxu0 0
      %996 = vmatpush1.bf16.msra.mxu0 %v920
      %997 = vmatprep.subr.bf16.mxu0 0
      %998 = vmatpush1.bf16.msra.mxu0 %v919
      %999 = vmatprep.subr.bf16.mxu0 0
      %1000 = vmatpush2.bf16.msra.mxu0 0
      %1001 = vmatprep.subr.bf16.mxu0 0
      %1002 = vmatpush2.bf16.msra.mxu0 0
      %1003 = vmatprep.subr.bf16.mxu0 0
      %1004 = vmatpush2.bf16.msra.mxu0 0
      %1005 = vmatprep.subr.bf16.mxu0 0
      %1006 = vmatpush2.bf16.msra.mxu0 0
      %1007 = vmatprep.subr.bf16.mxu0 0
      %1008 = vmatpush2.bf16.msra.mxu0 0
      %1009 = vmatprep.subr.bf16.mxu0 0
      %1010 = vmatpush2.bf16.msra.mxu0 0
      %1011 = vmatprep.subr.bf16.mxu0 0
      %1012 = vmatpush2.bf16.msra.mxu0 0
      %1013 = vmatprep.subr.bf16.mxu0 0
      %1014 = vmatpush2.bf16.msra.mxu0 0
      %1015 = vmatprep.mubr.bf16.mxu0 0
      %1016 = vmatmul.mubr.bf16.gmra.mxu0 %v978
      %v1017 = vpop.f32.mrf.mxu0
      %v1018 = vadd.f32 %v964, %v1017
      %v1019 = vpop.f32.mrf.mxu0
      %v1020 = vpop.f32.mrf.mxu0
      %v1021 = vadd.f32 %v967, %v1020
      %v1022 = vpop.f32.mrf.mxu0
      %1023 = vmatprep.mubr.bf16.mxu0 0
      %1024 = vmatmul.mubr.bf16.gmra.mxu0 %v981
      %v1025 = vpop.f32.mrf.mxu0
      %v1026 = vadd.f32 %v972, %v1025
      %v1027 = vpop.f32.mrf.mxu0
      %v1028 = vpop.f32.mrf.mxu0
      %v1029 = vpop.f32.mrf.mxu0
      %1030 = vdwg.mxu0
      %vm1031 = vcmask 523520
      %v1032 = vsel %vm1031, %v714, 0.0
      %v1033 = vsel %vm1031, %v715, 0.0
      %v1034 = vadd.f32 %v1032, %v1033
      %vm1035 = vcmask 517376
      %v1036 = vsel %vm1035, %v716, 0.0
      %v1037 = vadd.f32 %v1034, %v1036
      %v1038 = vrot.slane %v1037, 4
      %v1039 = vadd.f32 %v1037, %v1038
      %v1040 = vrot.slane %v1039, 2
      %v1041 = vadd.f32 %v1039, %v1040
      %v1042 = vrot.slane %v1041, 1
      %v1043 = vadd.f32 %v1041, %v1042
      %v1044 = vsel %vm1031, %v732, 0.0
      %v1045 = vsel %vm1031, %v733, 0.0
      %v1046 = vadd.f32 %v1044, %v1045
      %v1047 = vsel %vm1035, %v734, 0.0
      %v1048 = vadd.f32 %v1046, %v1047
      %v1049 = vrot.slane %v1048, 4
      %v1050 = vadd.f32 %v1048, %v1049
      %v1051 = vrot.slane %v1050, 2
      %v1052 = vadd.f32 %v1050, %v1051
      %v1053 = vrot.slane %v1052, 1
      %v1054 = vadd.f32 %v1052, %v1053
      %1056 = vrot.lane.b32.xlu0 %v1043, 96
      %v1057 = vpop.permute.xlu0 %1056
      %v1059 = vmul.f32 %v714, %v1057
      %v1060 = vmul.f32 %v715, %v1057
      %v1061 = vmul.f32 %v716, %v1057
      %1063 = vrot.lane.b32.xlu0 %v1054, 96
      %v1064 = vpop.permute.xlu0 %1063
      %v1066 = vmul.f32 %v732, %v1064
      %v1067 = vmul.f32 %v733, %v1064
      %v1068 = vmul.f32 %v734, %v1064
      %v1069 = vadd.f32 %v1059, %v1066
      %v1070 = vadd.f32 %v1060, %v1067
      %v1071 = vadd.f32 %v1061, %v1068
      %v1072 = vpack.c.bf16 %v1070, %v1069
      %v1073 = vpack.c.bf16 %v1071, %v1071
      %v1074 = vpack.c.bf16 %v533, %v532
      %v1075 = vpack.c.bf16 %v535, %v534
      %v1077 = vsel %vm572, %v1072, 0
      %v1080 = vsel %vm572, %v1073, 0
      %1082 = vmatprep.subr.bf16.mxu0 0
      %1083 = vmatpush1.bf16.msra.mxu0 0
      %1084 = vmatprep.subr.bf16.mxu0 0
      %1085 = vmatpush1.bf16.msra.mxu0 0
      %1086 = vmatprep.subr.bf16.mxu0 0
      %1087 = vmatpush1.bf16.msra.mxu0 0
      %1088 = vmatprep.subr.bf16.mxu0 0
      %1089 = vmatpush1.bf16.msra.mxu0 0
      %1090 = vmatprep.subr.bf16.mxu0 0
      %1091 = vmatpush1.bf16.msra.mxu0 0
      %1092 = vmatprep.subr.bf16.mxu0 0
      %1093 = vmatpush1.bf16.msra.mxu0 0
      %1094 = vmatprep.subr.bf16.mxu0 0
      %1095 = vmatpush1.bf16.msra.mxu0 %v1075
      %1096 = vmatprep.subr.bf16.mxu0 0
      %1097 = vmatpush1.bf16.msra.mxu0 %v1074
      %1098 = vmatprep.subr.bf16.mxu0 0
      %1099 = vmatpush2.bf16.msra.mxu0 0
      %1100 = vmatprep.subr.bf16.mxu0 0
      %1101 = vmatpush2.bf16.msra.mxu0 0
      %1102 = vmatprep.subr.bf16.mxu0 0
      %1103 = vmatpush2.bf16.msra.mxu0 0
      %1104 = vmatprep.subr.bf16.mxu0 0
      %1105 = vmatpush2.bf16.msra.mxu0 0
      %1106 = vmatprep.subr.bf16.mxu0 0
      %1107 = vmatpush2.bf16.msra.mxu0 0
      %1108 = vmatprep.subr.bf16.mxu0 0
      %1109 = vmatpush2.bf16.msra.mxu0 0
      %1110 = vmatprep.subr.bf16.mxu0 0
      %1111 = vmatpush2.bf16.msra.mxu0 0
      %1112 = vmatprep.subr.bf16.mxu0 0
      %1113 = vmatpush2.bf16.msra.mxu0 0
      %1114 = vmatprep.mubr.bf16.mxu0 0
      %1115 = vmatmul.mubr.bf16.gmra.mxu0 %v1077
      %v1116 = vpop.f32.mrf.mxu0
      %v1117 = vadd.f32 1e-06, %v1116
      %v1118 = vpop.f32.mrf.mxu0
      %v1119 = vpop.f32.mrf.mxu0
      %v1120 = vadd.f32 1e-06, %v1119
      %v1121 = vpop.f32.mrf.mxu0
      %1122 = vmatprep.mubr.bf16.mxu0 0
      %1123 = vmatmul.mubr.bf16.gmra.mxu0 %v1080
      %v1124 = vpop.f32.mrf.mxu0
      %v1125 = vadd.f32 1e-06, %v1124
      %v1126 = vpop.f32.mrf.mxu0
      %v1127 = vpop.f32.mrf.mxu0
      %v1128 = vpop.f32.mrf.mxu0
      %1129 = vdwg.mxu0
      %v1130 = vrcp.pop %v1117
      %v1131 = vrcp.pop %v1120
      %v1132 = vrcp.pop %v1125
      %v1133 = vmul.f32 %v1018, %v1130
      %v1134 = vmul.f32 %v1021, %v1131
      %v1135 = vmul.f32 %v1026, %v1132
      %v1136 = vpack.c.bf16 %v1134, %v1133
      %v1137 = vpack.c.bf16 %v1135, %v1135
      %v1138 = vpack.c.bf16 %v542, %v541
      %v1139 = vpack.c.bf16 %v544, %v543
      %v1141 = vsel %vm572, %v1136, 0
      %v1144 = vsel %vm572, %v1137, 0
      %1146 = vmatprep.subr.bf16.mxu0 0
      %1147 = vmatpush1.bf16.msra.mxu0 0
      %1148 = vmatprep.subr.bf16.mxu0 0
      %1149 = vmatpush1.bf16.msra.mxu0 0
      %1150 = vmatprep.subr.bf16.mxu0 0
      %1151 = vmatpush1.bf16.msra.mxu0 0
      %1152 = vmatprep.subr.bf16.mxu0 0
      %1153 = vmatpush1.bf16.msra.mxu0 0
      %1154 = vmatprep.subr.bf16.mxu0 0
      %1155 = vmatpush1.bf16.msra.mxu0 0
      %1156 = vmatprep.subr.bf16.mxu0 0
      %1157 = vmatpush1.bf16.msra.mxu0 0
      %1158 = vmatprep.subr.bf16.mxu0 0
      %1159 = vmatpush1.bf16.msra.mxu0 %v1139
      %1160 = vmatprep.subr.bf16.mxu0 0
      %1161 = vmatpush1.bf16.msra.mxu0 %v1138
      %1162 = vmatprep.subr.bf16.mxu0 0
      %1163 = vmatpush2.bf16.msra.mxu0 0
      %1164 = vmatprep.subr.bf16.mxu0 0
      %1165 = vmatpush2.bf16.msra.mxu0 0
      %1166 = vmatprep.subr.bf16.mxu0 0
      %1167 = vmatpush2.bf16.msra.mxu0 0
      %1168 = vmatprep.subr.bf16.mxu0 0
      %1169 = vmatpush2.bf16.msra.mxu0 0
      %1170 = vmatprep.subr.bf16.mxu0 0
      %1171 = vmatpush2.bf16.msra.mxu0 0
      %1172 = vmatprep.subr.bf16.mxu0 0
      %1173 = vmatpush2.bf16.msra.mxu0 0
      %1174 = vmatprep.subr.bf16.mxu0 0
      %1175 = vmatpush2.bf16.msra.mxu0 0
      %1176 = vmatprep.subr.bf16.mxu0 0
      %1177 = vmatpush2.bf16.msra.mxu0 0
      %1178 = vmatprep.mubr.bf16.mxu0 0
      %1179 = vmatmul.mubr.bf16.gmra.mxu0 %v1141
      %v1180 = vpop.f32.mrf.mxu0
      %v1181 = vadd.f32 0.0, %v1180
      %v1182 = vpop.f32.mrf.mxu0
      %v1183 = vpop.f32.mrf.mxu0
      %v1184 = vadd.f32 0.0, %v1183
      %v1185 = vpop.f32.mrf.mxu0
      %1186 = vmatprep.mubr.bf16.mxu0 0
      %1187 = vmatmul.mubr.bf16.gmra.mxu0 %v1144
      %v1188 = vpop.f32.mrf.mxu0
      %v1189 = vadd.f32 0.0, %v1188
      %v1190 = vpop.f32.mrf.mxu0
      %v1191 = vpop.f32.mrf.mxu0
      %v1192 = vpop.f32.mrf.mxu0
      %1193 = vdwg.mxu0
      %v1194 = vadd.f32 %v523, %v1181
      %v1195 = vadd.f32 %v524, %v1184
      %v1196 = vadd.f32 %v525, %v1189
      %v1198 = vlaneseq
      %v1199 = vshrl.u32 %v1198, 7
      %v1200 = vsub.s32 0, %v1199
      %v1201 = vrot.slane %v545, %v1200
      %v1203 = vadd.f32 %v1194, %v1201
      %v1204 = vadd.f32 %v1195, %v1201
      %v1205 = vadd.f32 %v1196, %v1201
      %v1206 = vsel %vm572, %v1203, 0.0
      %1207 = vadd.xlane.f32.xlu0 %v1206
      %v1208 = vpop.xlane.xlu0 %1207
      %v1209 = vsel %vm572, %v1204, 0.0
      %1210 = vadd.xlane.f32.xlu0 %v1209
      %v1211 = vpop.xlane.xlu0 %1210
      %v1212 = vsel %vm579, %v1205, 0.0
      %1213 = vadd.xlane.f32.xlu0 %v1212
      %v1214 = vpop.xlane.xlu0 %1213
      %v1215 = vmul.f32 %v1208, %v583
      %v1216 = vmul.f32 %v1211, %v583
      %v1217 = vmul.f32 %v1214, %v583
      %v1218 = vsub.f32 %v1203, %v1215
      %v1219 = vsub.f32 %v1204, %v1216
      %v1220 = vsub.f32 %v1205, %v1217
      %v1221 = vmul.f32 %v1218, %v1218
      %v1222 = vmul.f32 %v1219, %v1219
      %v1223 = vmul.f32 %v1220, %v1220
      %v1224 = vsel %vm572, %v1221, 0.0
      %1225 = vadd.xlane.f32.xlu0 %v1224
      %v1226 = vpop.xlane.xlu0 %1225
      %v1227 = vsel %vm572, %v1222, 0.0
      %1228 = vadd.xlane.f32.xlu0 %v1227
      %v1229 = vpop.xlane.xlu0 %1228
      %v1230 = vsel %vm579, %v1223, 0.0
      %1231 = vadd.xlane.f32.xlu0 %v1230
      %v1232 = vpop.xlane.xlu0 %1231
      %v1233 = vmul.f32 %v1226, %v583
      %v1234 = vmul.f32 %v1229, %v583
      %v1235 = vmul.f32 %v1232, %v583
      %v1236 = vadd.f32 %v1233, 1e-05
      %v1237 = vadd.f32 %v1234, 1e-05
      %v1238 = vadd.f32 %v1235, 1e-05
      %v1239 = vrsqrt.pop %v1236
      %v1240 = vrsqrt.pop %v1237
      %v1241 = vrsqrt.pop %v1238
      %v1242 = vmul.f32 %v1218, %v1239
      %v1243 = vmul.f32 %v1219, %v1240
      %v1244 = vmul.f32 %v1220, %v1241
      %v1246 = vlaneseq
      %v1247 = vshrl.u32 %v1246, 7
      %v1248 = vsub.s32 0, %v1247
      %v1249 = vrot.slane %v548, %v1248
      %v1251 = vmul.f32 %v1242, %v1249
      %v1252 = vmul.f32 %v1243, %v1249
      %v1253 = vmul.f32 %v1244, %v1249
      %v1255 = vlaneseq
      %v1256 = vshrl.u32 %v1255, 7
      %v1257 = vsub.s32 0, %v1256
      %v1258 = vrot.slane %v549, %v1257
      %v1260 = vadd.f32 %v1251, %v1258
      %v1261 = vadd.f32 %v1252, %v1258
      %v1262 = vadd.f32 %v1253, %v1258
      %v1263 = vpack.c.bf16 %v1261, %v1260
      %v1264 = vpack.c.bf16 %v1262, %v1262
      %v1265 = vpack.c.bf16 %v551, %v550
      %v1266 = vpack.c.bf16 %v553, %v552
      %v1268 = vlaneseq
      %v1269 = vshrl.u32 %v1268, 7
      %v1270 = vsub.s32 0, %v1269
      %v1271 = vrot.slane %v554, %v1270
      %v1274 = vsel %vm572, %v1263, 0
      %v1277 = vsel %vm572, %v1264, 0
      %1279 = vmatprep.subr.bf16.mxu0 0
      %1280 = vmatpush1.bf16.msra.mxu0 0
      %1281 = vmatprep.subr.bf16.mxu0 0
      %1282 = vmatpush1.bf16.msra.mxu0 0
      %1283 = vmatprep.subr.bf16.mxu0 0
      %1284 = vmatpush1.bf16.msra.mxu0 0
      %1285 = vmatprep.subr.bf16.mxu0 0
      %1286 = vmatpush1.bf16.msra.mxu0 0
      %1287 = vmatprep.subr.bf16.mxu0 0
      %1288 = vmatpush1.bf16.msra.mxu0 0
      %1289 = vmatprep.subr.bf16.mxu0 0
      %1290 = vmatpush1.bf16.msra.mxu0 0
      %1291 = vmatprep.subr.bf16.mxu0 0
      %1292 = vmatpush1.bf16.msra.mxu0 %v1266
      %1293 = vmatprep.subr.bf16.mxu0 0
      %1294 = vmatpush1.bf16.msra.mxu0 %v1265
      %1295 = vmatprep.subr.bf16.mxu0 0
      %1296 = vmatpush2.bf16.msra.mxu0 0
      %1297 = vmatprep.subr.bf16.mxu0 0
      %1298 = vmatpush2.bf16.msra.mxu0 0
      %1299 = vmatprep.subr.bf16.mxu0 0
      %1300 = vmatpush2.bf16.msra.mxu0 0
      %1301 = vmatprep.subr.bf16.mxu0 0
      %1302 = vmatpush2.bf16.msra.mxu0 0
      %1303 = vmatprep.subr.bf16.mxu0 0
      %1304 = vmatpush2.bf16.msra.mxu0 0
      %1305 = vmatprep.subr.bf16.mxu0 0
      %1306 = vmatpush2.bf16.msra.mxu0 0
      %1307 = vmatprep.subr.bf16.mxu0 0
      %1308 = vmatpush2.bf16.msra.mxu0 0
      %1309 = vmatprep.subr.bf16.mxu0 0
      %1310 = vmatpush2.bf16.msra.mxu0 0
      %1311 = vmatprep.mubr.bf16.mxu0 0
      %1312 = vmatmul.mubr.bf16.gmra.mxu0 %v1274
      %v1313 = vpop.f32.mrf.mxu0
      %v1314 = vadd.f32 %v1271, %v1313
      %v1315 = vpop.f32.mrf.mxu0
      %v1316 = vpop.f32.mrf.mxu0
      %v1317 = vadd.f32 %v1271, %v1316
      %v1318 = vpop.f32.mrf.mxu0
      %1319 = vmatprep.mubr.bf16.mxu0 0
      %1320 = vmatmul.mubr.bf16.gmra.mxu0 %v1277
      %v1321 = vpop.f32.mrf.mxu0
      %v1322 = vadd.f32 %v1271, %v1321
      %v1323 = vpop.f32.mrf.mxu0
      %v1324 = vpop.f32.mrf.mxu0
      %v1325 = vpop.f32.mrf.mxu0
      %1326 = vdwg.mxu0
      %v1327 = vmax.f32 %v1314, 0.0
      %v1328 = vmax.f32 %v1317, 0.0
      %v1329 = vmax.f32 %v1322, 0.0
      %v1330 = vpack.c.bf16 %v1328, %v1327
      %v1331 = vpack.c.bf16 %v1329, %v1329
      %v1332 = vpack.c.bf16 %v556, %v555
      %v1333 = vpack.c.bf16 %v558, %v557
      %v1334 = vpack.c.bf16 %v560, %v559
      %v1335 = vpack.c.bf16 %v562, %v561
      %v1336 = vpack.c.bf16 %v564, %v563
      %v1337 = vpack.c.bf16 %v566, %v565
      %v1338 = vpack.c.bf16 %v568, %v567
      %v1339 = vpack.c.bf16 %v570, %v569
      %1340 = vmatprep.subr.bf16.mxu0 0
      %1341 = vmatpush1.bf16.msra.mxu0 %v1339
      %1342 = vmatprep.subr.bf16.mxu0 0
      %1343 = vmatpush1.bf16.msra.mxu0 %v1338
      %1344 = vmatprep.subr.bf16.mxu0 0
      %1345 = vmatpush1.bf16.msra.mxu0 %v1337
      %1346 = vmatprep.subr.bf16.mxu0 0
      %1347 = vmatpush1.bf16.msra.mxu0 %v1336
      %1348 = vmatprep.subr.bf16.mxu0 0
      %1349 = vmatpush1.bf16.msra.mxu0 %v1335
      %1350 = vmatprep.subr.bf16.mxu0 0
      %1351 = vmatpush1.bf16.msra.mxu0 %v1334
      %1352 = vmatprep.subr.bf16.mxu0 0
      %1353 = vmatpush1.bf16.msra.mxu0 %v1333
      %1354 = vmatprep.subr.bf16.mxu0 0
      %1355 = vmatpush1.bf16.msra.mxu0 %v1332
      %1356 = vmatprep.subr.bf16.mxu0 0
      %1357 = vmatpush2.bf16.msra.mxu0 0
      %1358 = vmatprep.subr.bf16.mxu0 0
      %1359 = vmatpush2.bf16.msra.mxu0 0
      %1360 = vmatprep.subr.bf16.mxu0 0
      %1361 = vmatpush2.bf16.msra.mxu0 0
      %1362 = vmatprep.subr.bf16.mxu0 0
      %1363 = vmatpush2.bf16.msra.mxu0 0
      %1364 = vmatprep.subr.bf16.mxu0 0
      %1365 = vmatpush2.bf16.msra.mxu0 0
      %1366 = vmatprep.subr.bf16.mxu0 0
      %1367 = vmatpush2.bf16.msra.mxu0 0
      %1368 = vmatprep.subr.bf16.mxu0 0
      %1369 = vmatpush2.bf16.msra.mxu0 0
      %1370 = vmatprep.subr.bf16.mxu0 0
      %1371 = vmatpush2.bf16.msra.mxu0 0
      %1372 = vmatprep.mubr.bf16.mxu0 0
      %1373 = vmatmul.mubr.bf16.gmra.mxu0 %v1330
      %v1374 = vpop.f32.mrf.mxu0
      %v1375 = vadd.f32 0.0, %v1374
      %v1376 = vpop.f32.mrf.mxu0
      %v1377 = vpop.f32.mrf.mxu0
      %v1378 = vadd.f32 0.0, %v1377
      %v1379 = vpop.f32.mrf.mxu0
      %1380 = vmatprep.mubr.bf16.mxu0 0
      %1381 = vmatmul.mubr.bf16.gmra.mxu0 %v1331
      %v1382 = vpop.f32.mrf.mxu0
      %v1383 = vadd.f32 0.0, %v1382
      %v1384 = vpop.f32.mrf.mxu0
      %v1385 = vpop.f32.mrf.mxu0
      %v1386 = vpop.f32.mrf.mxu0
      %1387 = vdwg.mxu0
      %v1388 = vadd.f32 %v1203, %v1375
      %v1389 = vadd.f32 %v1204, %v1378
      %v1390 = vadd.f32 %v1205, %v1383
      %v1392 = vlaneseq
      %v1393 = vshrl.u32 %v1392, 7
      %v1394 = vsub.s32 0, %v1393
      %v1395 = vrot.slane %v571, %v1394
      %v1397 = vadd.f32 %v1388, %v1395
      %v1398 = vadd.f32 %v1389, %v1395
      %v1399 = vadd.f32 %v1390, %v1395
      %1400 = vst.msk [vmem:[%s521] sm:$0xff] %vm572, %v1397
      %1401 = vst.msk [vmem:[%s521 + $0x8] sm:$0xff] %vm572, %v1398
      %1402 = vst.msk [vmem:[%s521 + $0x10] sm:$0x3] %vm579, %v1399
      %p1403 = scmp.lt.s32.totalorder %s27, 1
      %s1404 = scalar_select %p1403, %s27, 1
      %s1405 = smul.addr %s1404, 3
      %s1406 = smul.addr %s1405, 8
      %s1407 = scalar_lea.vmem %s16, %s1406
      // Predicated region
      $region85: #{model_forward.4} parent=83 // pred_check
        %p1408 = pneg %p386
      $region86: #{model_forward.4} parent=83 // pred_check_branch
        %1410 = sbr.rel (%p1408) target = $region88
      $region87: #{model_forward.4} parent=83 // pred_region
        _
      $region88: #{model_forward.4} parent=83 // pred_fallthru
        _
    $region84: #{model_forward.4} parent=5 // pred_fallthru
      _
    %p1411 = scmp.le.s32.totalorder 2, %s22
    // Predicated region
    $region89: #{model_forward.4} parent=5 // pred_check
      %p1412 = pneg %p1411
    $region90: #{model_forward.4} parent=5 // pred_check_branch
      %1414 = sbr.rel (%p1412) target = $region92
    $region91: #{model_forward.4} parent=5 // pred_region
      %s1415 = ssub.s32 %s22, 2
      // Predicated region
      $region93: #{model_forward.4} parent=91 // pred_check
        %p1416 = pneg %p392
      $region94: #{model_forward.4} parent=91 // pred_check_branch
        %1418 = sbr.rel (%p1416) target = $region96
      $region95: #{model_forward.4} parent=91 // pred_region
        %p1419 = scmp.lt.s32.totalorder %s28, 1
        %s1420 = scalar_select %p1419, %s28, 1
        %s1421 = smul.addr %s1420, 3
        %s1422 = smul.addr %s1421, 8
        %s1423 = scalar_lea.vmem %s16, %s1422
      $region96: #{model_forward.4} parent=91 // pred_fallthru
        _
    $region92: #{model_forward.4} parent=5 // pred_fallthru
      _
  $region6: #{model_forward.4} parent=0 // loop_footer
    %s26 = sadd.s32 1, %s22
  $region7: #{model_forward.4} parent=0 // loop_footer_branch
    %21 = sbr.rel target = $region3
  $region8: #{model_forward.4} parent=0 // loop_exit
    _

// kernel: model_forward.5
$region0: #{model_forward.5}
  #allocation0 [shape = 'u32[]', space=smem, size = 0x4, offset = 0x4, fixed_abs, tag = 'smem constant byte address 0x4 - core index']
  #allocation1 [shape = 'u32[144,128]{1,0:T(1,128)}', space=vmem, size = 0x12000, scoped, tag = 'internal scratch']
  %s0 = inlined_call_operand.vmem [shape: f32[2,18,32], index: 0, kind: input, shape index: {}]
  %s1 = inlined_call_operand.vmem [shape: f32[18,1], index: 1, kind: input, shape index: {}]
  %s2 = inlined_call_operand.vmem [shape: f32[18,1], index: 2, kind: input, shape index: {}]
  %s3 = inlined_call_operand.vmem [shape: f32[32,32], index: 3, kind: input, shape index: {}]
  %s4 = inlined_call_operand.vmem [shape: f32[32,96], index: 4, kind: input, shape index: {}]
  %s5 = inlined_call_operand.vmem [shape: f32[1,96], index: 5, kind: input, shape index: {}]
  %s6 = inlined_call_operand.vmem [shape: f32[32,32], index: 6, kind: input, shape index: {}]
  %s7 = inlined_call_operand.vmem [shape: f32[1,32], index: 7, kind: input, shape index: {}]
  %s8 = inlined_call_operand.vmem [shape: f32[1,32], index: 8, kind: input, shape index: {}]
  %s9 = inlined_call_operand.vmem [shape: f32[1,32], index: 9, kind: input, shape index: {}]
  %s10 = inlined_call_operand.vmem [shape: f32[1,32], index: 10, kind: input, shape index: {}]
  %s11 = inlined_call_operand.vmem [shape: f32[1,32], index: 11, kind: input, shape index: {}]
  %s12 = inlined_call_operand.vmem [shape: f32[32,128], index: 12, kind: input, shape index: {}]
  %s13 = inlined_call_operand.vmem [shape: f32[1,128], index: 13, kind: input, shape index: {}]
  %s14 = inlined_call_operand.vmem [shape: f32[128,32], index: 14, kind: input, shape index: {}]
  %s15 = inlined_call_operand.vmem [shape: f32[1,32], index: 15, kind: input, shape index: {}]
  %s16 = inlined_call_operand.vmem [shape: f32[32,3], index: 16, kind: input, shape index: {}]
  %s17 = inlined_call_operand.vmem [shape: f32[1,3], index: 17, kind: input, shape index: {}]
  %s18 = inlined_call_operand.hbm [shape: f32[2,1,3], index: 18, kind: output, shape index: {}]
  %s19 = sld [smem:[#allocation0]]
  $region105: #{model_forward.5} parent=0
    _
  %s21 = ssub.s32 1, %s19
  %s22 = scalar_select 0, %s21, %s19
  $region1: #{model_forward.5} parent=0
    #allocation2 [shape = 'u8[1024]{0}', space=vmem, size = 0x400, scoped, tag = 'output window, operand 0']
    #allocation3 [shape = 's32[2]{0}', space=sflag, size = 0x8, scoped, tag = 'scoped memory for model_forward.5']
    %23 = vsyncpa [#allocation3], 0
    %s24 = scalar_lea.sflag [#allocation3], 1
    %25 = vsyncpa %s24, 0
    loop: start=0, step=1, limit=4
    $region2: #{model_forward.5} parent=1 // loop_pre_header
      _
    $region3: #{model_forward.5} parent=1 // loop_header
      %s27 = sphi 0, %s31
      %p28 = scmp.ge.s32.totalorder %s27, 4
      %s37 = sphi 0, %s39
      %s40 = sphi 0, %s37
      %s41 = sphi 0, %s40
      %s57 = sphi 0, %s41
      %s61 = sphi 0, %s61
      %s63 = sphi 0, %s61
      %s64 = sphi 0, %s63
      %s78 = sphi 0, %s64
      %s82 = sphi 0, %s82
      %s84 = sphi 0, %s82
      %s85 = sphi 0, %s84
      %s99 = sphi 0, %s85
      %s103 = sphi 0, %s103
      %s105 = sphi 0, %s103
      %s106 = sphi 0, %s105
      %s120 = sphi 0, %s106
      %s124 = sphi 0, %s124
      %s126 = sphi 0, %s124
      %s127 = sphi 0, %s126
      %s141 = sphi 0, %s127
      %s145 = sphi 0, %s145
      %s147 = sphi 0, %s145
      %s148 = sphi 0, %s147
      %s162 = sphi 0, %s148
      %s166 = sphi 0, %s166
      %s168 = sphi 0, %s166
      %s169 = sphi 0, %s168
      %s183 = sphi 0, %s169
      %s187 = sphi 0, %s187
      %s189 = sphi 0, %s187
      %s190 = sphi 0, %s189
      %s204 = sphi 0, %s190
      %s208 = sphi 0, %s208
      %s210 = sphi 0, %s208
      %s211 = sphi 0, %s210
      %s225 = sphi 0, %s211
      %s229 = sphi 0, %s229
      %s231 = sphi 0, %s229
      %s232 = sphi 0, %s231
      %s246 = sphi 0, %s232
      %s250 = sphi 0, %s250
      %s252 = sphi 0, %s250
      %s253 = sphi 0, %s252
      %s267 = sphi 0, %s253
      %s271 = sphi 0, %s271
      %s273 = sphi 0, %s271
      %s274 = sphi 0, %s273
      %s288 = sphi 0, %s274
      %s292 = sphi 0, %s292
      %s294 = sphi 0, %s292
      %s295 = sphi 0, %s294
      %s309 = sphi 0, %s295
      %s313 = sphi 0, %s313
      %s315 = sphi 0, %s313
      %s316 = sphi 0, %s315
      %s330 = sphi 0, %s316
      %s334 = sphi 0, %s334
      %s336 = sphi 0, %s334
      %s337 = sphi 0, %s336
      %s351 = sphi 0, %s337
      %s355 = sphi 0, %s355
      %s357 = sphi 0, %s355
      %s358 = sphi 0, %s357
      %s372 = sphi 0, %s358
      %s376 = sphi 0, %s376
      %s378 = sphi 0, %s376
      %s379 = sphi 0, %s378
      %s393 = sphi 0, %s379
      %s397 = sphi 0, %s397
      %s399 = sphi 0, %s397
      %s400 = sphi 0, %s399
      %s414 = sphi 0, %s400
      %s420 = sphi 0, %s422
      %s423 = sphi 0, %s420
      %s424 = sphi 0, %s423
      %s440 = sphi 0, %s424
    $region4: #{model_forward.5} parent=1 // loop_header_branch
      %30 = sbr.rel (%p28) target = $region8
    $region5: #{model_forward.5} parent=1 // loop_body
      %s32 = ssub.s32 %s27, 1
      %s33 = ssub.s32 %s27, 2
      %s34 = sadd.s32 %s27, 1
      %s35 = ssub.s32 %s27, %s34
      %p36 = scmp.eq.s32.totalorder %s35, 0
      %s38 = sadd.s32 %s37, 1
      %s39 = scalar_select %p36, %s37, %s38
      %p42 = pneg %p36
      %p43 = scmp.eq.s32.totalorder %s27, 1
      %p44 = por %p42, %p43
      %p45 = scmp.ne.s32.totalorder %s37, %s40
      %p46 = scmp.eq.s32.totalorder %s27, 0
      %p47 = por %p45, %p46
      %p48 = scmp.ne.s32.totalorder %s37, %s40
      %p49 = scmp.eq.s32.totalorder %s32, 1
      %p50 = por %p48, %p49
      %p51 = scmp.ne.s32.totalorder %s40, %s41
      %p52 = scmp.eq.s32.totalorder %s32, 0
      %p53 = por %p51, %p52
      %p54 = scmp.ne.s32.totalorder %s40, %s41
      %p55 = scmp.eq.s32.totalorder %s33, 1
      %p56 = por %p54, %p55
      %p58 = scmp.ne.s32.totalorder %s41, %s57
      %p59 = scmp.eq.s32.totalorder %s33, 0
      %p60 = por %p58, %p59
      %s62 = sadd.s32 %s61, 1
      %p65 = scmp.eq.s32.totalorder %s27, 1
      %p66 = scmp.ne.s32.totalorder %s61, %s63
      %p67 = scmp.eq.s32.totalorder %s27, 0
      %p68 = por %p66, %p67
      %p69 = scmp.ne.s32.totalorder %s61, %s63
      %p70 = scmp.eq.s32.totalorder %s32, 1
      %p71 = por %p69, %p70
      %p72 = scmp.ne.s32.totalorder %s63, %s64
      %p73 = scmp.eq.s32.totalorder %s32, 0
      %p74 = por %p72, %p73
      %p75 = scmp.ne.s32.totalorder %s63, %s64
      %p76 = scmp.eq.s32.totalorder %s33, 1
      %p77 = por %p75, %p76
      %p79 = scmp.ne.s32.totalorder %s64, %s78
      %p80 = scmp.eq.s32.totalorder %s33, 0
      %p81 = por %p79, %p80
      %s83 = sadd.s32 %s82, 1
      %p86 = scmp.eq.s32.totalorder %s27, 1
      %p87 = scmp.ne.s32.totalorder %s82, %s84
      %p88 = scmp.eq.s32.totalorder %s27, 0
      %p89 = por %p87, %p88
      %p90 = scmp.ne.s32.totalorder %s82, %s84
      %p91 = scmp.eq.s32.totalorder %s32, 1
      %p92 = por %p90, %p91
      %p93 = scmp.ne.s32.totalorder %s84, %s85
      %p94 = scmp.eq.s32.totalorder %s32, 0
      %p95 = por %p93, %p94
      %p96 = scmp.ne.s32.totalorder %s84, %s85
      %p97 = scmp.eq.s32.totalorder %s33, 1
      %p98 = por %p96, %p97
      %p100 = scmp.ne.s32.totalorder %s85, %s99
      %p101 = scmp.eq.s32.totalorder %s33, 0
      %p102 = por %p100, %p101
      %s104 = sadd.s32 %s103, 1
      %p107 = scmp.eq.s32.totalorder %s27, 1
      %p108 = scmp.ne.s32.totalorder %s103, %s105
      %p109 = scmp.eq.s32.totalorder %s27, 0
      %p110 = por %p108, %p109
      %p111 = scmp.ne.s32.totalorder %s103, %s105
      %p112 = scmp.eq.s32.totalorder %s32, 1
      %p113 = por %p111, %p112
      %p114 = scmp.ne.s32.totalorder %s105, %s106
      %p115 = scmp.eq.s32.totalorder %s32, 0
      %p116 = por %p114, %p115
      %p117 = scmp.ne.s32.totalorder %s105, %s106
      %p118 = scmp.eq.s32.totalorder %s33, 1
      %p119 = por %p117, %p118
      %p121 = scmp.ne.s32.totalorder %s106, %s120
      %p122 = scmp.eq.s32.totalorder %s33, 0
      %p123 = por %p121, %p122
      %s125 = sadd.s32 %s124, 1
      %p128 = scmp.eq.s32.totalorder %s27, 1
      %p129 = scmp.ne.s32.totalorder %s124, %s126
      %p130 = scmp.eq.s32.totalorder %s27, 0
      %p131 = por %p129, %p130
      %p132 = scmp.ne.s32.totalorder %s124, %s126
      %p133 = scmp.eq.s32.totalorder %s32, 1
      %p134 = por %p132, %p133
      %p135 = scmp.ne.s32.totalorder %s126, %s127
      %p136 = scmp.eq.s32.totalorder %s32, 0
      %p137 = por %p135, %p136
      %p138 = scmp.ne.s32.totalorder %s126, %s127
      %p139 = scmp.eq.s32.totalorder %s33, 1
      %p140 = por %p138, %p139
      %p142 = scmp.ne.s32.totalorder %s127, %s141
      %p143 = scmp.eq.s32.totalorder %s33, 0
      %p144 = por %p142, %p143
      %s146 = sadd.s32 %s145, 1
      %p149 = scmp.eq.s32.totalorder %s27, 1
      %p150 = scmp.ne.s32.totalorder %s145, %s147
      %p151 = scmp.eq.s32.totalorder %s27, 0
      %p152 = por %p150, %p151
      %p153 = scmp.ne.s32.totalorder %s145, %s147
      %p154 = scmp.eq.s32.totalorder %s32, 1
      %p155 = por %p153, %p154
      %p156 = scmp.ne.s32.totalorder %s147, %s148
      %p157 = scmp.eq.s32.totalorder %s32, 0
      %p158 = por %p156, %p157
      %p159 = scmp.ne.s32.totalorder %s147, %s148
      %p160 = scmp.eq.s32.totalorder %s33, 1
      %p161 = por %p159, %p160
      %p163 = scmp.ne.s32.totalorder %s148, %s162
      %p164 = scmp.eq.s32.totalorder %s33, 0
      %p165 = por %p163, %p164
      %s167 = sadd.s32 %s166, 1
      %p170 = scmp.eq.s32.totalorder %s27, 1
      %p171 = scmp.ne.s32.totalorder %s166, %s168
      %p172 = scmp.eq.s32.totalorder %s27, 0
      %p173 = por %p171, %p172
      %p174 = scmp.ne.s32.totalorder %s166, %s168
      %p175 = scmp.eq.s32.totalorder %s32, 1
      %p176 = por %p174, %p175
      %p177 = scmp.ne.s32.totalorder %s168, %s169
      %p178 = scmp.eq.s32.totalorder %s32, 0
      %p179 = por %p177, %p178
      %p180 = scmp.ne.s32.totalorder %s168, %s169
      %p181 = scmp.eq.s32.totalorder %s33, 1
      %p182 = por %p180, %p181
      %p184 = scmp.ne.s32.totalorder %s169, %s183
      %p185 = scmp.eq.s32.totalorder %s33, 0
      %p186 = por %p184, %p185
      %s188 = sadd.s32 %s187, 1
      %p191 = scmp.eq.s32.totalorder %s27, 1
      %p192 = scmp.ne.s32.totalorder %s187, %s189
      %p193 = scmp.eq.s32.totalorder %s27, 0
      %p194 = por %p192, %p193
      %p195 = scmp.ne.s32.totalorder %s187, %s189
      %p196 = scmp.eq.s32.totalorder %s32, 1
      %p197 = por %p195, %p196
      %p198 = scmp.ne.s32.totalorder %s189, %s190
      %p199 = scmp.eq.s32.totalorder %s32, 0
      %p200 = por %p198, %p199
      %p201 = scmp.ne.s32.totalorder %s189, %s190
      %p202 = scmp.eq.s32.totalorder %s33, 1
      %p203 = por %p201, %p202
      %p205 = scmp.ne.s32.totalorder %s190, %s204
      %p206 = scmp.eq.s32.totalorder %s33, 0
      %p207 = por %p205, %p206
      %s209 = sadd.s32 %s208, 1
      %p212 = scmp.eq.s32.totalorder %s27, 1
      %p213 = scmp.ne.s32.totalorder %s208, %s210
      %p214 = scmp.eq.s32.totalorder %s27, 0
      %p215 = por %p213, %p214
      %p216 = scmp.ne.s32.totalorder %s208, %s210
      %p217 = scmp.eq.s32.totalorder %s32, 1
      %p218 = por %p216, %p217
      %p219 = scmp.ne.s32.totalorder %s210, %s211
      %p220 = scmp.eq.s32.totalorder %s32, 0
      %p221 = por %p219, %p220
      %p222 = scmp.ne.s32.totalorder %s210, %s211
      %p223 = scmp.eq.s32.totalorder %s33, 1
      %p224 = por %p222, %p223
      %p226 = scmp.ne.s32.totalorder %s211, %s225
      %p227 = scmp.eq.s32.totalorder %s33, 0
      %p228 = por %p226, %p227
      %s230 = sadd.s32 %s229, 1
      %p233 = scmp.eq.s32.totalorder %s27, 1
      %p234 = scmp.ne.s32.totalorder %s229, %s231
      %p235 = scmp.eq.s32.totalorder %s27, 0
      %p236 = por %p234, %p235
      %p237 = scmp.ne.s32.totalorder %s229, %s231
      %p238 = scmp.eq.s32.totalorder %s32, 1
      %p239 = por %p237, %p238
      %p240 = scmp.ne.s32.totalorder %s231, %s232
      %p241 = scmp.eq.s32.totalorder %s32, 0
      %p242 = por %p240, %p241
      %p243 = scmp.ne.s32.totalorder %s231, %s232
      %p244 = scmp.eq.s32.totalorder %s33, 1
      %p245 = por %p243, %p244
      %p247 = scmp.ne.s32.totalorder %s232, %s246
      %p248 = scmp.eq.s32.totalorder %s33, 0
      %p249 = por %p247, %p248
      %s251 = sadd.s32 %s250, 1
      %p254 = scmp.eq.s32.totalorder %s27, 1
      %p255 = scmp.ne.s32.totalorder %s250, %s252
      %p256 = scmp.eq.s32.totalorder %s27, 0
      %p257 = por %p255, %p256
      %p258 = scmp.ne.s32.totalorder %s250, %s252
      %p259 = scmp.eq.s32.totalorder %s32, 1
      %p260 = por %p258, %p259
      %p261 = scmp.ne.s32.totalorder %s252, %s253
      %p262 = scmp.eq.s32.totalorder %s32, 0
      %p263 = por %p261, %p262
      %p264 = scmp.ne.s32.totalorder %s252, %s253
      %p265 = scmp.eq.s32.totalorder %s33, 1
      %p266 = por %p264, %p265
      %p268 = scmp.ne.s32.totalorder %s253, %s267
      %p269 = scmp.eq.s32.totalorder %s33, 0
      %p270 = por %p268, %p269
      %s272 = sadd.s32 %s271, 1
      %p275 = scmp.eq.s32.totalorder %s27, 1
      %p276 = scmp.ne.s32.totalorder %s271, %s273
      %p277 = scmp.eq.s32.totalorder %s27, 0
      %p278 = por %p276, %p277
      %p279 = scmp.ne.s32.totalorder %s271, %s273
      %p280 = scmp.eq.s32.totalorder %s32, 1
      %p281 = por %p279, %p280
      %p282 = scmp.ne.s32.totalorder %s273, %s274
      %p283 = scmp.eq.s32.totalorder %s32, 0
      %p284 = por %p282, %p283
      %p285 = scmp.ne.s32.totalorder %s273, %s274
      %p286 = scmp.eq.s32.totalorder %s33, 1
      %p287 = por %p285, %p286
      %p289 = scmp.ne.s32.totalorder %s274, %s288
      %p290 = scmp.eq.s32.totalorder %s33, 0
      %p291 = por %p289, %p290
      %s293 = sadd.s32 %s292, 1
      %p296 = scmp.eq.s32.totalorder %s27, 1
      %p297 = scmp.ne.s32.totalorder %s292, %s294
      %p298 = scmp.eq.s32.totalorder %s27, 0
      %p299 = por %p297, %p298
      %p300 = scmp.ne.s32.totalorder %s292, %s294
      %p301 = scmp.eq.s32.totalorder %s32, 1
      %p302 = por %p300, %p301
      %p303 = scmp.ne.s32.totalorder %s294, %s295
      %p304 = scmp.eq.s32.totalorder %s32, 0
      %p305 = por %p303, %p304
      %p306 = scmp.ne.s32.totalorder %s294, %s295
      %p307 = scmp.eq.s32.totalorder %s33, 1
      %p308 = por %p306, %p307
      %p310 = scmp.ne.s32.totalorder %s295, %s309
      %p311 = scmp.eq.s32.totalorder %s33, 0
      %p312 = por %p310, %p311
      %s314 = sadd.s32 %s313, 1
      %p317 = scmp.eq.s32.totalorder %s27, 1
      %p318 = scmp.ne.s32.totalorder %s313, %s315
      %p319 = scmp.eq.s32.totalorder %s27, 0
      %p320 = por %p318, %p319
      %p321 = scmp.ne.s32.totalorder %s313, %s315
      %p322 = scmp.eq.s32.totalorder %s32, 1
      %p323 = por %p321, %p322
      %p324 = scmp.ne.s32.totalorder %s315, %s316
      %p325 = scmp.eq.s32.totalorder %s32, 0
      %p326 = por %p324, %p325
      %p327 = scmp.ne.s32.totalorder %s315, %s316
      %p328 = scmp.eq.s32.totalorder %s33, 1
      %p329 = por %p327, %p328
      %p331 = scmp.ne.s32.totalorder %s316, %s330
      %p332 = scmp.eq.s32.totalorder %s33, 0
      %p333 = por %p331, %p332
      %s335 = sadd.s32 %s334, 1
      %p338 = scmp.eq.s32.totalorder %s27, 1
      %p339 = scmp.ne.s32.totalorder %s334, %s336
      %p340 = scmp.eq.s32.totalorder %s27, 0
      %p341 = por %p339, %p340
      %p342 = scmp.ne.s32.totalorder %s334, %s336
      %p343 = scmp.eq.s32.totalorder %s32, 1
      %p344 = por %p342, %p343
      %p345 = scmp.ne.s32.totalorder %s336, %s337
      %p346 = scmp.eq.s32.totalorder %s32, 0
      %p347 = por %p345, %p346
      %p348 = scmp.ne.s32.totalorder %s336, %s337
      %p349 = scmp.eq.s32.totalorder %s33, 1
      %p350 = por %p348, %p349
      %p352 = scmp.ne.s32.totalorder %s337, %s351
      %p353 = scmp.eq.s32.totalorder %s33, 0
      %p354 = por %p352, %p353
      %s356 = sadd.s32 %s355, 1
      %p359 = scmp.eq.s32.totalorder %s27, 1
      %p360 = scmp.ne.s32.totalorder %s355, %s357
      %p361 = scmp.eq.s32.totalorder %s27, 0
      %p362 = por %p360, %p361
      %p363 = scmp.ne.s32.totalorder %s355, %s357
      %p364 = scmp.eq.s32.totalorder %s32, 1
      %p365 = por %p363, %p364
      %p366 = scmp.ne.s32.totalorder %s357, %s358
      %p367 = scmp.eq.s32.totalorder %s32, 0
      %p368 = por %p366, %p367
      %p369 = scmp.ne.s32.totalorder %s357, %s358
      %p370 = scmp.eq.s32.totalorder %s33, 1
      %p371 = por %p369, %p370
      %p373 = scmp.ne.s32.totalorder %s358, %s372
      %p374 = scmp.eq.s32.totalorder %s33, 0
      %p375 = por %p373, %p374
      %s377 = sadd.s32 %s376, 1
      %p380 = scmp.eq.s32.totalorder %s27, 1
      %p381 = scmp.ne.s32.totalorder %s376, %s378
      %p382 = scmp.eq.s32.totalorder %s27, 0
      %p383 = por %p381, %p382
      %p384 = scmp.ne.s32.totalorder %s376, %s378
      %p385 = scmp.eq.s32.totalorder %s32, 1
      %p386 = por %p384, %p385
      %p387 = scmp.ne.s32.totalorder %s378, %s379
      %p388 = scmp.eq.s32.totalorder %s32, 0
      %p389 = por %p387, %p388
      %p390 = scmp.ne.s32.totalorder %s378, %s379
      %p391 = scmp.eq.s32.totalorder %s33, 1
      %p392 = por %p390, %p391
      %p394 = scmp.ne.s32.totalorder %s379, %s393
      %p395 = scmp.eq.s32.totalorder %s33, 0
      %p396 = por %p394, %p395
      %s398 = sadd.s32 %s397, 1
      %p401 = scmp.eq.s32.totalorder %s27, 1
      %p402 = scmp.ne.s32.totalorder %s397, %s399
      %p403 = scmp.eq.s32.totalorder %s27, 0
      %p404 = por %p402, %p403
      %p405 = scmp.ne.s32.totalorder %s397, %s399
      %p406 = scmp.eq.s32.totalorder %s32, 1
      %p407 = por %p405, %p406
      %p408 = scmp.ne.s32.totalorder %s399, %s400
      %p409 = scmp.eq.s32.totalorder %s32, 0
      %p410 = por %p408, %p409
      %p411 = scmp.ne.s32.totalorder %s399, %s400
      %p412 = scmp.eq.s32.totalorder %s33, 1
      %p413 = por %p411, %p412
      %p415 = scmp.ne.s32.totalorder %s400, %s414
      %p416 = scmp.eq.s32.totalorder %s33, 0
      %p417 = por %p415, %p416
      %s418 = ssub.s32 %s27, %s34
      %p419 = scmp.eq.s32.totalorder %s418, 0
      %s421 = sadd.s32 %s420, 1
      %s422 = scalar_select %p419, %s420, %s421
      %p425 = pneg %p419
      %p426 = scmp.eq.s32.totalorder %s27, 1
      %p427 = por %p425, %p426
      %p428 = scmp.ne.s32.totalorder %s420, %s423
      %p429 = scmp.eq.s32.totalorder %s27, 0
      %p430 = por %p428, %p429
      %p431 = scmp.ne.s32.totalorder %s420, %s423
      %p432 = scmp.eq.s32.totalorder %s32, 1
      %p433 = por %p431, %p432
      %p434 = scmp.ne.s32.totalorder %s423, %s424
      %p435 = scmp.eq.s32.totalorder %s32, 0
      %p436 = por %p434, %p435
      %p437 = scmp.ne.s32.totalorder %s423, %s424
      %p438 = scmp.eq.s32.totalorder %s33, 1
      %p439 = por %p437, %p438
      %p441 = scmp.ne.s32.totalorder %s424, %s440
      %p442 = scmp.eq.s32.totalorder %s33, 0
      %p443 = por %p441, %p442
      %p444 = scmp.le.s32.totalorder 1, %s27
      %p445 = scmp.lt.s32.totalorder %s27, 3
      %p446 = pnand %p444, %p445
      %p447 = pneg %p446
      // Predicated region
      $region9: #{model_forward.5} parent=5 // pred_check
        _
      $region10: #{model_forward.5} parent=5 // pred_check_branch
        %449 = sbr.rel (%p446) target = $region12
      $region11: #{model_forward.5} parent=5 // pred_region
        %s450 = ssub.s32 %s27, 1
        // Predicated region
        $region13: #{model_forward.5} parent=11 // pred_check
          %p451 = pneg %p74
        $region14: #{model_forward.5} parent=11 // pred_check_branch
          %453 = sbr.rel (%p451) target = $region16
        $region15: #{model_forward.5} parent=11 // pred_region
          _
        $region16: #{model_forward.5} parent=11 // pred_fallthru
          _
        // Predicated region
        $region17: #{model_forward.5} parent=11 // pred_check
          %p454 = pneg %p95
        $region18: #{model_forward.5} parent=11 // pred_check_branch
          %456 = sbr.rel (%p454) target = $region20
        $region19: #{model_forward.5} parent=11 // pred_region
          _
        $region20: #{model_forward.5} parent=11 // pred_fallthru
          _
        // Predicated region
        $region21: #{model_forward.5} parent=11 // pred_check
          %p457 = pneg %p116
        $region22: #{model_forward.5} parent=11 // pred_check_branch
          %459 = sbr.rel (%p457) target = $region24
        $region23: #{model_forward.5} parent=11 // pred_region
          _
        $region24: #{model_forward.5} parent=11 // pred_fallthru
          _
        // Predicated region
        $region25: #{model_forward.5} parent=11 // pred_check
          %p460 = pneg %p137
        $region26: #{model_forward.5} parent=11 // pred_check_branch
          %462 = sbr.rel (%p460) target = $region28
        $region27: #{model_forward.5} parent=11 // pred_region
          _
        $region28: #{model_forward.5} parent=11 // pred_fallthru
          _
        // Predicated region
        $region29: #{model_forward.5} parent=11 // pred_check
          %p463 = pneg %p158
        $region30: #{model_forward.5} parent=11 // pred_check_branch
          %465 = sbr.rel (%p463) target = $region32
        $region31: #{model_forward.5} parent=11 // pred_region
          _
        $region32: #{model_forward.5} parent=11 // pred_fallthru
          _
        // Predicated region
        $region33: #{model_forward.5} parent=11 // pred_check
          %p466 = pneg %p179
        $region34: #{model_forward.5} parent=11 // pred_check_branch
          %468 = sbr.rel (%p466) target = $region36
        $region35: #{model_forward.5} parent=11 // pred_region
          _
        $region36: #{model_forward.5} parent=11 // pred_fallthru
          _
        // Predicated region
        $region37: #{model_forward.5} parent=11 // pred_check
          %p469 = pneg %p200
        $region38: #{model_forward.5} parent=11 // pred_check_branch
          %471 = sbr.rel (%p469) target = $region40
        $region39: #{model_forward.5} parent=11 // pred_region
          _
        $region40: #{model_forward.5} parent=11 // pred_fallthru
          _
        // Predicated region
        $region41: #{model_forward.5} parent=11 // pred_check
          %p472 = pneg %p221
        $region42: #{model_forward.5} parent=11 // pred_check_branch
          %474 = sbr.rel (%p472) target = $region44
        $region43: #{model_forward.5} parent=11 // pred_region
          _
        $region44: #{model_forward.5} parent=11 // pred_fallthru
          _
        // Predicated region
        $region45: #{model_forward.5} parent=11 // pred_check
          %p475 = pneg %p242
        $region46: #{model_forward.5} parent=11 // pred_check_branch
          %477 = sbr.rel (%p475) target = $region48
        $region47: #{model_forward.5} parent=11 // pred_region
          _
        $region48: #{model_forward.5} parent=11 // pred_fallthru
          _
        // Predicated region
        $region49: #{model_forward.5} parent=11 // pred_check
          %p478 = pneg %p263
        $region50: #{model_forward.5} parent=11 // pred_check_branch
          %480 = sbr.rel (%p478) target = $region52
        $region51: #{model_forward.5} parent=11 // pred_region
          _
        $region52: #{model_forward.5} parent=11 // pred_fallthru
          _
        // Predicated region
        $region53: #{model_forward.5} parent=11 // pred_check
          %p481 = pneg %p284
        $region54: #{model_forward.5} parent=11 // pred_check_branch
          %483 = sbr.rel (%p481) target = $region56
        $region55: #{model_forward.5} parent=11 // pred_region
          _
        $region56: #{model_forward.5} parent=11 // pred_fallthru
          _
        // Predicated region
        $region57: #{model_forward.5} parent=11 // pred_check
          %p484 = pneg %p305
        $region58: #{model_forward.5} parent=11 // pred_check_branch
          %486 = sbr.rel (%p484) target = $region60
        $region59: #{model_forward.5} parent=11 // pred_region
          _
        $region60: #{model_forward.5} parent=11 // pred_fallthru
          _
        // Predicated region
        $region61: #{model_forward.5} parent=11 // pred_check
          %p487 = pneg %p326
        $region62: #{model_forward.5} parent=11 // pred_check_branch
          %489 = sbr.rel (%p487) target = $region64
        $region63: #{model_forward.5} parent=11 // pred_region
          _
        $region64: #{model_forward.5} parent=11 // pred_fallthru
          _
        // Predicated region
        $region65: #{model_forward.5} parent=11 // pred_check
          %p490 = pneg %p347
        $region66: #{model_forward.5} parent=11 // pred_check_branch
          %492 = sbr.rel (%p490) target = $region68
        $region67: #{model_forward.5} parent=11 // pred_region
          _
        $region68: #{model_forward.5} parent=11 // pred_fallthru
          _
        // Predicated region
        $region69: #{model_forward.5} parent=11 // pred_check
          %p493 = pneg %p368
        $region70: #{model_forward.5} parent=11 // pred_check_branch
          %495 = sbr.rel (%p493) target = $region72
        $region71: #{model_forward.5} parent=11 // pred_region
          _
        $region72: #{model_forward.5} parent=11 // pred_fallthru
          _
        // Predicated region
        $region73: #{model_forward.5} parent=11 // pred_check
          %p496 = pneg %p389
        $region74: #{model_forward.5} parent=11 // pred_check_branch
          %498 = sbr.rel (%p496) target = $region76
        $region75: #{model_forward.5} parent=11 // pred_region
          _
        $region76: #{model_forward.5} parent=11 // pred_fallthru
          _
        // Predicated region
        $region77: #{model_forward.5} parent=11 // pred_check
          %p499 = pneg %p410
        $region78: #{model_forward.5} parent=11 // pred_check_branch
          %501 = sbr.rel (%p499) target = $region80
        $region79: #{model_forward.5} parent=11 // pred_region
          _
        $region80: #{model_forward.5} parent=11 // pred_fallthru
          _
      $region12: #{model_forward.5} parent=5 // pred_fallthru
        _
      %p502 = scmp.lt.s32.totalorder %s27, 2
      // Predicated region
      $region81: #{model_forward.5} parent=5 // pred_check
        %p503 = pneg %p502
      $region82: #{model_forward.5} parent=5 // pred_check_branch
        %505 = sbr.rel (%p503) target = $region84
      $region83: #{model_forward.5} parent=5 // pred_region
        // Predicated region
        $region85: #{model_forward.5} parent=83 // pred_check
          %p506 = pneg %p47
        $region86: #{model_forward.5} parent=83 // pred_check_branch
          %508 = sbr.rel (%p506) target = $region88
        $region87: #{model_forward.5} parent=83 // pred_region
          %p509 = scmp.lt.s32.totalorder %s27, 1
          %s510 = scalar_select %p509, %s27, 1
          %s511 = smul.addr %s510, 3
          %s512 = smul.addr %s511, 8
          %s513 = scalar_lea.vmem %s0, %s512
        $region88: #{model_forward.5} parent=83 // pred_fallthru
          _
      $region84: #{model_forward.5} parent=5 // pred_fallthru
        _
      %p514 = scmp.le.s32.totalorder 1, %s27
      %p515 = scmp.lt.s32.totalorder %s27, 3
      %p516 = pnand %p514, %p515
      %p517 = pneg %p516
      // Predicated region
      $region89: #{model_forward.5} parent=5 // pred_check
        _
      $region90: #{model_forward.5} parent=5 // pred_check_branch
        %519 = sbr.rel (%p516) target = $region92
      $region91: #{model_forward.5} parent=5 // pred_region
        %s520 = ssub.s32 %s27, 1
        %p521 = scmp.lt.s32.totalorder %s32, 1
        %s522 = scalar_select %p521, %s32, 1
        %s523 = smul.addr %s522, 3
        %s524 = smul.addr %s523, 8
        %s525 = scalar_lea.vmem %s0, %s524
        %p526 = pneg %p53
        %p527 = pneg %p50
        %p528 = pneg %p74
        %p529 = pneg %p71
        %p530 = pneg %p95
        %p531 = pneg %p92
        %p532 = pneg %p116
        %p533 = pneg %p113
        %p534 = pneg %p137
        %p535 = pneg %p134
        %p536 = pneg %p158
        %p537 = pneg %p155
        %p538 = pneg %p179
        %p539 = pneg %p176
        %p540 = pneg %p200
        %p541 = pneg %p197
        %p542 = pneg %p221
        %p543 = pneg %p218
        %p544 = pneg %p242
        %p545 = pneg %p239
        %p546 = pneg %p263
        %p547 = pneg %p260
        %p548 = pneg %p284
        %p549 = pneg %p281
        %p550 = pneg %p305
        %p551 = pneg %p302
        %p552 = pneg %p326
        %p553 = pneg %p323
        %p554 = pneg %p347
        %p555 = pneg %p344
        %p556 = pneg %p368
        %p557 = pneg %p365
        %p558 = pneg %p389
        %p559 = pneg %p386
        %p560 = pneg %p410
        %p561 = pneg %p407
        %p562 = pneg %p436
        %p563 = pneg %p433
        %s564 = sand.u32 %s423, 1
        %s565 = scalar_lea.sflag [#allocation3], %s564
        %s566 = sand.u32 %s423, 1
        %s567 = scalar_lea.vmem [#allocation2], %s566
        %p568 = scmp.lt.s32.totalorder %s32, 1
        %s569 = scalar_select %p568, %s32, 1
        %s570 = smul.addr %s569, 3
        %s571 = smul.addr %s570, 8
        %s572 = scalar_lea.vmem %s0, %s571
        %v574 = vld [vmem:[%s572] sm:$0xff]
        %v575 = vld [vmem:[%s572 + $0x8] sm:$0xff]
        %v576 = vld [vmem:[%s572 + $0x10] sm:$0x3]
        %v577 = vld [vmem:[%s1] sm:$0xff]
        %v578 = vld [vmem:[%s1 + $0x8] sm:$0xff]
        %v579 = vld [vmem:[%s1 + $0x10] sm:$0x3]
        %v580 = vld [vmem:[%s2] sm:$0xff]
        %v581 = vld [vmem:[%s2 + $0x8] sm:$0xff]
        %v582 = vld [vmem:[%s2 + $0x10] sm:$0x3]
        %v583 = vld [vmem:[%s3] sm:$0xff]
        %v584 = vld [vmem:[%s3 + $0x8] sm:$0xff]
        %v585 = vld [vmem:[%s3 + $0x10] sm:$0xff]
        %v586 = vld [vmem:[%s3 + $0x18] sm:$0xff]
        %v587 = vld [vmem:[%s4] sm:$0xff]
        %v588 = vld [vmem:[%s4 + $0x8] sm:$0xff]
        %v589 = vld [vmem:[%s4 + $0x10] sm:$0xff]
        %v590 = vld [vmem:[%s4 + $0x18] sm:$0xff]
        %v591 = vld [vmem:[%s5] sm:$0x1]
        %v592 = vld [vmem:[%s6] sm:$0xff]
        %v593 = vld [vmem:[%s6 + $0x8] sm:$0xff]
        %v594 = vld [vmem:[%s6 + $0x10] sm:$0xff]
        %v595 = vld [vmem:[%s6 + $0x18] sm:$0xff]
        %v596 = vld [vmem:[%s7] sm:$0x1]
        %v597 = vld [vmem:[%s8] sm:$0x1]
        %v598 = vld [vmem:[%s9] sm:$0x1]
        %v599 = vld [vmem:[%s10] sm:$0x1]
        %v600 = vld [vmem:[%s11] sm:$0x1]
        %v601 = vld [vmem:[%s12] sm:$0xff]
        %v602 = vld [vmem:[%s12 + $0x8] sm:$0xff]
        %v603 = vld [vmem:[%s12 + $0x10] sm:$0xff]
        %v604 = vld [vmem:[%s12 + $0x18] sm:$0xff]
        %v605 = vld [vmem:[%s13] sm:$0x1]
        %v606 = vld [vmem:[%s14] sm:$0xff]
        %v607 = vld [vmem:[%s14 + $0x8] sm:$0xff]
        %v608 = vld [vmem:[%s14 + $0x10] sm:$0xff]
        %v609 = vld [vmem:[%s14 + $0x18] sm:$0xff]
        %v610 = vld [vmem:[%s14 + $0x20] sm:$0xff]
        %v611 = vld [vmem:[%s14 + $0x28] sm:$0xff]
        %v612 = vld [vmem:[%s14 + $0x30] sm:$0xff]
        %v613 = vld [vmem:[%s14 + $0x38] sm:$0xff]
        %v614 = vld [vmem:[%s14 + $0x40] sm:$0xff]
        %v615 = vld [vmem:[%s14 + $0x48] sm:$0xff]
        %v616 = vld [vmem:[%s14 + $0x50] sm:$0xff]
        %v617 = vld [vmem:[%s14 + $0x58] sm:$0xff]
        %v618 = vld [vmem:[%s14 + $0x60] sm:$0xff]
        %v619 = vld [vmem:[%s14 + $0x68] sm:$0xff]
        %v620 = vld [vmem:[%s14 + $0x70] sm:$0xff]
        %v621 = vld [vmem:[%s14 + $0x78] sm:$0xff]
        %v622 = vld [vmem:[%s15] sm:$0x1]
        %vm623 = vcmask 261120
        %v624 = vsel %vm623, %v574, 0.0
        %625 = vadd.xlane.f32.xlu0 %v624
        %v626 = vpop.xlane.xlu0 %625
        %v627 = vsel %vm623, %v575, 0.0
        %628 = vadd.xlane.f32.xlu0 %v627
        %v629 = vpop.xlane.xlu0 %628
        %vm630 = vcmask 254976
        %v631 = vsel %vm630, %v576, 0.0
        %632 = vadd.xlane.f32.xlu0 %v631
        %v633 = vpop.xlane.xlu0 %632
        %v634 = vrcp.pop 32.0
        %v635 = vmul.f32 %v626, %v634
        %v636 = vmul.f32 %v629, %v634
        %v637 = vmul.f32 %v633, %v634
        %v638 = vsub.f32 %v574, %v635
        %v639 = vsub.f32 %v575, %v636
        %v640 = vsub.f32 %v576, %v637
        %v641 = vmul.f32 %v638, %v638
        %v642 = vmul.f32 %v639, %v639
        %v643 = vmul.f32 %v640, %v640
        %v644 = vsel %vm623, %v641, 0.0
        %645 = vadd.xlane.f32.xlu0 %v644
        %v646 = vpop.xlane.xlu0 %645
        %v647 = vsel %vm623, %v642, 0.0
        %648 = vadd.xlane.f32.xlu0 %v647
        %v649 = vpop.xlane.xlu0 %648
        %v650 = vsel %vm630, %v643, 0.0
        %651 = vadd.xlane.f32.xlu0 %v650
        %v652 = vpop.xlane.xlu0 %651
        %v653 = vmul.f32 %v646, %v634
        %v654 = vmul.f32 %v649, %v634
        %v655 = vmul.f32 %v652, %v634
        %v656 = vadd.f32 %v653, 1e-05
        %v657 = vadd.f32 %v654, 1e-05
        %v658 = vadd.f32 %v655, 1e-05
        %v659 = vrsqrt.pop %v656
        %v660 = vrsqrt.pop %v657
        %v661 = vrsqrt.pop %v658
        %v662 = vmul.f32 %v638, %v659
        %v663 = vmul.f32 %v639, %v660
        %v664 = vmul.f32 %v640, %v661
        %v666 = vlaneseq
        %v667 = vshrl.u32 %v666, 7
        %v668 = vsub.s32 0, %v667
        %v669 = vrot.slane %v597, %v668
        %v671 = vmul.f32 %v662, %v669
        %v672 = vmul.f32 %v663, %v669
        %v673 = vmul.f32 %v664, %v669
        %v675 = vlaneseq
        %v676 = vshrl.u32 %v675, 7
        %v677 = vsub.s32 0, %v676
        %v678 = vrot.slane %v598, %v677
        %v680 = vadd.f32 %v671, %v678
        %v681 = vadd.f32 %v672, %v678
        %v682 = vadd.f32 %v673, %v678
        %v683 = vpack.c.bf16 %v681, %v680
        %v684 = vpack.c.bf16 %v682, %v682
        %v685 = vpack.c.bf16 %v588, %v587
        %v686 = vpack.c.bf16 %v590, %v589
        %v688 = vlaneseq
        %v689 = vshrl.u32 %v688, 7
        %v690 = vsub.s32 0, %v689
        %v691 = vrot.slane %v591, %v690
        %v694 = vsel %vm623, %v683, 0
        %v697 = vsel %vm623, %v684, 0
        %699 = vmatprep.subr.bf16.mxu0 0
        %700 = vmatpush1.bf16.msra.mxu0 0
        %701 = vmatprep.subr.bf16.mxu0 0
        %702 = vmatpush1.bf16.msra.mxu0 0
        %703 = vmatprep.subr.bf16.mxu0 0
        %704 = vmatpush1.bf16.msra.mxu0 0
        %705 = vmatprep.subr.bf16.mxu0 0
        %706 = vmatpush1.bf16.msra.mxu0 0
        %707 = vmatprep.subr.bf16.mxu0 0
        %708 = vmatpush1.bf16.msra.mxu0 0
        %709 = vmatprep.subr.bf16.mxu0 0
        %710 = vmatpush1.bf16.msra.mxu0 0
        %711 = vmatprep.subr.bf16.mxu0 0
        %712 = vmatpush1.bf16.msra.mxu0 %v686
        %713 = vmatprep.subr.bf16.mxu0 0
        %714 = vmatpush1.bf16.msra.mxu0 %v685
        %715 = vmatprep.subr.bf16.mxu0 0
        %716 = vmatpush2.bf16.msra.mxu0 0
        %717 = vmatprep.subr.bf16.mxu0 0
        %718 = vmatpush2.bf16.msra.mxu0 0
        %719 = vmatprep.subr.bf16.mxu0 0
        %720 = vmatpush2.bf16.msra.mxu0 0
        %721 = vmatprep.subr.bf16.mxu0 0
        %722 = vmatpush2.bf16.msra.mxu0 0
        %723 = vmatprep.subr.bf16.mxu0 0
        %724 = vmatpush2.bf16.msra.mxu0 0
        %725 = vmatprep.subr.bf16.mxu0 0
        %726 = vmatpush2.bf16.msra.mxu0 0
        %727 = vmatprep.subr.bf16.mxu0 0
        %728 = vmatpush2.bf16.msra.mxu0 0
        %729 = vmatprep.subr.bf16.mxu0 0
        %730 = vmatpush2.bf16.msra.mxu0 0
        %731 = vmatprep.mubr.bf16.mxu0 0
        %732 = vmatmul.mubr.bf16.gmra.mxu0 %v694
        %v733 = vpop.f32.mrf.mxu0
        %v734 = vadd.f32 %v691, %v733
        %v735 = vpop.f32.mrf.mxu0
        %v736 = vpop.f32.mrf.mxu0
        %v737 = vadd.f32 %v691, %v736
        %v738 = vpop.f32.mrf.mxu0
        %739 = vmatprep.mubr.bf16.mxu0 0
        %740 = vmatmul.mubr.bf16.gmra.mxu0 %v697
        %v741 = vpop.f32.mrf.mxu0
        %v742 = vadd.f32 %v691, %v741
        %v743 = vpop.f32.mrf.mxu0
        %v744 = vpop.f32.mrf.mxu0
        %v745 = vpop.f32.mrf.mxu0
        %746 = vdwg.mxu0
        %v747 = vmax.f32 %v734, 0.0
        %v748 = vmax.f32 %v737, 0.0
        %v749 = vmax.f32 %v742, 0.0
        %751 = vset.pattern.permute.xlu0 0
        %752 = vperm.xlu0 %751, %v577
        %v753 = vpop.permute.xlu0 %752
        %756 = vset.pattern.permute.xlu0 0
        %757 = vperm.xlu0 %756, %v578
        %v758 = vpop.permute.xlu0 %757
        %761 = vset.pattern.permute.xlu0 0
        %762 = vperm.xlu0 %761, %v579
        %v763 = vpop.permute.xlu0 %762
        %v765 = vmul.f32 %v747, %v753
        %v766 = vmul.f32 %v748, %v758
        %v767 = vmul.f32 %v749, %v763
        %769 = vset.pattern.permute.xlu0 0
        %770 = vperm.xlu0 %769, %v580
        %v771 = vpop.permute.xlu0 %770
        %774 = vset.pattern.permute.xlu0 0
        %775 = vperm.xlu0 %774, %v581
        %v776 = vpop.permute.xlu0 %775
        %779 = vset.pattern.permute.xlu0 0
        %780 = vperm.xlu0 %779, %v582
        %v781 = vpop.permute.xlu0 %780
        %v783 = vmul.f32 %v747, %v771
        %v784 = vmul.f32 %v748, %v776
        %v785 = vmul.f32 %v749, %v781
        %v786 = vpack.c.bf16 %v766, %v765
        %v787 = vpack.c.bf16 %v767, %v767
        %v788 = vpack.c.bf16 %v737, %v734
        %v789 = vpack.c.bf16 %v742, %v742
        %792 = vrot.lane.b32.xlu0 %v786, 96
        %v793 = vpop.permute.xlu0 %792
        %794 = vrot.lane.b32.xlu0 %v787, 96
        %v795 = vpop.permute.xlu0 %794
        %798 = vxpose.xlu0.c.b16.start [1/8] %v793, 128
        %799 = vxpose.xlu0.c.b16.cont [2/8] %v795, 128
        %800 = vxpose.xlu0.c.b16.cont [3/8] 0, 128
        %801 = vxpose.xlu0.c.b16.cont [4/8] 0, 128
        %802 = vxpose.xlu0.c.b16.cont [5/8] 0, 128
        %803 = vxpose.xlu0.c.b16.cont [6/8] 0, 128
        %804 = vxpose.xlu0.c.b16.cont [7/8] 0, 128
        %805 = vxpose.xlu0.c.b16.end [8/8] 0, 128
        %v806 = vpop.trf.xlu0
        %v807 = vpop.trf.xlu0
        %v808 = vpop.trf.xlu0
        %v809 = vpop.trf.xlu0
        %v810 = vpop.trf.xlu0
        %v811 = vpop.trf.xlu0
        %v812 = vpop.trf.xlu0
        %v813 = vpop.trf.xlu0
        %816 = vrot.lane.b32.xlu0 %v788, 64
        %v817 = vpop.permute.xlu0 %816
        %818 = vrot.lane.b32.xlu0 %v789, 64
        %v819 = vpop.permute.xlu0 %818
        %vm821 = vcmask 146432
        %v823 = vsel %vm821, %v806, 0
        %v826 = vsel %vm821, %v807, 0
        %vm828 = vcmask 1040384
        %v830 = vsel %vm828, %v819, 0
        %832 = vmatprep.subr.bf16.mxu0 0
        %833 = vmatpush1.bf16.msra.mxu0 0
        %834 = vmatprep.subr.bf16.mxu0 0
        %835 = vmatpush1.bf16.msra.mxu0 0
        %836 = vmatprep.subr.bf16.mxu0 0
        %837 = vmatpush1.bf16.msra.mxu0 0
        %838 = vmatprep.subr.bf16.mxu0 0
        %839 = vmatpush1.bf16.msra.mxu0 0
        %840 = vmatprep.subr.bf16.mxu0 0
        %841 = vmatpush1.bf16.msra.mxu0 0
        %842 = vmatprep.subr.bf16.mxu0 0
        %843 = vmatpush1.bf16.msra.mxu0 0
        %844 = vmatprep.subr.bf16.mxu0 0
        %845 = vmatpush1.bf16.msra.mxu0 %v830
        %846 = vmatprep.subr.bf16.mxu0 0
        %847 = vmatpush1.bf16.msra.mxu0 %v817
        %848 = vmatprep.subr.bf16.mxu0 0
        %849 = vmatpush2.bf16.msra.mxu0 0
        %850 = vmatprep.subr.bf16.mxu0 0
        %851 = vmatpush2.bf16.msra.mxu0 0
        %852 = vmatprep.subr.bf16.mxu0 0
        %853 = vmatpush2.bf16.msra.mxu0 0
        %854 = vmatprep.subr.bf16.mxu0 0
        %855 = vmatpush2.bf16.msra.mxu0 0
        %856 = vmatprep.subr.bf16.mxu0 0
        %857 = vmatpush2.bf16.msra.mxu0 0
        %858 = vmatprep.subr.bf16.mxu0 0
        %859 = vmatpush2.bf16.msra.mxu0 0
        %860 = vmatprep.subr.bf16.mxu0 0
        %861 = vmatpush2.bf16.msra.mxu0 0
        %862 = vmatprep.subr.bf16.mxu0 0
        %863 = vmatpush2.bf16.msra.mxu0 0
        %864 = vmatprep.mubr.bf16.mxu0 0
        %865 = vmatmul.mubr.bf16.gmra.mxu0 %v823
        %v866 = vpop.f32.mrf.mxu0
        %v867 = vadd.f32 0.0, %v866
        %v868 = vpop.f32.mrf.mxu0
        %v869 = vpop.f32.mrf.mxu0
        %v870 = vadd.f32 0.0, %v869
        %v871 = vpop.f32.mrf.mxu0
        %872 = vmatprep.mubr.bf16.mxu0 0
        %873 = vmatmul.mubr.bf16.gmra.mxu0 %v826
        %v874 = vpop.f32.mrf.mxu0
        %v875 = vadd.f32 0.0, %v874
        %v876 = vpop.f32.mrf.mxu0
        %v877 = vpop.f32.mrf.mxu0
        %v878 = vadd.f32 0.0, %v877
        %v879 = vpop.f32.mrf.mxu0
        %880 = vdwg.mxu0
        %v881 = vmul.f32 %v867, %v583
        %v882 = vmul.f32 %v870, %v584
        %v883 = vmul.f32 %v875, %v585
        %v884 = vmul.f32 %v878, %v586
        %v885 = vpack.c.bf16 %v784, %v783
        %v886 = vpack.c.bf16 %v785, %v785
        %889 = vrot.lane.b32.xlu0 %v885, 96
        %v890 = vpop.permute.xlu0 %889
        %891 = vrot.lane.b32.xlu0 %v886, 96
        %v892 = vpop.permute.xlu0 %891
        %895 = vxpose.xlu0.c.b16.start [1/8] %v890, 128
        %896 = vxpose.xlu0.c.b16.cont [2/8] %v892, 128
        %897 = vxpose.xlu0.c.b16.cont [3/8] 0, 128
        %898 = vxpose.xlu0.c.b16.cont [4/8] 0, 128
        %899 = vxpose.xlu0.c.b16.cont [5/8] 0, 128
        %900 = vxpose.xlu0.c.b16.cont [6/8] 0, 128
        %901 = vxpose.xlu0.c.b16.cont [7/8] 0, 128
        %902 = vxpose.xlu0.c.b16.end [8/8] 0, 128
        %v903 = vpop.trf.xlu0
        %v904 = vpop.trf.xlu0
        %v905 = vpop.trf.xlu0
        %v906 = vpop.trf.xlu0
        %v907 = vpop.trf.xlu0
        %v908 = vpop.trf.xlu0
        %v909 = vpop.trf.xlu0
        %v910 = vpop.trf.xlu0
        %v912 = vsel %vm821, %v903, 0
        %v915 = vsel %vm821, %v904, 0
        %917 = vmatprep.subr.bf16.mxu0 0
        %918 = vmatpush1.bf16.msra.mxu0 0
        %919 = vmatprep.subr.bf16.mxu0 0
        %920 = vmatpush1.bf16.msra.mxu0 0
        %921 = vmatprep.subr.bf16.mxu0 0
        %922 = vmatpush1.bf16.msra.mxu0 0
        %923 = vmatprep.subr.bf16.mxu0 0
        %924 = vmatpush1.bf16.msra.mxu0 0
        %925 = vmatprep.subr.bf16.mxu0 0
        %926 = vmatpush1.bf16.msra.mxu0 0
        %927 = vmatprep.subr.bf16.mxu0 0
        %928 = vmatpush1.bf16.msra.mxu0 0
        %929 = vmatprep.subr.bf16.mxu0 0
        %930 = vmatpush1.bf16.msra.mxu0 %v830
        %931 = vmatprep.subr.bf16.mxu0 0
        %932 = vmatpush1.bf16.msra.mxu0 %v817
        %933 = vmatprep.subr.bf16.mxu0 0
        %934 = vmatpush2.bf16.msra.mxu0 0
        %935 = vmatprep.subr.bf16.mxu0 0
        %936 = vmatpush2.bf16.msra.mxu0 0
        %937 = vmatprep.subr.bf16.mxu0 0
        %938 = vmatpush2.bf16.msra.mxu0 0
        %939 = vmatprep.subr.bf16.mxu0 0
        %940 = vmatpush2.bf16.msra.mxu0 0
        %941 = vmatprep.subr.bf16.mxu0 0
        %942 = vmatpush2.bf16.msra.mxu0 0
        %943 = vmatprep.subr.bf16.mxu0 0
        %944 = vmatpush2.bf16.msra.mxu0 0
        %945 = vmatprep.subr.bf16.mxu0 0
        %946 = vmatpush2.bf16.msra.mxu0 0
        %947 = vmatprep.subr.bf16.mxu0 0
        %948 = vmatpush2.bf16.msra.mxu0 0
        %949 = vmatprep.mubr.bf16.mxu0 0
        %950 = vmatmul.mubr.bf16.gmra.mxu0 %v912
        %v951 = vpop.f32.mrf.mxu0
        %v952 = vadd.f32 0.0, %v951
        %v953 = vpop.f32.mrf.mxu0
        %v954 = vpop.f32.mrf.mxu0
        %v955 = vadd.f32 0.0, %v954
        %v956 = vpop.f32.mrf.mxu0
        %957 = vmatprep.mubr.bf16.mxu0 0
        %958 = vmatmul.mubr.bf16.gmra.mxu0 %v915
        %v959 = vpop.f32.mrf.mxu0
        %v960 = vadd.f32 0.0, %v959
        %v961 = vpop.f32.mrf.mxu0
        %v962 = vpop.f32.mrf.mxu0
        %v963 = vadd.f32 0.0, %v962
        %v964 = vpop.f32.mrf.mxu0
        %965 = vdwg.mxu0
        %v966 = vmul.f32 %v952, %v583
        %v967 = vmul.f32 %v955, %v584
        %v968 = vmul.f32 %v960, %v585
        %v969 = vmul.f32 %v963, %v586
        %v970 = vpack.c.bf16 %v882, %v881
        %v971 = vpack.c.bf16 %v884, %v883
        %v972 = vpack.c.bf16 %v967, %v966
        %v973 = vpack.c.bf16 %v969, %v968
        %v975 = vsel %vm623, %v885, 0
        %v978 = vsel %vm623, %v886, 0
        %980 = vmatprep.subr.bf16.mxu0 0
        %981 = vmatpush1.bf16.msra.mxu0 0
        %982 = vmatprep.subr.bf16.mxu0 0
        %983 = vmatpush1.bf16.msra.mxu0 0
        %984 = vmatprep.subr.bf16.mxu0 0
        %985 = vmatpush1.bf16.msra.mxu0 0
        %986 = vmatprep.subr.bf16.mxu0 0
        %987 = vmatpush1.bf16.msra.mxu0 0
        %988 = vmatprep.subr.bf16.mxu0 0
        %989 = vmatpush1.bf16.msra.mxu0 0
        %990 = vmatprep.subr.bf16.mxu0 0
        %991 = vmatpush1.bf16.msra.mxu0 0
        %992 = vmatprep.subr.bf16.mxu0 0
        %993 = vmatpush1.bf16.msra.mxu0 %v973
        %994 = vmatprep.subr.bf16.mxu0 0
        %995 = vmatpush1.bf16.msra.mxu0 %v972
        %996 = vmatprep.subr.bf16.mxu0 0
        %997 = vmatpush2.bf16.msra.mxu0 0
        %998 = vmatprep.subr.bf16.mxu0 0
        %999 = vmatpush2.bf16.msra.mxu0 0
        %1000 = vmatprep.subr.bf16.mxu0 0
        %1001 = vmatpush2.bf16.msra.mxu0 0
        %1002 = vmatprep.subr.bf16.mxu0 0
        %1003 = vmatpush2.bf16.msra.mxu0 0
        %1004 = vmatprep.subr.bf16.mxu0 0
        %1005 = vmatpush2.bf16.msra.mxu0 0
        %1006 = vmatprep.subr.bf16.mxu0 0
        %1007 = vmatpush2.bf16.msra.mxu0 0
        %1008 = vmatprep.subr.bf16.mxu0 0
        %1009 = vmatpush2.bf16.msra.mxu0 0
        %1010 = vmatprep.subr.bf16.mxu0 0
        %1011 = vmatpush2.bf16.msra.mxu0 0
        %1012 = vmatprep.mubr.bf16.mxu0 0
        %1013 = vmatmul.mubr.bf16.gmra.mxu0 %v975
        %v1014 = vpop.f32.mrf.mxu0
        %v1015 = vadd.f32 0.0, %v1014
        %v1016 = vpop.f32.mrf.mxu0
        %v1017 = vpop.f32.mrf.mxu0
        %v1018 = vadd.f32 0.0, %v1017
        %v1019 = vpop.f32.mrf.mxu0
        %1020 = vmatprep.mubr.bf16.mxu0 0
        %1021 = vmatmul.mubr.bf16.gmra.mxu0 %v978
        %v1022 = vpop.f32.mrf.mxu0
        %v1023 = vadd.f32 0.0, %v1022
        %v1024 = vpop.f32.mrf.mxu0
        %v1025 = vpop.f32.mrf.mxu0
        %v1026 = vpop.f32.mrf.mxu0
        %1027 = vdwg.mxu0
        %v1029 = vsel %vm623, %v786, 0
        %v1032 = vsel %vm623, %v787, 0
        %1034 = vmatprep.subr.bf16.mxu0 0
        %1035 = vmatpush1.bf16.msra.mxu0 0
        %1036 = vmatprep.subr.bf16.mxu0 0
        %1037 = vmatpush1.bf16.msra.mxu0 0
        %1038 = vmatprep.subr.bf16.mxu0 0
        %1039 = vmatpush1.bf16.msra.mxu0 0
        %1040 = vmatprep.subr.bf16.mxu0 0
        %1041 = vmatpush1.bf16.msra.mxu0 0
        %1042 = vmatprep.subr.bf16.mxu0 0
        %1043 = vmatpush1.bf16.msra.mxu0 0
        %1044 = vmatprep.subr.bf16.mxu0 0
        %1045 = vmatpush1.bf16.msra.mxu0 0
        %1046 = vmatprep.subr.bf16.mxu0 0
        %1047 = vmatpush1.bf16.msra.mxu0 %v971
        %1048 = vmatprep.subr.bf16.mxu0 0
        %1049 = vmatpush1.bf16.msra.mxu0 %v970
        %1050 = vmatprep.subr.bf16.mxu0 0
        %1051 = vmatpush2.bf16.msra.mxu0 0
        %1052 = vmatprep.subr.bf16.mxu0 0
        %1053 = vmatpush2.bf16.msra.mxu0 0
        %1054 = vmatprep.subr.bf16.mxu0 0
        %1055 = vmatpush2.bf16.msra.mxu0 0
        %1056 = vmatprep.subr.bf16.mxu0 0
        %1057 = vmatpush2.bf16.msra.mxu0 0
        %1058 = vmatprep.subr.bf16.mxu0 0
        %1059 = vmatpush2.bf16.msra.mxu0 0
        %1060 = vmatprep.subr.bf16.mxu0 0
        %1061 = vmatpush2.bf16.msra.mxu0 0
        %1062 = vmatprep.subr.bf16.mxu0 0
        %1063 = vmatpush2.bf16.msra.mxu0 0
        %1064 = vmatprep.subr.bf16.mxu0 0
        %1065 = vmatpush2.bf16.msra.mxu0 0
        %1066 = vmatprep.mubr.bf16.mxu0 0
        %1067 = vmatmul.mubr.bf16.gmra.mxu0 %v1029
        %v1068 = vpop.f32.mrf.mxu0
        %v1069 = vadd.f32 %v1015, %v1068
        %v1070 = vpop.f32.mrf.mxu0
        %v1071 = vpop.f32.mrf.mxu0
        %v1072 = vadd.f32 %v1018, %v1071
        %v1073 = vpop.f32.mrf.mxu0
        %1074 = vmatprep.mubr.bf16.mxu0 0
        %1075 = vmatmul.mubr.bf16.gmra.mxu0 %v1032
        %v1076 = vpop.f32.mrf.mxu0
        %v1077 = vadd.f32 %v1023, %v1076
        %v1078 = vpop.f32.mrf.mxu0
        %v1079 = vpop.f32.mrf.mxu0
        %v1080 = vpop.f32.mrf.mxu0
        %1081 = vdwg.mxu0
        %vm1082 = vcmask 523520
        %v1083 = vsel %vm1082, %v765, 0.0
        %v1084 = vsel %vm1082, %v766, 0.0
        %v1085 = vadd.f32 %v1083, %v1084
        %vm1086 = vcmask 517376
        %v1087 = vsel %vm1086, %v767, 0.0
        %v1088 = vadd.f32 %v1085, %v1087
        %v1089 = vrot.slane %v1088, 4
        %v1090 = vadd.f32 %v1088, %v1089
        %v1091 = vrot.slane %v1090, 2
        %v1092 = vadd.f32 %v1090, %v1091
        %v1093 = vrot.slane %v1092, 1
        %v1094 = vadd.f32 %v1092, %v1093
        %v1095 = vsel %vm1082, %v783, 0.0
        %v1096 = vsel %vm1082, %v784, 0.0
        %v1097 = vadd.f32 %v1095, %v1096
        %v1098 = vsel %vm1086, %v785, 0.0
        %v1099 = vadd.f32 %v1097, %v1098
        %v1100 = vrot.slane %v1099, 4
        %v1101 = vadd.f32 %v1099, %v1100
        %v1102 = vrot.slane %v1101, 2
        %v1103 = vadd.f32 %v1101, %v1102
        %v1104 = vrot.slane %v1103, 1
        %v1105 = vadd.f32 %v1103, %v1104
        %1107 = vrot.lane.b32.xlu0 %v1094, 96
        %v1108 = vpop.permute.xlu0 %1107
        %v1110 = vmul.f32 %v765, %v1108
        %v1111 = vmul.f32 %v766, %v1108
        %v1112 = vmul.f32 %v767, %v1108
        %1114 = vrot.lane.b32.xlu0 %v1105, 96
        %v1115 = vpop.permute.xlu0 %1114
        %v1117 = vmul.f32 %v783, %v1115
        %v1118 = vmul.f32 %v784, %v1115
        %v1119 = vmul.f32 %v785, %v1115
        %v1120 = vadd.f32 %v1110, %v1117
        %v1121 = vadd.f32 %v1111, %v1118
        %v1122 = vadd.f32 %v1112, %v1119
        %v1123 = vpack.c.bf16 %v1121, %v1120
        %v1124 = vpack.c.bf16 %v1122, %v1122
        %v1125 = vpack.c.bf16 %v584, %v583
        %v1126 = vpack.c.bf16 %v586, %v585
        %v1128 = vsel %vm623, %v1123, 0
        %v1131 = vsel %vm623, %v1124, 0
        %1133 = vmatprep.subr.bf16.mxu0 0
        %1134 = vmatpush1.bf16.msra.mxu0 0
        %1135 = vmatprep.subr.bf16.mxu0 0
        %1136 = vmatpush1.bf16.msra.mxu0 0
        %1137 = vmatprep.subr.bf16.mxu0 0
        %1138 = vmatpush1.bf16.msra.mxu0 0
        %1139 = vmatprep.subr.bf16.mxu0 0
        %1140 = vmatpush1.bf16.msra.mxu0 0
        %1141 = vmatprep.subr.bf16.mxu0 0
        %1142 = vmatpush1.bf16.msra.mxu0 0
        %1143 = vmatprep.subr.bf16.mxu0 0
        %1144 = vmatpush1.bf16.msra.mxu0 0
        %1145 = vmatprep.subr.bf16.mxu0 0
        %1146 = vmatpush1.bf16.msra.mxu0 %v1126
        %1147 = vmatprep.subr.bf16.mxu0 0
        %1148 = vmatpush1.bf16.msra.mxu0 %v1125
        %1149 = vmatprep.subr.bf16.mxu0 0
        %1150 = vmatpush2.bf16.msra.mxu0 0
        %1151 = vmatprep.subr.bf16.mxu0 0
        %1152 = vmatpush2.bf16.msra.mxu0 0
        %1153 = vmatprep.subr.bf16.mxu0 0
        %1154 = vmatpush2.bf16.msra.mxu0 0
        %1155 = vmatprep.subr.bf16.mxu0 0
        %1156 = vmatpush2.bf16.msra.mxu0 0
        %1157 = vmatprep.subr.bf16.mxu0 0
        %1158 = vmatpush2.bf16.msra.mxu0 0
        %1159 = vmatprep.subr.bf16.mxu0 0
        %1160 = vmatpush2.bf16.msra.mxu0 0
        %1161 = vmatprep.subr.bf16.mxu0 0
        %1162 = vmatpush2.bf16.msra.mxu0 0
        %1163 = vmatprep.subr.bf16.mxu0 0
        %1164 = vmatpush2.bf16.msra.mxu0 0
        %1165 = vmatprep.mubr.bf16.mxu0 0
        %1166 = vmatmul.mubr.bf16.gmra.mxu0 %v1128
        %v1167 = vpop.f32.mrf.mxu0
        %v1168 = vadd.f32 1e-06, %v1167
        %v1169 = vpop.f32.mrf.mxu0
        %v1170 = vpop.f32.mrf.mxu0
        %v1171 = vadd.f32 1e-06, %v1170
        %v1172 = vpop.f32.mrf.mxu0
        %1173 = vmatprep.mubr.bf16.mxu0 0
        %1174 = vmatmul.mubr.bf16.gmra.mxu0 %v1131
        %v1175 = vpop.f32.mrf.mxu0
        %v1176 = vadd.f32 1e-06, %v1175
        %v1177 = vpop.f32.mrf.mxu0
        %v1178 = vpop.f32.mrf.mxu0
        %v1179 = vpop.f32.mrf.mxu0
        %1180 = vdwg.mxu0
        %v1181 = vrcp.pop %v1168
        %v1182 = vrcp.pop %v1171
        %v1183 = vrcp.pop %v1176
        %v1184 = vmul.f32 %v1069, %v1181
        %v1185 = vmul.f32 %v1072, %v1182
        %v1186 = vmul.f32 %v1077, %v1183
        %v1187 = vpack.c.bf16 %v1185, %v1184
        %v1188 = vpack.c.bf16 %v1186, %v1186
        %v1189 = vpack.c.bf16 %v593, %v592
        %v1190 = vpack.c.bf16 %v595, %v594
        %v1192 = vsel %vm623, %v1187, 0
        %v1195 = vsel %vm623, %v1188, 0
        %1197 = vmatprep.subr.bf16.mxu0 0
        %1198 = vmatpush1.bf16.msra.mxu0 0
        %1199 = vmatprep.subr.bf16.mxu0 0
        %1200 = vmatpush1.bf16.msra.mxu0 0
        %1201 = vmatprep.subr.bf16.mxu0 0
        %1202 = vmatpush1.bf16.msra.mxu0 0
        %1203 = vmatprep.subr.bf16.mxu0 0
        %1204 = vmatpush1.bf16.msra.mxu0 0
        %1205 = vmatprep.subr.bf16.mxu0 0
        %1206 = vmatpush1.bf16.msra.mxu0 0
        %1207 = vmatprep.subr.bf16.mxu0 0
        %1208 = vmatpush1.bf16.msra.mxu0 0
        %1209 = vmatprep.subr.bf16.mxu0 0
        %1210 = vmatpush1.bf16.msra.mxu0 %v1190
        %1211 = vmatprep.subr.bf16.mxu0 0
        %1212 = vmatpush1.bf16.msra.mxu0 %v1189
        %1213 = vmatprep.subr.bf16.mxu0 0
        %1214 = vmatpush2.bf16.msra.mxu0 0
        %1215 = vmatprep.subr.bf16.mxu0 0
        %1216 = vmatpush2.bf16.msra.mxu0 0
        %1217 = vmatprep.subr.bf16.mxu0 0
        %1218 = vmatpush2.bf16.msra.mxu0 0
        %1219 = vmatprep.subr.bf16.mxu0 0
        %1220 = vmatpush2.bf16.msra.mxu0 0
        %1221 = vmatprep.subr.bf16.mxu0 0
        %1222 = vmatpush2.bf16.msra.mxu0 0
        %1223 = vmatprep.subr.bf16.mxu0 0
        %1224 = vmatpush2.bf16.msra.mxu0 0
        %1225 = vmatprep.subr.bf16.mxu0 0
        %1226 = vmatpush2.bf16.msra.mxu0 0
        %1227 = vmatprep.subr.bf16.mxu0 0
        %1228 = vmatpush2.bf16.msra.mxu0 0
        %1229 = vmatprep.mubr.bf16.mxu0 0
        %1230 = vmatmul.mubr.bf16.gmra.mxu0 %v1192
        %v1231 = vpop.f32.mrf.mxu0
        %v1232 = vadd.f32 0.0, %v1231
        %v1233 = vpop.f32.mrf.mxu0
        %v1234 = vpop.f32.mrf.mxu0
        %v1235 = vadd.f32 0.0, %v1234
        %v1236 = vpop.f32.mrf.mxu0
        %1237 = vmatprep.mubr.bf16.mxu0 0
        %1238 = vmatmul.mubr.bf16.gmra.mxu0 %v1195
        %v1239 = vpop.f32.mrf.mxu0
        %v1240 = vadd.f32 0.0, %v1239
        %v1241 = vpop.f32.mrf.mxu0
        %v1242 = vpop.f32.mrf.mxu0
        %v1243 = vpop.f32.mrf.mxu0
        %1244 = vdwg.mxu0
        %v1245 = vadd.f32 %v574, %v1232
        %v1246 = vadd.f32 %v575, %v1235
        %v1247 = vadd.f32 %v576, %v1240
        %v1249 = vlaneseq
        %v1250 = vshrl.u32 %v1249, 7
        %v1251 = vsub.s32 0, %v1250
        %v1252 = vrot.slane %v596, %v1251
        %v1254 = vadd.f32 %v1245, %v1252
        %v1255 = vadd.f32 %v1246, %v1252
        %v1256 = vadd.f32 %v1247, %v1252
        %v1257 = vsel %vm623, %v1254, 0.0
        %1258 = vadd.xlane.f32.xlu0 %v1257
        %v1259 = vpop.xlane.xlu0 %1258
        %v1260 = vsel %vm623, %v1255, 0.0
        %1261 = vadd.xlane.f32.xlu0 %v1260
        %v1262 = vpop.xlane.xlu0 %1261
        %v1263 = vsel %vm630, %v1256, 0.0
        %1264 = vadd.xlane.f32.xlu0 %v1263
        %v1265 = vpop.xlane.xlu0 %1264
        %v1266 = vmul.f32 %v1259, %v634
        %v1267 = vmul.f32 %v1262, %v634
        %v1268 = vmul.f32 %v1265, %v634
        %v1269 = vsub.f32 %v1254, %v1266
        %v1270 = vsub.f32 %v1255, %v1267
        %v1271 = vsub.f32 %v1256, %v1268
        %v1272 = vmul.f32 %v1269, %v1269
        %v1273 = vmul.f32 %v1270, %v1270
        %v1274 = vmul.f32 %v1271, %v1271
        %v1275 = vsel %vm623, %v1272, 0.0
        %1276 = vadd.xlane.f32.xlu0 %v1275
        %v1277 = vpop.xlane.xlu0 %1276
        %v1278 = vsel %vm623, %v1273, 0.0
        %1279 = vadd.xlane.f32.xlu0 %v1278
        %v1280 = vpop.xlane.xlu0 %1279
        %v1281 = vsel %vm630, %v1274, 0.0
        %1282 = vadd.xlane.f32.xlu0 %v1281
        %v1283 = vpop.xlane.xlu0 %1282
        %v1284 = vmul.f32 %v1277, %v634
        %v1285 = vmul.f32 %v1280, %v634
        %v1286 = vmul.f32 %v1283, %v634
        %v1287 = vadd.f32 %v1284, 1e-05
        %v1288 = vadd.f32 %v1285, 1e-05
        %v1289 = vadd.f32 %v1286, 1e-05
        %v1290 = vrsqrt.pop %v1287
        %v1291 = vrsqrt.pop %v1288
        %v1292 = vrsqrt.pop %v1289
        %v1293 = vmul.f32 %v1269, %v1290
        %v1294 = vmul.f32 %v1270, %v1291
        %v1295 = vmul.f32 %v1271, %v1292
        %v1297 = vlaneseq
        %v1298 = vshrl.u32 %v1297, 7
        %v1299 = vsub.s32 0, %v1298
        %v1300 = vrot.slane %v599, %v1299
        %v1302 = vmul.f32 %v1293, %v1300
        %v1303 = vmul.f32 %v1294, %v1300
        %v1304 = vmul.f32 %v1295, %v1300
        %v1306 = vlaneseq
        %v1307 = vshrl.u32 %v1306, 7
        %v1308 = vsub.s32 0, %v1307
        %v1309 = vrot.slane %v600, %v1308
        %v1311 = vadd.f32 %v1302, %v1309
        %v1312 = vadd.f32 %v1303, %v1309
        %v1313 = vadd.f32 %v1304, %v1309
        %v1314 = vpack.c.bf16 %v1312, %v1311
        %v1315 = vpack.c.bf16 %v1313, %v1313
        %v1316 = vpack.c.bf16 %v602, %v601
        %v1317 = vpack.c.bf16 %v604, %v603
        %v1319 = vlaneseq
        %v1320 = vshrl.u32 %v1319, 7
        %v1321 = vsub.s32 0, %v1320
        %v1322 = vrot.slane %v605, %v1321
        %v1325 = vsel %vm623, %v1314, 0
        %v1328 = vsel %vm623, %v1315, 0
        %1330 = vmatprep.subr.bf16.mxu0 0
        %1331 = vmatpush1.bf16.msra.mxu0 0
        %1332 = vmatprep.subr.bf16.mxu0 0
        %1333 = vmatpush1.bf16.msra.mxu0 0
        %1334 = vmatprep.subr.bf16.mxu0 0
        %1335 = vmatpush1.bf16.msra.mxu0 0
        %1336 = vmatprep.subr.bf16.mxu0 0
        %1337 = vmatpush1.bf16.msra.mxu0 0
        %1338 = vmatprep.subr.bf16.mxu0 0
        %1339 = vmatpush1.bf16.msra.mxu0 0
        %1340 = vmatprep.subr.bf16.mxu0 0
        %1341 = vmatpush1.bf16.msra.mxu0 0
        %1342 = vmatprep.subr.bf16.mxu0 0
        %1343 = vmatpush1.bf16.msra.mxu0 %v1317
        %1344 = vmatprep.subr.bf16.mxu0 0
        %1345 = vmatpush1.bf16.msra.mxu0 %v1316
        %1346 = vmatprep.subr.bf16.mxu0 0
        %1347 = vmatpush2.bf16.msra.mxu0 0
        %1348 = vmatprep.subr.bf16.mxu0 0
        %1349 = vmatpush2.bf16.msra.mxu0 0
        %1350 = vmatprep.subr.bf16.mxu0 0
        %1351 = vmatpush2.bf16.msra.mxu0 0
        %1352 = vmatprep.subr.bf16.mxu0 0
        %1353 = vmatpush2.bf16.msra.mxu0 0
        %1354 = vmatprep.subr.bf16.mxu0 0
        %1355 = vmatpush2.bf16.msra.mxu0 0
        %1356 = vmatprep.subr.bf16.mxu0 0
        %1357 = vmatpush2.bf16.msra.mxu0 0
        %1358 = vmatprep.subr.bf16.mxu0 0
        %1359 = vmatpush2.bf16.msra.mxu0 0
        %1360 = vmatprep.subr.bf16.mxu0 0
        %1361 = vmatpush2.bf16.msra.mxu0 0
        %1362 = vmatprep.mubr.bf16.mxu0 0
        %1363 = vmatmul.mubr.bf16.gmra.mxu0 %v1325
        %v1364 = vpop.f32.mrf.mxu0
        %v1365 = vadd.f32 %v1322, %v1364
        %v1366 = vpop.f32.mrf.mxu0
        %v1367 = vpop.f32.mrf.mxu0
        %v1368 = vadd.f32 %v1322, %v1367
        %v1369 = vpop.f32.mrf.mxu0
        %1370 = vmatprep.mubr.bf16.mxu0 0
        %1371 = vmatmul.mubr.bf16.gmra.mxu0 %v1328
        %v1372 = vpop.f32.mrf.mxu0
        %v1373 = vadd.f32 %v1322, %v1372
        %v1374 = vpop.f32.mrf.mxu0
        %v1375 = vpop.f32.mrf.mxu0
        %v1376 = vpop.f32.mrf.mxu0
        %1377 = vdwg.mxu0
        %v1378 = vmax.f32 %v1365, 0.0
        %v1379 = vmax.f32 %v1368, 0.0
        %v1380 = vmax.f32 %v1373, 0.0
        %v1381 = vpack.c.bf16 %v1379, %v1378
        %v1382 = vpack.c.bf16 %v1380, %v1380
        %v1383 = vpack.c.bf16 %v607, %v606
        %v1384 = vpack.c.bf16 %v609, %v608
        %v1385 = vpack.c.bf16 %v611, %v610
        %v1386 = vpack.c.bf16 %v613, %v612
        %v1387 = vpack.c.bf16 %v615, %v614
        %v1388 = vpack.c.bf16 %v617, %v616
        %v1389 = vpack.c.bf16 %v619, %v618
        %v1390 = vpack.c.bf16 %v621, %v620
        %1391 = vmatprep.subr.bf16.mxu0 0
        %1392 = vmatpush1.bf16.msra.mxu0 %v1390
        %1393 = vmatprep.subr.bf16.mxu0 0
        %1394 = vmatpush1.bf16.msra.mxu0 %v1389
        %1395 = vmatprep.subr.bf16.mxu0 0
        %1396 = vmatpush1.bf16.msra.mxu0 %v1388
        %1397 = vmatprep.subr.bf16.mxu0 0
        %1398 = vmatpush1.bf16.msra.mxu0 %v1387
        %1399 = vmatprep.subr.bf16.mxu0 0
        %1400 = vmatpush1.bf16.msra.mxu0 %v1386
        %1401 = vmatprep.subr.bf16.mxu0 0
        %1402 = vmatpush1.bf16.msra.mxu0 %v1385
        %1403 = vmatprep.subr.bf16.mxu0 0
        %1404 = vmatpush1.bf16.msra.mxu0 %v1384
        %1405 = vmatprep.subr.bf16.mxu0 0
        %1406 = vmatpush1.bf16.msra.mxu0 %v1383
        %1407 = vmatprep.subr.bf16.mxu0 0
        %1408 = vmatpush2.bf16.msra.mxu0 0
        %1409 = vmatprep.subr.bf16.mxu0 0
        %1410 = vmatpush2.bf16.msra.mxu0 0
        %1411 = vmatprep.subr.bf16.mxu0 0
        %1412 = vmatpush2.bf16.msra.mxu0 0
        %1413 = vmatprep.subr.bf16.mxu0 0
        %1414 = vmatpush2.bf16.msra.mxu0 0
        %1415 = vmatprep.subr.bf16.mxu0 0
        %1416 = vmatpush2.bf16.msra.mxu0 0
        %1417 = vmatprep.subr.bf16.mxu0 0
        %1418 = vmatpush2.bf16.msra.mxu0 0
        %1419 = vmatprep.subr.bf16.mxu0 0
        %1420 = vmatpush2.bf16.msra.mxu0 0
        %1421 = vmatprep.subr.bf16.mxu0 0
        %1422 = vmatpush2.bf16.msra.mxu0 0
        %1423 = vmatprep.mubr.bf16.mxu0 0
        %1424 = vmatmul.mubr.bf16.gmra.mxu0 %v1381
        %v1425 = vpop.f32.mrf.mxu0
        %v1426 = vadd.f32 0.0, %v1425
        %v1427 = vpop.f32.mrf.mxu0
        %v1428 = vpop.f32.mrf.mxu0
        %v1429 = vpop.f32.mrf.mxu0
        %1430 = vmatprep.mubr.bf16.mxu0 0
        %1431 = vmatmul.mubr.bf16.gmra.mxu0 %v1382
        %v1432 = vpop.f32.mrf.mxu0
        %v1433 = vpop.f32.mrf.mxu0
        %v1434 = vpop.f32.mrf.mxu0
        %v1435 = vpop.f32.mrf.mxu0
        %1436 = vdwg.mxu0
        %v1437 = vadd.f32 %v1254, %v1426
        %v1439 = vlaneseq
        %v1440 = vshrl.u32 %v1439, 7
        %v1441 = vsub.s32 0, %v1440
        %v1442 = vrot.slane %v622, %v1441
        %v1444 = vadd.f32 %v1437, %v1442
        %v1445 = vpack.c.bf16 %v1444, %v1444
        %v1446 = vld [vmem:[%s16] sm:$0xff]
        %v1447 = vld [vmem:[%s16 + $0x8] sm:$0xff]
        %v1448 = vld [vmem:[%s16 + $0x10] sm:$0xff]
        %v1449 = vld [vmem:[%s16 + $0x18] sm:$0xff]
        %v1450 = vpack.c.bf16 %v1447, %v1446
        %v1451 = vpack.c.bf16 %v1449, %v1448
        %v1452 = vld [vmem:[%s17] sm:$0x1]
        %v1454 = vsel %vm623, %v1445, 0
        %1456 = vmatprep.subr.bf16.mxu0 0
        %1457 = vmatpush1.bf16.msra.mxu0 0
        %1458 = vmatprep.subr.bf16.mxu0 0
        %1459 = vmatpush1.bf16.msra.mxu0 0
        %1460 = vmatprep.subr.bf16.mxu0 0
        %1461 = vmatpush1.bf16.msra.mxu0 0
        %1462 = vmatprep.subr.bf16.mxu0 0
        %1463 = vmatpush1.bf16.msra.mxu0 0
        %1464 = vmatprep.subr.bf16.mxu0 0
        %1465 = vmatpush1.bf16.msra.mxu0 0
        %1466 = vmatprep.subr.bf16.mxu0 0
        %1467 = vmatpush1.bf16.msra.mxu0 0
        %1468 = vmatprep.subr.bf16.mxu0 0
        %1469 = vmatpush1.bf16.msra.mxu0 %v1451
        %1470 = vmatprep.subr.bf16.mxu0 0
        %1471 = vmatpush1.bf16.msra.mxu0 %v1450
        %1472 = vmatprep.subr.bf16.mxu0 0
        %1473 = vmatpush2.bf16.msra.mxu0 0
        %1474 = vmatprep.subr.bf16.mxu0 0
        %1475 = vmatpush2.bf16.msra.mxu0 0
        %1476 = vmatprep.subr.bf16.mxu0 0
        %1477 = vmatpush2.bf16.msra.mxu0 0
        %1478 = vmatprep.subr.bf16.mxu0 0
        %1479 = vmatpush2.bf16.msra.mxu0 0
        %1480 = vmatprep.subr.bf16.mxu0 0
        %1481 = vmatpush2.bf16.msra.mxu0 0
        %1482 = vmatprep.subr.bf16.mxu0 0
        %1483 = vmatpush2.bf16.msra.mxu0 0
        %1484 = vmatprep.subr.bf16.mxu0 0
        %1485 = vmatpush2.bf16.msra.mxu0 0
        %1486 = vmatprep.subr.bf16.mxu0 0
        %1487 = vmatpush2.bf16.msra.mxu0 0
        %1488 = vmatprep.mubr.bf16.mxu0 0
        %1489 = vmatmul.mubr.bf16.gmra.mxu0 %v1454
        %v1490 = vpop.f32.mrf.mxu0
        %v1491 = vadd.f32 %v1452, %v1490
        %v1492 = vpop.f32.mrf.mxu0
        %v1493 = vpop.f32.mrf.mxu0
        %v1494 = vpop.f32.mrf.mxu0
        %1495 = vdwg.mxu0
        %vm1496 = vcmask 16384
        %1497 = vst.msk [vmem:[%s567] sm:$0x1] %vm1496, %v1491
        %s1498 = sand.u32 %s423, 1
        %s1499 = scalar_lea.sflag [#allocation3], %s1498
        %s1500 = sand.u32 %s423, 1
        %s1501 = scalar_lea.vmem [#allocation2], %s1500
        // Predicated region
        $region93: #{model_forward.5} parent=91 // pred_check
          %p1502 = pneg %p433
        $region94: #{model_forward.5} parent=91 // pred_check_branch
          %1504 = sbr.rel (%p1502) target = $region96
        $region95: #{model_forward.5} parent=91 // pred_region
          %s1506 = ssub.s32 16, 16
          %1507 = vsyncadd %s1499, %s1506
          %s1508 = smul.addr %s32, 16
          %s1509 = scalar_lea.hbm %s18, %s1508
          %s1511 = sshll.u32 %s1501, 4
          %s1512 = int_to_ptr.vmem [resolvable:$true] %s1511
          %1514 = dma.vmem_to_hbm [thread:$0]  %s1512, 16, %s1509, %s1499
        $region96: #{model_forward.5} parent=91 // pred_fallthru
          _
      $region92: #{model_forward.5} parent=5 // pred_fallthru
        _
      %p1515 = scmp.le.s32.totalorder 2, %s27
      // Predicated region
      $region97: #{model_forward.5} parent=5 // pred_check
        %p1516 = pneg %p1515
      $region98: #{model_forward.5} parent=5 // pred_check_branch
        %1518 = sbr.rel (%p1516) target = $region100
      $region99: #{model_forward.5} parent=5 // pred_region
        %s1519 = ssub.s32 %s27, 2
        // Predicated region
        $region101: #{model_forward.5} parent=99 // pred_check
          %p1520 = pneg %p439
        $region102: #{model_forward.5} parent=99 // pred_check_branch
          %1522 = sbr.rel (%p1520) target = $region104
        $region103: #{model_forward.5} parent=99 // pred_region
          %s1523 = sand.u32 %s424, 1
          %s1524 = scalar_lea.sflag [#allocation3], %s1523
          %s1525 = sand.u32 %s424, 1
          %s1526 = scalar_lea.vmem [#allocation2], %s1525
          %1527 = dma.done %s1524, 16
        $region104: #{model_forward.5} parent=99 // pred_fallthru
          _
      $region100: #{model_forward.5} parent=5 // pred_fallthru
        _
    $region6: #{model_forward.5} parent=1 // loop_footer
      %s31 = sadd.s32 1, %s27
    $region7: #{model_forward.5} parent=1 // loop_footer_branch
      %26 = sbr.rel target = $region3
    $region8: #{model_forward.5} parent=1 // loop_exit
      _
    %1528 = vsyncpa [#allocation3], 1
    %s1529 = scalar_lea.sflag [#allocation3], 1
    %1530 = vsyncpa %s1529, 1

</llo_original>
